<compile_context>
chip_gen: v6e
topology: v6e:2x2x1
jax: 0.10.0
libtpu: 0.0.40
codegen_flags: <defaults>
</compile_context>

<pallas_src>
import jax
import jax.numpy as jnp
from jax.experimental import pallas as pl
from jax.experimental.pallas import tpu as pltpu

LATENT_DIM = 32
BN_EPS = 0.8            # nn.BatchNorm1d(out_feat, 0.8): second positional arg is eps
LEAKY_SLOPE = 0.2
OUT_FEATURES = 784      # 1 * 28 * 28
OUT_PADDED = 896        # 7 * 128 lane-aligned final width

# (in, out) for the five Linear layers; last one padded to lane width 896.
LAYER_DIMS = [(LATENT_DIM, 128), (128, 256), (256, 512), (512, 1024), (1024, OUT_FEATURES)]
PADDED_LAYER_DIMS = [(LATENT_DIM, 128), (128, 256), (256, 512), (512, 1024), (1024, OUT_PADDED)]

# Rows of the packed (11, 1024) vector slab.
_VEC_ROWS = 11  # b1, b2, g2, be2, b3, g3, be3, b4, g4, be4, b5


def _leaky_relu(x):
    return jnp.where(x > 0, x, LEAKY_SLOPE * x)


def _generator_kernel(x_ref, w1_ref, w2_ref, w3_ref, w4_ref, w5_ref, vec_ref, out_ref):
    x = x_ref[...]                                            # (B, latent) f32

    # ---- block 1: Linear + LeakyReLU (no norm) ----
    h = jnp.dot(x.astype(jnp.bfloat16), w1_ref[...],
                preferred_element_type=jnp.float32)
    h = _leaky_relu(h + vec_ref[0:1, :128])

    # ---- blocks 2-4: Linear + BatchNorm1d(batch stats) + LeakyReLU ----
    def bn_block(h, w_ref, b_row, g_row, be_row, width):
        z = jnp.dot(h.astype(jnp.bfloat16), w_ref[...],
                    preferred_element_type=jnp.float32)
        z = z + vec_ref[b_row:b_row + 1, :width]
        mean = jnp.mean(z, axis=0, keepdims=True)              # (1, F)
        mean_sq = jnp.mean(z * z, axis=0, keepdims=True)       # single-pass variance
        var = mean_sq - mean * mean                            # biased var (PyTorch train)
        s = vec_ref[g_row:g_row + 1, :width] * jax.lax.rsqrt(var + BN_EPS)
        t = vec_ref[be_row:be_row + 1, :width] - mean * s
        return _leaky_relu(z * s + t)

    h = bn_block(h, w2_ref, 1, 2, 3, 256)
    h = bn_block(h, w3_ref, 4, 5, 6, 512)
    h = bn_block(h, w4_ref, 7, 8, 9, 1024)

    # ---- final Linear (padded to 896 lanes) + Tanh ----
    y = jnp.dot(h.astype(jnp.bfloat16), w5_ref[...],
                preferred_element_type=jnp.float32)
    y = y + vec_ref[10:11, :OUT_PADDED]
    out_ref[...] = jnp.tanh(y)


def init_params(key):
    """PyTorch-style uniform init. Weights stored as (in, out), f32, unpadded."""
    params = []
    for i, (fin, fout) in enumerate(LAYER_DIMS):
        kw, kb, key = jax.random.split(key, 3)
        bound = 1.0 / jnp.sqrt(jnp.float32(fin))
        w = jax.random.uniform(kw, (fin, fout), jnp.float32, -bound, bound)
        b = jax.random.uniform(kb, (fout,), jnp.float32, -bound, bound)
        entry = {"w": w, "b": b}
        if i in (1, 2, 3):  # layers followed by BatchNorm1d
            entry["gamma"] = jnp.ones((fout,), jnp.float32)
            entry["beta"] = jnp.zeros((fout,), jnp.float32)
        params.append(entry)
    return params


def pack_params(params):
    """Convert natural params into kernel-ready form: bf16 weights (last one
    zero-padded to 896 cols) + one packed (11, 1024) f32 vector slab."""
    w = [p["w"] for p in params]
    # Pad final weight 784 -> 896 columns with zeros (extra lanes sliced away).
    w4_pad = jnp.pad(w[4], ((0, 0), (0, OUT_PADDED - OUT_FEATURES)))
    weights = [w[0], w[1], w[2], w[3], w4_pad]
    weights = [wi.astype(jnp.bfloat16) for wi in weights]

    def row(v):
        return jnp.pad(v, (0, 1024 - v.shape[0]))

    vec = jnp.stack([
        row(params[0]["b"]),
        row(params[1]["b"]), row(params[1]["gamma"]), row(params[1]["beta"]),
        row(params[2]["b"]), row(params[2]["gamma"]), row(params[2]["beta"]),
        row(params[3]["b"]), row(params[3]["gamma"]), row(params[3]["beta"]),
        row(params[4]["b"]),
    ]).astype(jnp.float32)                                     # (11, 1024)

    return {"w1": weights[0], "w2": weights[1], "w3": weights[2],
            "w4": weights[3], "w5": weights[4], "vec": vec}


@jax.jit
def generator_forward(x, packed):
    batch = x.shape[0]

    vmem_spec = pl.BlockSpec(memory_space=pltpu.MemorySpace.VMEM)

    w_elems = sum(fin * fout for fin, fout in PADDED_LAYER_DIMS)
    cost = pl.CostEstimate(
        flops=2 * batch * w_elems,
        transcendentals=batch * OUT_PADDED + (256 + 512 + 1024),
        bytes_accessed=(2 * w_elems                       # bf16 weights
                        + _VEC_ROWS * 1024 * 4            # vector slab
                        + batch * LATENT_DIM * 4          # input
                        + batch * OUT_PADDED * 4),        # output
    )

    out = pl.pallas_call(
        _generator_kernel,
        out_shape=jax.ShapeDtypeStruct((batch, OUT_PADDED), jnp.float32),
        in_specs=[vmem_spec] * 7,
        out_specs=vmem_spec,
        cost_estimate=cost,
    )(x, packed["w1"], packed["w2"], packed["w3"], packed["w4"], packed["w5"],
      packed["vec"])

    # Drop lane padding, then match `x.view(x.shape[0], 1, 28, 28)`.
    return out[:, :OUT_FEATURES].reshape(batch, 1, 28, 28)


def _reference_forward(x, params):
    """Pure-JAX f32 reference of the training-mode PyTorch forward."""
    h = x @ params[0]["w"] + params[0]["b"]
    h = jnp.where(h > 0, h, LEAKY_SLOPE * h)
    for i in (1, 2, 3):
        z = h @ params[i]["w"] + params[i]["b"]
        mean = jnp.mean(z, axis=0, keepdims=True)
        var = jnp.mean((z - mean) ** 2, axis=0, keepdims=True)   # biased (train mode)
        z = (z - mean) * jax.lax.rsqrt(var + BN_EPS)
        z = z * params[i]["gamma"] + params[i]["beta"]
        h = jnp.where(z > 0, z, LEAKY_SLOPE * z)
    y = jnp.tanh(h @ params[4]["w"] + params[4]["b"])
    return y.reshape(x.shape[0], 1, 28, 28)


if __name__ == "__main__":
    key = jax.random.PRNGKey(0)
    k_params, k_x = jax.random.split(key)

    params = init_params(k_params)
    packed = pack_params(params)

    batch = 8
    x = jax.random.normal(k_x, (batch, LATENT_DIM), jnp.float32)

    img = generator_forward(x, packed)
    jax.block_until_ready(img)

    assert img.shape == (batch, 1, 28, 28), img.shape
    assert bool(jnp.all(jnp.isfinite(img)))
    assert bool(jnp.max(jnp.abs(img)) <= 1.0 + 1e-5)  # tanh output range

    # Loose check vs f32 reference (kernel feeds bf16 to the MXU).
    ref = _reference_forward(x, params)
    assert bool(jnp.max(jnp.abs(img - ref)) < 0.1), float(jnp.max(jnp.abs(img - ref)))

    print("KERNEL_OK")
</pallas_src>

<mosaic_0001>
module attributes {stable_mosaic.version = 11 : i64} {
  func.func @_generator_kernel(%arg0: memref<8x32xf32, #tpu.memory_space<vmem>>, %arg1: memref<32x128xbf16, #tpu.memory_space<vmem>>, %arg2: memref<128x256xbf16, #tpu.memory_space<vmem>>, %arg3: memref<256x512xbf16, #tpu.memory_space<vmem>>, %arg4: memref<512x1024xbf16, #tpu.memory_space<vmem>>, %arg5: memref<1024x896xbf16, #tpu.memory_space<vmem>>, %arg6: memref<11x1024xf32, #tpu.memory_space<vmem>>, %arg7: memref<8x896xf32, #tpu.memory_space<vmem>>) attributes {dimension_semantics = [], scalar_prefetch = 0 : i64, scratch_operands = 0 : i64, tpu.core_type = #tpu.core_type<tc>} {
    %c0 = arith.constant 0 : index
    %c0_0 = arith.constant 0 : index
    %0 = vector.load %arg0[%c0, %c0_0] : memref<8x32xf32, #tpu.memory_space<vmem>>, vector<8x32xf32>
    %1 = arith.truncf %0 : vector<8x32xf32> to vector<8x32xbf16>
    %c0_1 = arith.constant 0 : index
    %c0_2 = arith.constant 0 : index
    %2 = vector.load %arg1[%c0_1, %c0_2] : memref<32x128xbf16, #tpu.memory_space<vmem>>, vector<32x128xbf16>
    %cst = arith.constant dense<0.000000e+00> : vector<8x128xf32>
    %3 = tpu.matmul %1, %2, %cst {dimension_numbers = #tpu.dot_dimension_numbers<[1], [0], [0], [1], [0, 0, 1, 1], [], []>} : vector<8x32xbf16>, vector<32x128xbf16>, vector<8x128xf32> -> vector<8x128xf32>
    %c0_3 = arith.constant 0 : index
    %c0_4 = arith.constant 0 : index
    %4 = vector.load %arg6[%c0_3, %c0_4] : memref<11x1024xf32, #tpu.memory_space<vmem>>, vector<1x128xf32>
    %5 = vector.broadcast %4 : vector<1x128xf32> to vector<8x128xf32>
    %6 = arith.addf %3, %5 : vector<8x128xf32>
    %cst_5 = arith.constant 0.000000e+00 : f32
    %7 = vector.broadcast %cst_5 : f32 to vector<8x128xf32>
    %8 = arith.cmpf ogt, %6, %7 : vector<8x128xf32>
    %cst_6 = arith.constant 2.000000e-01 : f32
    %9 = vector.broadcast %cst_6 : f32 to vector<8x128xf32>
    %10 = arith.mulf %9, %6 : vector<8x128xf32>
    %11 = arith.select %8, %6, %10 : vector<8x128xi1>, vector<8x128xf32>
    %12 = arith.truncf %11 : vector<8x128xf32> to vector<8x128xbf16>
    %c0_7 = arith.constant 0 : index
    %c0_8 = arith.constant 0 : index
    %13 = vector.load %arg2[%c0_7, %c0_8] : memref<128x256xbf16, #tpu.memory_space<vmem>>, vector<128x256xbf16>
    %cst_9 = arith.constant dense<0.000000e+00> : vector<8x256xf32>
    %14 = tpu.matmul %12, %13, %cst_9 {dimension_numbers = #tpu.dot_dimension_numbers<[1], [0], [0], [1], [0, 0, 1, 1], [], []>} : vector<8x128xbf16>, vector<128x256xbf16>, vector<8x256xf32> -> vector<8x256xf32>
    %c1 = arith.constant 1 : index
    %c0_10 = arith.constant 0 : index
    %15 = vector.load %arg6[%c1, %c0_10] : memref<11x1024xf32, #tpu.memory_space<vmem>>, vector<1x256xf32>
    %16 = vector.broadcast %15 : vector<1x256xf32> to vector<8x256xf32>
    %17 = arith.addf %14, %16 : vector<8x256xf32>
    %cst_11 = arith.constant dense<0.000000e+00> : vector<256xf32>
    %18 = vector.multi_reduction <add>, %17, %cst_11 [0] : vector<8x256xf32> to vector<256xf32>
    %19 = vector.shape_cast %18 : vector<256xf32> to vector<1x256xf32>
    %cst_12 = arith.constant 8.000000e+00 : f32
    %20 = vector.broadcast %cst_12 : f32 to vector<1x256xf32>
    %21 = arith.divf %19, %20 : vector<1x256xf32>
    %22 = arith.mulf %17, %17 : vector<8x256xf32>
    %cst_13 = arith.constant dense<0.000000e+00> : vector<256xf32>
    %23 = vector.multi_reduction <add>, %22, %cst_13 [0] : vector<8x256xf32> to vector<256xf32>
    %24 = vector.shape_cast %23 : vector<256xf32> to vector<1x256xf32>
    %cst_14 = arith.constant 8.000000e+00 : f32
    %25 = vector.broadcast %cst_14 : f32 to vector<1x256xf32>
    %26 = arith.divf %24, %25 : vector<1x256xf32>
    %27 = arith.mulf %21, %21 : vector<1x256xf32>
    %28 = arith.subf %26, %27 : vector<1x256xf32>
    %c2 = arith.constant 2 : index
    %c0_15 = arith.constant 0 : index
    %29 = vector.load %arg6[%c2, %c0_15] : memref<11x1024xf32, #tpu.memory_space<vmem>>, vector<1x256xf32>
    %cst_16 = arith.constant 8.000000e-01 : f32
    %30 = vector.broadcast %cst_16 : f32 to vector<1x256xf32>
    %31 = arith.addf %28, %30 : vector<1x256xf32>
    %32 = math.rsqrt %31 : vector<1x256xf32>
    %33 = arith.mulf %29, %32 : vector<1x256xf32>
    %c3 = arith.constant 3 : index
    %c0_17 = arith.constant 0 : index
    %34 = vector.load %arg6[%c3, %c0_17] : memref<11x1024xf32, #tpu.memory_space<vmem>>, vector<1x256xf32>
    %35 = arith.mulf %21, %33 : vector<1x256xf32>
    %36 = arith.subf %34, %35 : vector<1x256xf32>
    %37 = vector.broadcast %33 : vector<1x256xf32> to vector<8x256xf32>
    %38 = arith.mulf %17, %37 : vector<8x256xf32>
    %39 = vector.broadcast %36 : vector<1x256xf32> to vector<8x256xf32>
    %40 = arith.addf %38, %39 : vector<8x256xf32>
    %cst_18 = arith.constant 0.000000e+00 : f32
    %41 = vector.broadcast %cst_18 : f32 to vector<8x256xf32>
    %42 = arith.cmpf ogt, %40, %41 : vector<8x256xf32>
    %cst_19 = arith.constant 2.000000e-01 : f32
    %43 = vector.broadcast %cst_19 : f32 to vector<8x256xf32>
    %44 = arith.mulf %43, %40 : vector<8x256xf32>
    %45 = arith.select %42, %40, %44 : vector<8x256xi1>, vector<8x256xf32>
    %46 = arith.truncf %45 : vector<8x256xf32> to vector<8x256xbf16>
    %c0_20 = arith.constant 0 : index
    %c0_21 = arith.constant 0 : index
    %47 = vector.load %arg3[%c0_20, %c0_21] : memref<256x512xbf16, #tpu.memory_space<vmem>>, vector<256x512xbf16>
    %cst_22 = arith.constant dense<0.000000e+00> : vector<8x512xf32>
    %48 = tpu.matmul %46, %47, %cst_22 {dimension_numbers = #tpu.dot_dimension_numbers<[1], [0], [0], [1], [0, 0, 1, 1], [], []>} : vector<8x256xbf16>, vector<256x512xbf16>, vector<8x512xf32> -> vector<8x512xf32>
    %c4 = arith.constant 4 : index
    %c0_23 = arith.constant 0 : index
    %49 = vector.load %arg6[%c4, %c0_23] : memref<11x1024xf32, #tpu.memory_space<vmem>>, vector<1x512xf32>
    %50 = vector.broadcast %49 : vector<1x512xf32> to vector<8x512xf32>
    %51 = arith.addf %48, %50 : vector<8x512xf32>
    %cst_24 = arith.constant dense<0.000000e+00> : vector<512xf32>
    %52 = vector.multi_reduction <add>, %51, %cst_24 [0] : vector<8x512xf32> to vector<512xf32>
    %53 = vector.shape_cast %52 : vector<512xf32> to vector<1x512xf32>
    %cst_25 = arith.constant 8.000000e+00 : f32
    %54 = vector.broadcast %cst_25 : f32 to vector<1x512xf32>
    %55 = arith.divf %53, %54 : vector<1x512xf32>
    %56 = arith.mulf %51, %51 : vector<8x512xf32>
    %cst_26 = arith.constant dense<0.000000e+00> : vector<512xf32>
    %57 = vector.multi_reduction <add>, %56, %cst_26 [0] : vector<8x512xf32> to vector<512xf32>
    %58 = vector.shape_cast %57 : vector<512xf32> to vector<1x512xf32>
    %cst_27 = arith.constant 8.000000e+00 : f32
    %59 = vector.broadcast %cst_27 : f32 to vector<1x512xf32>
    %60 = arith.divf %58, %59 : vector<1x512xf32>
    %61 = arith.mulf %55, %55 : vector<1x512xf32>
    %62 = arith.subf %60, %61 : vector<1x512xf32>
    %c5 = arith.constant 5 : index
    %c0_28 = arith.constant 0 : index
    %63 = vector.load %arg6[%c5, %c0_28] : memref<11x1024xf32, #tpu.memory_space<vmem>>, vector<1x512xf32>
    %cst_29 = arith.constant 8.000000e-01 : f32
    %64 = vector.broadcast %cst_29 : f32 to vector<1x512xf32>
    %65 = arith.addf %62, %64 : vector<1x512xf32>
    %66 = math.rsqrt %65 : vector<1x512xf32>
    %67 = arith.mulf %63, %66 : vector<1x512xf32>
    %c6 = arith.constant 6 : index
    %c0_30 = arith.constant 0 : index
    %68 = vector.load %arg6[%c6, %c0_30] : memref<11x1024xf32, #tpu.memory_space<vmem>>, vector<1x512xf32>
    %69 = arith.mulf %55, %67 : vector<1x512xf32>
    %70 = arith.subf %68, %69 : vector<1x512xf32>
    %71 = vector.broadcast %67 : vector<1x512xf32> to vector<8x512xf32>
    %72 = arith.mulf %51, %71 : vector<8x512xf32>
    %73 = vector.broadcast %70 : vector<1x512xf32> to vector<8x512xf32>
    %74 = arith.addf %72, %73 : vector<8x512xf32>
    %cst_31 = arith.constant 0.000000e+00 : f32
    %75 = vector.broadcast %cst_31 : f32 to vector<8x512xf32>
    %76 = arith.cmpf ogt, %74, %75 : vector<8x512xf32>
    %cst_32 = arith.constant 2.000000e-01 : f32
    %77 = vector.broadcast %cst_32 : f32 to vector<8x512xf32>
    %78 = arith.mulf %77, %74 : vector<8x512xf32>
    %79 = arith.select %76, %74, %78 : vector<8x512xi1>, vector<8x512xf32>
    %80 = arith.truncf %79 : vector<8x512xf32> to vector<8x512xbf16>
    %c0_33 = arith.constant 0 : index
    %c0_34 = arith.constant 0 : index
    %81 = vector.load %arg4[%c0_33, %c0_34] : memref<512x1024xbf16, #tpu.memory_space<vmem>>, vector<512x1024xbf16>
    %cst_35 = arith.constant dense<0.000000e+00> : vector<8x1024xf32>
    %82 = tpu.matmul %80, %81, %cst_35 {dimension_numbers = #tpu.dot_dimension_numbers<[1], [0], [0], [1], [0, 0, 1, 1], [], []>} : vector<8x512xbf16>, vector<512x1024xbf16>, vector<8x1024xf32> -> vector<8x1024xf32>
    %c7 = arith.constant 7 : index
    %c0_36 = arith.constant 0 : index
    %83 = vector.load %arg6[%c7, %c0_36] : memref<11x1024xf32, #tpu.memory_space<vmem>>, vector<1x1024xf32>
    %84 = vector.broadcast %83 : vector<1x1024xf32> to vector<8x1024xf32>
    %85 = arith.addf %82, %84 : vector<8x1024xf32>
    %cst_37 = arith.constant dense<0.000000e+00> : vector<1024xf32>
    %86 = vector.multi_reduction <add>, %85, %cst_37 [0] : vector<8x1024xf32> to vector<1024xf32>
    %87 = vector.shape_cast %86 : vector<1024xf32> to vector<1x1024xf32>
    %cst_38 = arith.constant 8.000000e+00 : f32
    %88 = vector.broadcast %cst_38 : f32 to vector<1x1024xf32>
    %89 = arith.divf %87, %88 : vector<1x1024xf32>
    %90 = arith.mulf %85, %85 : vector<8x1024xf32>
    %cst_39 = arith.constant dense<0.000000e+00> : vector<1024xf32>
    %91 = vector.multi_reduction <add>, %90, %cst_39 [0] : vector<8x1024xf32> to vector<1024xf32>
    %92 = vector.shape_cast %91 : vector<1024xf32> to vector<1x1024xf32>
    %cst_40 = arith.constant 8.000000e+00 : f32
    %93 = vector.broadcast %cst_40 : f32 to vector<1x1024xf32>
    %94 = arith.divf %92, %93 : vector<1x1024xf32>
    %95 = arith.mulf %89, %89 : vector<1x1024xf32>
    %96 = arith.subf %94, %95 : vector<1x1024xf32>
    %c8 = arith.constant 8 : index
    %c0_41 = arith.constant 0 : index
    %97 = vector.load %arg6[%c8, %c0_41] : memref<11x1024xf32, #tpu.memory_space<vmem>>, vector<1x1024xf32>
    %cst_42 = arith.constant 8.000000e-01 : f32
    %98 = vector.broadcast %cst_42 : f32 to vector<1x1024xf32>
    %99 = arith.addf %96, %98 : vector<1x1024xf32>
    %100 = math.rsqrt %99 : vector<1x1024xf32>
    %101 = arith.mulf %97, %100 : vector<1x1024xf32>
    %c9 = arith.constant 9 : index
    %c0_43 = arith.constant 0 : index
    %102 = vector.load %arg6[%c9, %c0_43] : memref<11x1024xf32, #tpu.memory_space<vmem>>, vector<1x1024xf32>
    %103 = arith.mulf %89, %101 : vector<1x1024xf32>
    %104 = arith.subf %102, %103 : vector<1x1024xf32>
    %105 = vector.broadcast %101 : vector<1x1024xf32> to vector<8x1024xf32>
    %106 = arith.mulf %85, %105 : vector<8x1024xf32>
    %107 = vector.broadcast %104 : vector<1x1024xf32> to vector<8x1024xf32>
    %108 = arith.addf %106, %107 : vector<8x1024xf32>
    %cst_44 = arith.constant 0.000000e+00 : f32
    %109 = vector.broadcast %cst_44 : f32 to vector<8x1024xf32>
    %110 = arith.cmpf ogt, %108, %109 : vector<8x1024xf32>
    %cst_45 = arith.constant 2.000000e-01 : f32
    %111 = vector.broadcast %cst_45 : f32 to vector<8x1024xf32>
    %112 = arith.mulf %111, %108 : vector<8x1024xf32>
    %113 = arith.select %110, %108, %112 : vector<8x1024xi1>, vector<8x1024xf32>
    %114 = arith.truncf %113 : vector<8x1024xf32> to vector<8x1024xbf16>
    %c0_46 = arith.constant 0 : index
    %c0_47 = arith.constant 0 : index
    %115 = vector.load %arg5[%c0_46, %c0_47] : memref<1024x896xbf16, #tpu.memory_space<vmem>>, vector<1024x896xbf16>
    %cst_48 = arith.constant dense<0.000000e+00> : vector<8x896xf32>
    %116 = tpu.matmul %114, %115, %cst_48 {dimension_numbers = #tpu.dot_dimension_numbers<[1], [0], [0], [1], [0, 0, 1, 1], [], []>} : vector<8x1024xbf16>, vector<1024x896xbf16>, vector<8x896xf32> -> vector<8x896xf32>
    %c10 = arith.constant 10 : index
    %c0_49 = arith.constant 0 : index
    %117 = vector.load %arg6[%c10, %c0_49] : memref<11x1024xf32, #tpu.memory_space<vmem>>, vector<1x896xf32>
    %118 = vector.broadcast %117 : vector<1x896xf32> to vector<8x896xf32>
    %119 = arith.addf %116, %118 : vector<8x896xf32>
    %120 = math.tanh %119 : vector<8x896xf32>
    %c0_50 = arith.constant 0 : index
    %c0_51 = arith.constant 0 : index
    %121 = vector.load %arg7[%c0_50, %c0_51] : memref<8x896xf32, #tpu.memory_space<vmem>>, vector<8x896xf32>
    tpu.vector_store %arg7[%c0_50, %c0_51], %120 {strides = array<i32>} : memref<8x896xf32, #tpu.memory_space<vmem>>, vector<8x896xf32>,
    return
  }
}

</mosaic_0001>

<llo_original>
// kernel: generator_forward.1
$region0: #{generator_forward.1}
  #allocation0 [shape = 'u32[]', space=smem, size = 0x4, offset = 0x4, fixed_abs, tag = 'smem constant byte address 0x4 - core index']
  #allocation1 [shape = 'u32[144,128]{1,0:T(1,128)}', space=vmem, size = 0x12000, scoped, tag = 'internal scratch']
  %s0 = inlined_call_operand.hbm [shape: f32[8,32], index: 0, kind: input, shape index: {}]
  %s1 = inlined_call_operand.hbm [shape: bf16[32,128], index: 1, kind: input, shape index: {}]
  %s2 = inlined_call_operand.hbm [shape: bf16[128,256], index: 2, kind: input, shape index: {}]
  %s3 = inlined_call_operand.hbm [shape: bf16[256,512], index: 3, kind: input, shape index: {}]
  %s4 = inlined_call_operand.hbm [shape: bf16[512,1024], index: 4, kind: input, shape index: {}]
  %s5 = inlined_call_operand.hbm [shape: bf16[1024,896], index: 5, kind: input, shape index: {}]
  %s6 = inlined_call_operand.hbm [shape: f32[11,1024], index: 6, kind: input, shape index: {}]
  %s7 = inlined_call_operand.vmem [shape: f32[8,896], index: 7, kind: output, shape index: {}]
  %s8 = sld [smem:[#allocation0]]
  $region66: #{generator_forward.1} parent=0
    _
  %s10 = ssub.s32 1, %s8
  %s11 = scalar_select 0, %s10, %s8
  $region1: #{generator_forward.1} parent=0
    #allocation2 [shape = 'u8[4096]{0}', space=vmem, size = 0x1000, scoped, tag = 'input window, operand 0, single buffered']
    #allocation3 [shape = 's32[1]{0}', space=sflag, size = 0x4, scoped, tag = 'scoped memory for generator_forward.1']
    #allocation4 [shape = 'u8[8192]{0}', space=vmem, size = 0x2000, scoped, tag = 'input window, operand 1, single buffered']
    #allocation5 [shape = 's32[1]{0}', space=sflag, size = 0x4, scoped, tag = 'scoped memory for generator_forward.1']
    #allocation6 [shape = 'u8[65536]{0}', space=vmem, size = 0x10000, scoped, tag = 'input window, operand 2, single buffered']
    #allocation7 [shape = 'u8[262144]{0}', space=vmem, size = 0x40000, scoped, tag = 'input window, operand 3, single buffered']
    #allocation8 [shape = 's32[1]{0}', space=sflag, size = 0x4, scoped, tag = 'scoped memory for generator_forward.1']
    #allocation9 [shape = 'u8[1048576]{0}', space=vmem, size = 0x100000, scoped, tag = 'input window, operand 4, single buffered']
    #allocation10 [shape = 'u8[1835008]{0}', space=vmem, size = 0x1c0000, scoped, tag = 'input window, operand 5, single buffered']
    #allocation11 [shape = 's32[1]{0}', space=sflag, size = 0x4, scoped, tag = 'scoped memory for generator_forward.1']
    #allocation12 [shape = 'u8[65536]{0}', space=vmem, size = 0x10000, scoped, tag = 'input window, operand 6, single buffered']
    %12 = vsyncpa [#allocation3], 0
    %13 = vsyncpa [#allocation5], 0
    %14 = vsyncpa [#allocation8], 0
    %15 = vsyncpa [#allocation11], 0
    // Predicated region
    $region2: #{generator_forward.1} parent=1 // pred_check
      _
    $region3: #{generator_forward.1} parent=1 // pred_check_branch
      %17 = sbr.rel (0) target = $region5
    $region4: #{generator_forward.1} parent=1 // pred_region
      %s19 = ssub.s32 128, 128
      %20 = vsyncadd [#allocation3], %s19
      %s22 = sshll.u32 [#allocation2], 4
      %s23 = int_to_ptr.vmem [resolvable:$true] %s22
      %25 = dma.hbm_to_vmem [thread:$0]  %s0, 128, %s23, [#allocation3]
    $region5: #{generator_forward.1} parent=1 // pred_fallthru
      _
    // Predicated region
    $region6: #{generator_forward.1} parent=1 // pred_check
      _
    $region7: #{generator_forward.1} parent=1 // pred_check_branch
      %27 = sbr.rel (0) target = $region9
    $region8: #{generator_forward.1} parent=1 // pred_region
      %s29 = ssub.s32 256, 256
      %30 = vsyncadd [#allocation5], %s29
      %s31 = sshll.u32 [#allocation4], 4
      %s32 = int_to_ptr.vmem [resolvable:$true] %s31
      %37 = dma.hbm_to_vmem [thread:$0]  %s1, 256, %s32, [#allocation5], 64, 64, 4
    $region9: #{generator_forward.1} parent=1 // pred_fallthru
      _
    // Predicated region
    $region10: #{generator_forward.1} parent=1 // pred_check
      _
    $region11: #{generator_forward.1} parent=1 // pred_check_branch
      %39 = sbr.rel (0) target = $region13
    $region12: #{generator_forward.1} parent=1 // pred_region
      %s41 = ssub.s32 2048, 2048
      %42 = vsyncadd [#allocation5], %s41
      %s43 = sshll.u32 [#allocation6], 4
      %s44 = int_to_ptr.vmem [resolvable:$true] %s43
      %49 = dma.hbm_to_vmem [thread:$0]  %s2, 2048, %s44, [#allocation5], 128, 128, 8
    $region13: #{generator_forward.1} parent=1 // pred_fallthru
      _
    // Predicated region
    $region14: #{generator_forward.1} parent=1 // pred_check
      _
    $region15: #{generator_forward.1} parent=1 // pred_check_branch
      %51 = sbr.rel (0) target = $region17
    $region16: #{generator_forward.1} parent=1 // pred_region
      %s53 = ssub.s32 8192, 8192
      %54 = vsyncadd [#allocation8], %s53
      %s55 = sshll.u32 [#allocation7], 4
      %s56 = int_to_ptr.vmem [resolvable:$true] %s55
      %61 = dma.hbm_to_vmem [thread:$0]  %s3, 8192, %s56, [#allocation8], 256, 256, 16
    $region17: #{generator_forward.1} parent=1 // pred_fallthru
      _
    // Predicated region
    $region18: #{generator_forward.1} parent=1 // pred_check
      _
    $region19: #{generator_forward.1} parent=1 // pred_check_branch
      %63 = sbr.rel (0) target = $region21
    $region20: #{generator_forward.1} parent=1 // pred_region
      %s65 = ssub.s32 32768, 32768
      %66 = vsyncadd [#allocation8], %s65
      %s67 = sshll.u32 [#allocation9], 4
      %s68 = int_to_ptr.vmem [resolvable:$true] %s67
      %73 = dma.hbm_to_vmem [thread:$0]  %s4, 32768, %s68, [#allocation8], 512, 512, 32
    $region21: #{generator_forward.1} parent=1 // pred_fallthru
      _
    // Predicated region
    $region22: #{generator_forward.1} parent=1 // pred_check
      _
    $region23: #{generator_forward.1} parent=1 // pred_check_branch
      %75 = sbr.rel (0) target = $region25
    $region24: #{generator_forward.1} parent=1 // pred_region
      %s77 = ssub.s32 57344, 57344
      %78 = vsyncadd [#allocation11], %s77
      %s79 = sshll.u32 [#allocation10], 4
      %s80 = int_to_ptr.vmem [resolvable:$true] %s79
      %85 = dma.hbm_to_vmem [thread:$0]  %s5, 57344, %s80, [#allocation11], 448, 448, 28
    $region25: #{generator_forward.1} parent=1 // pred_fallthru
      _
    // Predicated region
    $region26: #{generator_forward.1} parent=1 // pred_check
      _
    $region27: #{generator_forward.1} parent=1 // pred_check_branch
      %87 = sbr.rel (0) target = $region29
    $region28: #{generator_forward.1} parent=1 // pred_region
      %s89 = ssub.s32 2048, 2048
      %90 = vsyncadd [#allocation11], %s89
      %s91 = sshll.u32 [#allocation12], 4
      %s92 = int_to_ptr.vmem [resolvable:$true] %s91
      %97 = dma.hbm_to_vmem [thread:$0]  %s6, 2048, %s92, [#allocation11], 1024, 1024, 64
    $region29: #{generator_forward.1} parent=1 // pred_fallthru
      _
    // Predicated region
    $region30: #{generator_forward.1} parent=1 // pred_check
      _
    $region31: #{generator_forward.1} parent=1 // pred_check_branch
      %99 = sbr.rel (0) target = $region33
    $region32: #{generator_forward.1} parent=1 // pred_region
      %100 = dma.done [#allocation3], 128
    $region33: #{generator_forward.1} parent=1 // pred_fallthru
      _
    // Predicated region
    $region34: #{generator_forward.1} parent=1 // pred_check
      _
    $region35: #{generator_forward.1} parent=1 // pred_check_branch
      %102 = sbr.rel (0) target = $region37
    $region36: #{generator_forward.1} parent=1 // pred_region
      %103 = dma.done [#allocation5], 256
    $region37: #{generator_forward.1} parent=1 // pred_fallthru
      _
    // Predicated region
    $region38: #{generator_forward.1} parent=1 // pred_check
      _
    $region39: #{generator_forward.1} parent=1 // pred_check_branch
      %105 = sbr.rel (0) target = $region41
    $region40: #{generator_forward.1} parent=1 // pred_region
      %106 = dma.done [#allocation5], 2048
    $region41: #{generator_forward.1} parent=1 // pred_fallthru
      _
    // Predicated region
    $region42: #{generator_forward.1} parent=1 // pred_check
      _
    $region43: #{generator_forward.1} parent=1 // pred_check_branch
      %108 = sbr.rel (0) target = $region45
    $region44: #{generator_forward.1} parent=1 // pred_region
      %109 = dma.done [#allocation8], 8192
    $region45: #{generator_forward.1} parent=1 // pred_fallthru
      _
    // Predicated region
    $region46: #{generator_forward.1} parent=1 // pred_check
      _
    $region47: #{generator_forward.1} parent=1 // pred_check_branch
      %111 = sbr.rel (0) target = $region49
    $region48: #{generator_forward.1} parent=1 // pred_region
      %112 = dma.done [#allocation8], 32768
    $region49: #{generator_forward.1} parent=1 // pred_fallthru
      _
    // Predicated region
    $region50: #{generator_forward.1} parent=1 // pred_check
      _
    $region51: #{generator_forward.1} parent=1 // pred_check_branch
      %114 = sbr.rel (0) target = $region53
    $region52: #{generator_forward.1} parent=1 // pred_region
      %115 = dma.done [#allocation11], 57344
    $region53: #{generator_forward.1} parent=1 // pred_fallthru
      _
    // Predicated region
    $region54: #{generator_forward.1} parent=1 // pred_check
      _
    $region55: #{generator_forward.1} parent=1 // pred_check_branch
      %117 = sbr.rel (0) target = $region57
    $region56: #{generator_forward.1} parent=1 // pred_region
      %118 = dma.done [#allocation11], 2048
    $region57: #{generator_forward.1} parent=1 // pred_fallthru
      _
    %v120 = vld [vmem:[#allocation2] sm:$0xff]
    %v121 = vpack.c.bf16 %v120, %v120
    %v122 = vld [vmem:[#allocation4] sm:$0xf]
    %v123 = vld [vmem:[#allocation4 + $0x4] sm:$0xf]
    %v124 = vld [vmem:[#allocation4 + $0x8] sm:$0xf]
    %v125 = vld [vmem:[#allocation4 + $0xc] sm:$0xf]
    %v126 = vld [vmem:[#allocation12] ss:$0 sm:$0xff]
    %v131 = vunpack.c.l.b16 %v122
    %v132 = vunpack.c.l.b16 %v123
    %v133 = vunpack.c.l.b16 %v124
    %v134 = vunpack.c.l.b16 %v125
    %v135 = vpack.c.b16 %v132, %v131
    %v136 = vpack.c.b16 %v134, %v133
    %vm139 = vcmask 261120
    %v141 = vsel %vm139, %v121, 0
    %143 = vmatprep.subr.bf16.mxu0 0
    %144 = vmatpush1.bf16.msra.mxu0 0
    %145 = vmatprep.subr.bf16.mxu0 0
    %146 = vmatpush1.bf16.msra.mxu0 0
    %147 = vmatprep.subr.bf16.mxu0 0
    %148 = vmatpush1.bf16.msra.mxu0 0
    %149 = vmatprep.subr.bf16.mxu0 0
    %150 = vmatpush1.bf16.msra.mxu0 0
    %151 = vmatprep.subr.bf16.mxu0 0
    %152 = vmatpush1.bf16.msra.mxu0 0
    %153 = vmatprep.subr.bf16.mxu0 0
    %154 = vmatpush1.bf16.msra.mxu0 0
    %155 = vmatprep.subr.bf16.mxu0 0
    %156 = vmatpush1.bf16.msra.mxu0 %v136
    %157 = vmatprep.subr.bf16.mxu0 0
    %158 = vmatpush1.bf16.msra.mxu0 %v135
    %159 = vmatprep.subr.bf16.mxu0 0
    %160 = vmatpush2.bf16.msra.mxu0 0
    %161 = vmatprep.subr.bf16.mxu0 0
    %162 = vmatpush2.bf16.msra.mxu0 0
    %163 = vmatprep.subr.bf16.mxu0 0
    %164 = vmatpush2.bf16.msra.mxu0 0
    %165 = vmatprep.subr.bf16.mxu0 0
    %166 = vmatpush2.bf16.msra.mxu0 0
    %167 = vmatprep.subr.bf16.mxu0 0
    %168 = vmatpush2.bf16.msra.mxu0 0
    %169 = vmatprep.subr.bf16.mxu0 0
    %170 = vmatpush2.bf16.msra.mxu0 0
    %171 = vmatprep.subr.bf16.mxu0 0
    %172 = vmatpush2.bf16.msra.mxu0 0
    %173 = vmatprep.subr.bf16.mxu0 0
    %174 = vmatpush2.bf16.msra.mxu0 0
    %175 = vmatprep.mubr.bf16.mxu0 0
    %176 = vmatmul.mubr.bf16.gmra.mxu0 %v141
    %v177 = vpop.f32.mrf.mxu0
    %v178 = vadd.f32 %v126, %v177
    %v179 = vpop.f32.mrf.mxu0
    %v180 = vpop.f32.mrf.mxu0
    %v181 = vpop.f32.mrf.mxu0
    %182 = vdwg.mxu0
    %vm183 = vcmp.gt.f32.partialorder %v178, 0.0
    %v184 = vmul.f32 %v178, 0.2
    %v185 = vsel %vm183, %v178, %v184
    %v186 = vpack.c.bf16 %v185, %v185
    %v187 = vld [vmem:[#allocation6] sm:$0xff]
    %v188 = vld [vmem:[#allocation6 + $0x8] sm:$0xff]
    %v189 = vld [vmem:[#allocation6 + $0x10] sm:$0xff]
    %v190 = vld [vmem:[#allocation6 + $0x18] sm:$0xff]
    %v191 = vld [vmem:[#allocation6 + $0x20] sm:$0xff]
    %v192 = vld [vmem:[#allocation6 + $0x28] sm:$0xff]
    %v193 = vld [vmem:[#allocation6 + $0x30] sm:$0xff]
    %v194 = vld [vmem:[#allocation6 + $0x38] sm:$0xff]
    %v195 = vld [vmem:[#allocation6 + $0x40] sm:$0xff]
    %v196 = vld [vmem:[#allocation6 + $0x48] sm:$0xff]
    %v197 = vld [vmem:[#allocation6 + $0x50] sm:$0xff]
    %v198 = vld [vmem:[#allocation6 + $0x58] sm:$0xff]
    %v199 = vld [vmem:[#allocation6 + $0x60] sm:$0xff]
    %v200 = vld [vmem:[#allocation6 + $0x68] sm:$0xff]
    %v201 = vld [vmem:[#allocation6 + $0x70] sm:$0xff]
    %v202 = vld [vmem:[#allocation6 + $0x78] sm:$0xff]
    %s203 = scalar_lea.vmem [#allocation12], 1
    %v204 = vld [vmem:[%s203] ss:$8 sm:$0x3]
    %v206 = vlaneseq
    %v207 = vshrl.u32 %v206, 7
    %v208 = vsub.s32 0, %v207
    %v209 = vrot.slane %v204, %v208
    %v210 = vlaneseq
    %v211 = vshrl.u32 %v210, 7
    %v212 = vsub.s32 1, %v211
    %v213 = vrot.slane %v204, %v212
    %v232 = vunpack.c.l.b16 %v187
    %v233 = vunpack.c.h.b16 %v187
    %v234 = vunpack.c.l.b16 %v188
    %v235 = vunpack.c.h.b16 %v188
    %v236 = vunpack.c.l.b16 %v189
    %v237 = vunpack.c.h.b16 %v189
    %v238 = vunpack.c.l.b16 %v190
    %v239 = vunpack.c.h.b16 %v190
    %v240 = vunpack.c.l.b16 %v191
    %v241 = vunpack.c.h.b16 %v191
    %v242 = vunpack.c.l.b16 %v192
    %v243 = vunpack.c.h.b16 %v192
    %v244 = vunpack.c.l.b16 %v193
    %v245 = vunpack.c.h.b16 %v193
    %v246 = vunpack.c.l.b16 %v194
    %v247 = vunpack.c.h.b16 %v194
    %v248 = vunpack.c.l.b16 %v195
    %v249 = vunpack.c.h.b16 %v195
    %v250 = vunpack.c.l.b16 %v196
    %v251 = vunpack.c.h.b16 %v196
    %v252 = vunpack.c.l.b16 %v197
    %v253 = vunpack.c.h.b16 %v197
    %v254 = vunpack.c.l.b16 %v198
    %v255 = vunpack.c.h.b16 %v198
    %v256 = vunpack.c.l.b16 %v199
    %v257 = vunpack.c.h.b16 %v199
    %v258 = vunpack.c.l.b16 %v200
    %v259 = vunpack.c.h.b16 %v200
    %v260 = vunpack.c.l.b16 %v201
    %v261 = vunpack.c.h.b16 %v201
    %v262 = vunpack.c.l.b16 %v202
    %v263 = vunpack.c.h.b16 %v202
    %v264 = vpack.c.b16 %v234, %v232
    %v265 = vpack.c.b16 %v235, %v233
    %v266 = vpack.c.b16 %v238, %v236
    %v267 = vpack.c.b16 %v239, %v237
    %v268 = vpack.c.b16 %v242, %v240
    %v269 = vpack.c.b16 %v243, %v241
    %v270 = vpack.c.b16 %v246, %v244
    %v271 = vpack.c.b16 %v247, %v245
    %v272 = vpack.c.b16 %v250, %v248
    %v273 = vpack.c.b16 %v251, %v249
    %v274 = vpack.c.b16 %v254, %v252
    %v275 = vpack.c.b16 %v255, %v253
    %v276 = vpack.c.b16 %v258, %v256
    %v277 = vpack.c.b16 %v259, %v257
    %v278 = vpack.c.b16 %v262, %v260
    %v279 = vpack.c.b16 %v263, %v261
    %296 = vmatprep.subr.bf16.mxu0 %v279
    %297 = vmatpush1.bf16.msra.mxu0 %v278
    %298 = vmatprep.subr.bf16.mxu0 %v277
    %299 = vmatpush1.bf16.msra.mxu0 %v276
    %300 = vmatprep.subr.bf16.mxu0 %v275
    %301 = vmatpush1.bf16.msra.mxu0 %v274
    %302 = vmatprep.subr.bf16.mxu0 %v273
    %303 = vmatpush1.bf16.msra.mxu0 %v272
    %304 = vmatprep.subr.bf16.mxu0 %v271
    %305 = vmatpush1.bf16.msra.mxu0 %v270
    %306 = vmatprep.subr.bf16.mxu0 %v269
    %307 = vmatpush1.bf16.msra.mxu0 %v268
    %308 = vmatprep.subr.bf16.mxu0 %v267
    %309 = vmatpush1.bf16.msra.mxu0 %v266
    %310 = vmatprep.subr.bf16.mxu0 %v265
    %311 = vmatpush1.bf16.msra.mxu0 %v264
    %312 = vmatprep.subr.bf16.mxu0 0
    %313 = vmatpush2.bf16.msra.mxu0 0
    %314 = vmatprep.subr.bf16.mxu0 0
    %315 = vmatpush2.bf16.msra.mxu0 0
    %316 = vmatprep.subr.bf16.mxu0 0
    %317 = vmatpush2.bf16.msra.mxu0 0
    %318 = vmatprep.subr.bf16.mxu0 0
    %319 = vmatpush2.bf16.msra.mxu0 0
    %320 = vmatprep.subr.bf16.mxu0 0
    %321 = vmatpush2.bf16.msra.mxu0 0
    %322 = vmatprep.subr.bf16.mxu0 0
    %323 = vmatpush2.bf16.msra.mxu0 0
    %324 = vmatprep.subr.bf16.mxu0 0
    %325 = vmatpush2.bf16.msra.mxu0 0
    %326 = vmatprep.subr.bf16.mxu0 0
    %327 = vmatpush2.bf16.msra.mxu0 0
    %328 = vmatprep.mubr.bf16.mxu0 0
    %329 = vmatmul.mubr.bf16.gmra.mxu0 %v186
    %v330 = vpop.f32.mrf.mxu0
    %v331 = vadd.f32 %v209, %v330
    %v332 = vpop.f32.mrf.mxu0
    %v333 = vadd.f32 %v213, %v332
    %v334 = vpop.f32.mrf.mxu0
    %v335 = vpop.f32.mrf.mxu0
    %336 = vdwg.mxu0
    %v337 = vrot.slane %v331, 4
    %v338 = vadd.f32 %v331, %v337
    %v339 = vrot.slane %v338, 2
    %v340 = vadd.f32 %v338, %v339
    %v341 = vrot.slane %v340, 1
    %v342 = vadd.f32 %v340, %v341
    %v343 = vrot.slane %v333, 4
    %v344 = vadd.f32 %v333, %v343
    %v345 = vrot.slane %v344, 2
    %v346 = vadd.f32 %v344, %v345
    %v347 = vrot.slane %v346, 1
    %v348 = vadd.f32 %v346, %v347
    %v349 = vrcp.pop 8.0
    %v350 = vmul.f32 %v342, %v349
    %v351 = vmul.f32 %v348, %v349
    %v352 = vmul.f32 %v331, %v331
    %v353 = vmul.f32 %v333, %v333
    %v354 = vrot.slane %v352, 4
    %v355 = vadd.f32 %v352, %v354
    %v356 = vrot.slane %v355, 2
    %v357 = vadd.f32 %v355, %v356
    %v358 = vrot.slane %v357, 1
    %v359 = vadd.f32 %v357, %v358
    %v360 = vrot.slane %v353, 4
    %v361 = vadd.f32 %v353, %v360
    %v362 = vrot.slane %v361, 2
    %v363 = vadd.f32 %v361, %v362
    %v364 = vrot.slane %v363, 1
    %v365 = vadd.f32 %v363, %v364
    %v366 = vmul.f32 %v359, %v349
    %v367 = vmul.f32 %v365, %v349
    %v368 = vmul.f32 %v350, %v350
    %v369 = vmul.f32 %v351, %v351
    %v370 = vsub.f32 %v366, %v368
    %v371 = vsub.f32 %v367, %v369
    %s372 = scalar_lea.vmem [#allocation12], 2
    %v373 = vld [vmem:[%s372] ss:$8 sm:$0x3]
    %v374 = vadd.f32 %v370, 0.8
    %v375 = vadd.f32 %v371, 0.8
    %v376 = vrsqrt.pop %v374
    %v377 = vrsqrt.pop %v375
    %v380 = vcombine.low %v376, %v377
    %v382 = vunpack.c.l.s4 1966171168
    %v383 = vunpack.c.0.s8 %v382
    %v384 = vlaneseq
    %v385 = vshrl.u32 %v384, 7
    %v386 = vsub.s32 %v383, %v385
    %v387 = vrot.slane %v380, %v386
    %v389 = vunpack.c.l.s4 1966171168
    %v390 = vunpack.c.0.s8 %v389
    %v391 = vlaneseq
    %v392 = vshrl.u32 %v391, 7
    %v393 = vsub.s32 %v390, %v392
    %v394 = vrot.slane %v387, %v393
    %v396 = vmul.f32 %v373, %v394
    %s397 = scalar_lea.vmem [#allocation12], 3
    %v398 = vld [vmem:[%s397] ss:$8 sm:$0x3]
    %v400 = vlaneseq
    %v401 = vshrl.u32 %v400, 7
    %v402 = vsub.s32 0, %v401
    %v403 = vrot.slane %v396, %v402
    %v404 = vlaneseq
    %v405 = vshrl.u32 %v404, 7
    %v406 = vsub.s32 1, %v405
    %v407 = vrot.slane %v396, %v406
    %v410 = vmul.f32 %v350, %v403
    %v411 = vmul.f32 %v351, %v407
    %v414 = vcombine.low %v410, %v411
    %v416 = vunpack.c.l.s4 1966171168
    %v417 = vunpack.c.0.s8 %v416
    %v418 = vlaneseq
    %v419 = vshrl.u32 %v418, 7
    %v420 = vsub.s32 %v417, %v419
    %v421 = vrot.slane %v414, %v420
    %v423 = vunpack.c.l.s4 1966171168
    %v424 = vunpack.c.0.s8 %v423
    %v425 = vlaneseq
    %v426 = vshrl.u32 %v425, 7
    %v427 = vsub.s32 %v424, %v426
    %v428 = vrot.slane %v421, %v427
    %v430 = vsub.f32 %v398, %v428
    %v431 = vmul.f32 %v331, %v403
    %v432 = vmul.f32 %v333, %v407
    %v434 = vlaneseq
    %v435 = vshrl.u32 %v434, 7
    %v436 = vsub.s32 0, %v435
    %v437 = vrot.slane %v430, %v436
    %v438 = vlaneseq
    %v439 = vshrl.u32 %v438, 7
    %v440 = vsub.s32 1, %v439
    %v441 = vrot.slane %v430, %v440
    %v444 = vadd.f32 %v431, %v437
    %v445 = vadd.f32 %v432, %v441
    %vm446 = vcmp.gt.f32.partialorder %v444, 0.0
    %vm447 = vcmp.gt.f32.partialorder %v445, 0.0
    %v448 = vmul.f32 %v444, 0.2
    %v449 = vmul.f32 %v445, 0.2
    %v450 = vsel %vm446, %v444, %v448
    %v451 = vsel %vm447, %v445, %v449
    %v452 = vpack.c.bf16 %v450, %v450
    %v453 = vpack.c.bf16 %v451, %v451
    %v454 = vld [vmem:[#allocation7] sm:$0xff]
    %v455 = vld [vmem:[#allocation7 + $0x8] sm:$0xff]
    %v456 = vld [vmem:[#allocation7 + $0x10] sm:$0xff]
    %v457 = vld [vmem:[#allocation7 + $0x18] sm:$0xff]
    %v458 = vld [vmem:[#allocation7 + $0x20] sm:$0xff]
    %v459 = vld [vmem:[#allocation7 + $0x28] sm:$0xff]
    %v460 = vld [vmem:[#allocation7 + $0x30] sm:$0xff]
    %v461 = vld [vmem:[#allocation7 + $0x38] sm:$0xff]
    %v462 = vld [vmem:[#allocation7 + $0x40] sm:$0xff]
    %v463 = vld [vmem:[#allocation7 + $0x48] sm:$0xff]
    %v464 = vld [vmem:[#allocation7 + $0x50] sm:$0xff]
    %v465 = vld [vmem:[#allocation7 + $0x58] sm:$0xff]
    %v466 = vld [vmem:[#allocation7 + $0x60] sm:$0xff]
    %v467 = vld [vmem:[#allocation7 + $0x68] sm:$0xff]
    %v468 = vld [vmem:[#allocation7 + $0x70] sm:$0xff]
    %v469 = vld [vmem:[#allocation7 + $0x78] sm:$0xff]
    %v470 = vld [vmem:[#allocation7 + $0x80] sm:$0xff]
    %v471 = vld [vmem:[#allocation7 + $0x88] sm:$0xff]
    %v472 = vld [vmem:[#allocation7 + $0x90] sm:$0xff]
    %v473 = vld [vmem:[#allocation7 + $0x98] sm:$0xff]
    %v474 = vld [vmem:[#allocation7 + $0xa0] sm:$0xff]
    %v475 = vld [vmem:[#allocation7 + $0xa8] sm:$0xff]
    %v476 = vld [vmem:[#allocation7 + $0xb0] sm:$0xff]
    %v477 = vld [vmem:[#allocation7 + $0xb8] sm:$0xff]
    %v478 = vld [vmem:[#allocation7 + $0xc0] sm:$0xff]
    %v479 = vld [vmem:[#allocation7 + $0xc8] sm:$0xff]
    %v480 = vld [vmem:[#allocation7 + $0xd0] sm:$0xff]
    %v481 = vld [vmem:[#allocation7 + $0xd8] sm:$0xff]
    %v482 = vld [vmem:[#allocation7 + $0xe0] sm:$0xff]
    %v483 = vld [vmem:[#allocation7 + $0xe8] sm:$0xff]
    %v484 = vld [vmem:[#allocation7 + $0xf0] sm:$0xff]
    %v485 = vld [vmem:[#allocation7 + $0xf8] sm:$0xff]
    %v486 = vld [vmem:[#allocation7 + $0x100] sm:$0xff]
    %v487 = vld [vmem:[#allocation7 + $0x108] sm:$0xff]
    %v488 = vld [vmem:[#allocation7 + $0x110] sm:$0xff]
    %v489 = vld [vmem:[#allocation7 + $0x118] sm:$0xff]
    %v490 = vld [vmem:[#allocation7 + $0x120] sm:$0xff]
    %v491 = vld [vmem:[#allocation7 + $0x128] sm:$0xff]
    %v492 = vld [vmem:[#allocation7 + $0x130] sm:$0xff]
    %v493 = vld [vmem:[#allocation7 + $0x138] sm:$0xff]
    %v494 = vld [vmem:[#allocation7 + $0x140] sm:$0xff]
    %v495 = vld [vmem:[#allocation7 + $0x148] sm:$0xff]
    %v496 = vld [vmem:[#allocation7 + $0x150] sm:$0xff]
    %v497 = vld [vmem:[#allocation7 + $0x158] sm:$0xff]
    %v498 = vld [vmem:[#allocation7 + $0x160] sm:$0xff]
    %v499 = vld [vmem:[#allocation7 + $0x168] sm:$0xff]
    %v500 = vld [vmem:[#allocation7 + $0x170] sm:$0xff]
    %v501 = vld [vmem:[#allocation7 + $0x178] sm:$0xff]
    %v502 = vld [vmem:[#allocation7 + $0x180] sm:$0xff]
    %v503 = vld [vmem:[#allocation7 + $0x188] sm:$0xff]
    %v504 = vld [vmem:[#allocation7 + $0x190] sm:$0xff]
    %v505 = vld [vmem:[#allocation7 + $0x198] sm:$0xff]
    %v506 = vld [vmem:[#allocation7 + $0x1a0] sm:$0xff]
    %v507 = vld [vmem:[#allocation7 + $0x1a8] sm:$0xff]
    %v508 = vld [vmem:[#allocation7 + $0x1b0] sm:$0xff]
    %v509 = vld [vmem:[#allocation7 + $0x1b8] sm:$0xff]
    %v510 = vld [vmem:[#allocation7 + $0x1c0] sm:$0xff]
    %v511 = vld [vmem:[#allocation7 + $0x1c8] sm:$0xff]
    %v512 = vld [vmem:[#allocation7 + $0x1d0] sm:$0xff]
    %v513 = vld [vmem:[#allocation7 + $0x1d8] sm:$0xff]
    %v514 = vld [vmem:[#allocation7 + $0x1e0] sm:$0xff]
    %v515 = vld [vmem:[#allocation7 + $0x1e8] sm:$0xff]
    %v516 = vld [vmem:[#allocation7 + $0x1f0] sm:$0xff]
    %v517 = vld [vmem:[#allocation7 + $0x1f8] sm:$0xff]
    %s518 = scalar_lea.vmem [#allocation12], 4
    %v519 = vld [vmem:[%s518] ss:$8 sm:$0xf]
    %v521 = vlaneseq
    %v522 = vshrl.u32 %v521, 7
    %v523 = vsub.s32 0, %v522
    %v524 = vrot.slane %v519, %v523
    %v525 = vlaneseq
    %v526 = vshrl.u32 %v525, 7
    %v527 = vsub.s32 1, %v526
    %v528 = vrot.slane %v519, %v527
    %v529 = vlaneseq
    %v530 = vshrl.u32 %v529, 7
    %v531 = vsub.s32 2, %v530
    %v532 = vrot.slane %v519, %v531
    %v533 = vlaneseq
    %v534 = vshrl.u32 %v533, 7
    %v535 = vsub.s32 3, %v534
    %v536 = vrot.slane %v519, %v535
    %v605 = vunpack.c.l.b16 %v454
    %v606 = vunpack.c.h.b16 %v454
    %v607 = vunpack.c.l.b16 %v455
    %v608 = vunpack.c.h.b16 %v455
    %v609 = vunpack.c.l.b16 %v456
    %v610 = vunpack.c.h.b16 %v456
    %v611 = vunpack.c.l.b16 %v457
    %v612 = vunpack.c.h.b16 %v457
    %v613 = vunpack.c.l.b16 %v458
    %v614 = vunpack.c.h.b16 %v458
    %v615 = vunpack.c.l.b16 %v459
    %v616 = vunpack.c.h.b16 %v459
    %v617 = vunpack.c.l.b16 %v460
    %v618 = vunpack.c.h.b16 %v460
    %v619 = vunpack.c.l.b16 %v461
    %v620 = vunpack.c.h.b16 %v461
    %v621 = vunpack.c.l.b16 %v462
    %v622 = vunpack.c.h.b16 %v462
    %v623 = vunpack.c.l.b16 %v463
    %v624 = vunpack.c.h.b16 %v463
    %v625 = vunpack.c.l.b16 %v464
    %v626 = vunpack.c.h.b16 %v464
    %v627 = vunpack.c.l.b16 %v465
    %v628 = vunpack.c.h.b16 %v465
    %v629 = vunpack.c.l.b16 %v466
    %v630 = vunpack.c.h.b16 %v466
    %v631 = vunpack.c.l.b16 %v467
    %v632 = vunpack.c.h.b16 %v467
    %v633 = vunpack.c.l.b16 %v468
    %v634 = vunpack.c.h.b16 %v468
    %v635 = vunpack.c.l.b16 %v469
    %v636 = vunpack.c.h.b16 %v469
    %v637 = vunpack.c.l.b16 %v470
    %v638 = vunpack.c.h.b16 %v470
    %v639 = vunpack.c.l.b16 %v471
    %v640 = vunpack.c.h.b16 %v471
    %v641 = vunpack.c.l.b16 %v472
    %v642 = vunpack.c.h.b16 %v472
    %v643 = vunpack.c.l.b16 %v473
    %v644 = vunpack.c.h.b16 %v473
    %v645 = vunpack.c.l.b16 %v474
    %v646 = vunpack.c.h.b16 %v474
    %v647 = vunpack.c.l.b16 %v475
    %v648 = vunpack.c.h.b16 %v475
    %v649 = vunpack.c.l.b16 %v476
    %v650 = vunpack.c.h.b16 %v476
    %v651 = vunpack.c.l.b16 %v477
    %v652 = vunpack.c.h.b16 %v477
    %v653 = vunpack.c.l.b16 %v478
    %v654 = vunpack.c.h.b16 %v478
    %v655 = vunpack.c.l.b16 %v479
    %v656 = vunpack.c.h.b16 %v479
    %v657 = vunpack.c.l.b16 %v480
    %v658 = vunpack.c.h.b16 %v480
    %v659 = vunpack.c.l.b16 %v481
    %v660 = vunpack.c.h.b16 %v481
    %v661 = vunpack.c.l.b16 %v482
    %v662 = vunpack.c.h.b16 %v482
    %v663 = vunpack.c.l.b16 %v483
    %v664 = vunpack.c.h.b16 %v483
    %v665 = vunpack.c.l.b16 %v484
    %v666 = vunpack.c.h.b16 %v484
    %v667 = vunpack.c.l.b16 %v485
    %v668 = vunpack.c.h.b16 %v485
    %v669 = vunpack.c.l.b16 %v486
    %v670 = vunpack.c.h.b16 %v486
    %v671 = vunpack.c.l.b16 %v487
    %v672 = vunpack.c.h.b16 %v487
    %v673 = vunpack.c.l.b16 %v488
    %v674 = vunpack.c.h.b16 %v488
    %v675 = vunpack.c.l.b16 %v489
    %v676 = vunpack.c.h.b16 %v489
    %v677 = vunpack.c.l.b16 %v490
    %v678 = vunpack.c.h.b16 %v490
    %v679 = vunpack.c.l.b16 %v491
    %v680 = vunpack.c.h.b16 %v491
    %v681 = vunpack.c.l.b16 %v492
    %v682 = vunpack.c.h.b16 %v492
    %v683 = vunpack.c.l.b16 %v493
    %v684 = vunpack.c.h.b16 %v493
    %v685 = vunpack.c.l.b16 %v494
    %v686 = vunpack.c.h.b16 %v494
    %v687 = vunpack.c.l.b16 %v495
    %v688 = vunpack.c.h.b16 %v495
    %v689 = vunpack.c.l.b16 %v496
    %v690 = vunpack.c.h.b16 %v496
    %v691 = vunpack.c.l.b16 %v497
    %v692 = vunpack.c.h.b16 %v497
    %v693 = vunpack.c.l.b16 %v498
    %v694 = vunpack.c.h.b16 %v498
    %v695 = vunpack.c.l.b16 %v499
    %v696 = vunpack.c.h.b16 %v499
    %v697 = vunpack.c.l.b16 %v500
    %v698 = vunpack.c.h.b16 %v500
    %v699 = vunpack.c.l.b16 %v501
    %v700 = vunpack.c.h.b16 %v501
    %v701 = vunpack.c.l.b16 %v502
    %v702 = vunpack.c.h.b16 %v502
    %v703 = vunpack.c.l.b16 %v503
    %v704 = vunpack.c.h.b16 %v503
    %v705 = vunpack.c.l.b16 %v504
    %v706 = vunpack.c.h.b16 %v504
    %v707 = vunpack.c.l.b16 %v505
    %v708 = vunpack.c.h.b16 %v505
    %v709 = vunpack.c.l.b16 %v506
    %v710 = vunpack.c.h.b16 %v506
    %v711 = vunpack.c.l.b16 %v507
    %v712 = vunpack.c.h.b16 %v507
    %v713 = vunpack.c.l.b16 %v508
    %v714 = vunpack.c.h.b16 %v508
    %v715 = vunpack.c.l.b16 %v509
    %v716 = vunpack.c.h.b16 %v509
    %v717 = vunpack.c.l.b16 %v510
    %v718 = vunpack.c.h.b16 %v510
    %v719 = vunpack.c.l.b16 %v511
    %v720 = vunpack.c.h.b16 %v511
    %v721 = vunpack.c.l.b16 %v512
    %v722 = vunpack.c.h.b16 %v512
    %v723 = vunpack.c.l.b16 %v513
    %v724 = vunpack.c.h.b16 %v513
    %v725 = vunpack.c.l.b16 %v514
    %v726 = vunpack.c.h.b16 %v514
    %v727 = vunpack.c.l.b16 %v515
    %v728 = vunpack.c.h.b16 %v515
    %v729 = vunpack.c.l.b16 %v516
    %v730 = vunpack.c.h.b16 %v516
    %v731 = vunpack.c.l.b16 %v517
    %v732 = vunpack.c.h.b16 %v517
    %v733 = vpack.c.b16 %v609, %v605
    %v734 = vpack.c.b16 %v610, %v606
    %v735 = vpack.c.b16 %v611, %v607
    %v736 = vpack.c.b16 %v612, %v608
    %v737 = vpack.c.b16 %v617, %v613
    %v738 = vpack.c.b16 %v618, %v614
    %v739 = vpack.c.b16 %v619, %v615
    %v740 = vpack.c.b16 %v620, %v616
    %v741 = vpack.c.b16 %v625, %v621
    %v742 = vpack.c.b16 %v626, %v622
    %v743 = vpack.c.b16 %v627, %v623
    %v744 = vpack.c.b16 %v628, %v624
    %v745 = vpack.c.b16 %v633, %v629
    %v746 = vpack.c.b16 %v634, %v630
    %v747 = vpack.c.b16 %v635, %v631
    %v748 = vpack.c.b16 %v636, %v632
    %v749 = vpack.c.b16 %v641, %v637
    %v750 = vpack.c.b16 %v642, %v638
    %v751 = vpack.c.b16 %v643, %v639
    %v752 = vpack.c.b16 %v644, %v640
    %v753 = vpack.c.b16 %v649, %v645
    %v754 = vpack.c.b16 %v650, %v646
    %v755 = vpack.c.b16 %v651, %v647
    %v756 = vpack.c.b16 %v652, %v648
    %v757 = vpack.c.b16 %v657, %v653
    %v758 = vpack.c.b16 %v658, %v654
    %v759 = vpack.c.b16 %v659, %v655
    %v760 = vpack.c.b16 %v660, %v656
    %v761 = vpack.c.b16 %v665, %v661
    %v762 = vpack.c.b16 %v666, %v662
    %v763 = vpack.c.b16 %v667, %v663
    %v764 = vpack.c.b16 %v668, %v664
    %v765 = vpack.c.b16 %v673, %v669
    %v766 = vpack.c.b16 %v674, %v670
    %v767 = vpack.c.b16 %v675, %v671
    %v768 = vpack.c.b16 %v676, %v672
    %v769 = vpack.c.b16 %v681, %v677
    %v770 = vpack.c.b16 %v682, %v678
    %v771 = vpack.c.b16 %v683, %v679
    %v772 = vpack.c.b16 %v684, %v680
    %v773 = vpack.c.b16 %v689, %v685
    %v774 = vpack.c.b16 %v690, %v686
    %v775 = vpack.c.b16 %v691, %v687
    %v776 = vpack.c.b16 %v692, %v688
    %v777 = vpack.c.b16 %v697, %v693
    %v778 = vpack.c.b16 %v698, %v694
    %v779 = vpack.c.b16 %v699, %v695
    %v780 = vpack.c.b16 %v700, %v696
    %v781 = vpack.c.b16 %v705, %v701
    %v782 = vpack.c.b16 %v706, %v702
    %v783 = vpack.c.b16 %v707, %v703
    %v784 = vpack.c.b16 %v708, %v704
    %v785 = vpack.c.b16 %v713, %v709
    %v786 = vpack.c.b16 %v714, %v710
    %v787 = vpack.c.b16 %v715, %v711
    %v788 = vpack.c.b16 %v716, %v712
    %v789 = vpack.c.b16 %v721, %v717
    %v790 = vpack.c.b16 %v722, %v718
    %v791 = vpack.c.b16 %v723, %v719
    %v792 = vpack.c.b16 %v724, %v720
    %v793 = vpack.c.b16 %v729, %v725
    %v794 = vpack.c.b16 %v730, %v726
    %v795 = vpack.c.b16 %v731, %v727
    %v796 = vpack.c.b16 %v732, %v728
    %861 = vmatprep.subr.bf16.mxu0 %v762
    %862 = vmatpush1.bf16.msra.mxu0 %v761
    %863 = vmatprep.subr.bf16.mxu0 %v758
    %864 = vmatpush1.bf16.msra.mxu0 %v757
    %865 = vmatprep.subr.bf16.mxu0 %v754
    %866 = vmatpush1.bf16.msra.mxu0 %v753
    %867 = vmatprep.subr.bf16.mxu0 %v750
    %868 = vmatpush1.bf16.msra.mxu0 %v749
    %869 = vmatprep.subr.bf16.mxu0 %v746
    %870 = vmatpush1.bf16.msra.mxu0 %v745
    %871 = vmatprep.subr.bf16.mxu0 %v742
    %872 = vmatpush1.bf16.msra.mxu0 %v741
    %873 = vmatprep.subr.bf16.mxu0 %v738
    %874 = vmatpush1.bf16.msra.mxu0 %v737
    %875 = vmatprep.subr.bf16.mxu0 %v734
    %876 = vmatpush1.bf16.msra.mxu0 %v733
    %877 = vmatprep.subr.bf16.mxu0 %v794
    %878 = vmatpush2.bf16.msra.mxu0 %v793
    %879 = vmatprep.subr.bf16.mxu0 %v790
    %880 = vmatpush2.bf16.msra.mxu0 %v789
    %881 = vmatprep.subr.bf16.mxu0 %v786
    %882 = vmatpush2.bf16.msra.mxu0 %v785
    %883 = vmatprep.subr.bf16.mxu0 %v782
    %884 = vmatpush2.bf16.msra.mxu0 %v781
    %885 = vmatprep.subr.bf16.mxu0 %v778
    %886 = vmatpush2.bf16.msra.mxu0 %v777
    %887 = vmatprep.subr.bf16.mxu0 %v774
    %888 = vmatpush2.bf16.msra.mxu0 %v773
    %889 = vmatprep.subr.bf16.mxu0 %v770
    %890 = vmatpush2.bf16.msra.mxu0 %v769
    %891 = vmatprep.subr.bf16.mxu0 %v766
    %892 = vmatpush2.bf16.msra.mxu0 %v765
    %893 = vmatprep.mubr.bf16.mxu0 %v453
    %894 = vmatmul.mubr.bf16.gmra.mxu0 %v452
    %v895 = vpop.f32.mrf.mxu0
    %v896 = vadd.f32 %v524, %v895
    %v897 = vpop.f32.mrf.mxu0
    %v898 = vadd.f32 %v528, %v897
    %v899 = vpop.f32.mrf.mxu0
    %v900 = vpop.f32.mrf.mxu0
    %901 = vdwg.mxu0
    %902 = vmatprep.subr.bf16.mxu0 %v764
    %903 = vmatpush1.bf16.msra.mxu0 %v763
    %904 = vmatprep.subr.bf16.mxu0 %v760
    %905 = vmatpush1.bf16.msra.mxu0 %v759
    %906 = vmatprep.subr.bf16.mxu0 %v756
    %907 = vmatpush1.bf16.msra.mxu0 %v755
    %908 = vmatprep.subr.bf16.mxu0 %v752
    %909 = vmatpush1.bf16.msra.mxu0 %v751
    %910 = vmatprep.subr.bf16.mxu0 %v748
    %911 = vmatpush1.bf16.msra.mxu0 %v747
    %912 = vmatprep.subr.bf16.mxu0 %v744
    %913 = vmatpush1.bf16.msra.mxu0 %v743
    %914 = vmatprep.subr.bf16.mxu0 %v740
    %915 = vmatpush1.bf16.msra.mxu0 %v739
    %916 = vmatprep.subr.bf16.mxu0 %v736
    %917 = vmatpush1.bf16.msra.mxu0 %v735
    %918 = vmatprep.subr.bf16.mxu0 %v796
    %919 = vmatpush2.bf16.msra.mxu0 %v795
    %920 = vmatprep.subr.bf16.mxu0 %v792
    %921 = vmatpush2.bf16.msra.mxu0 %v791
    %922 = vmatprep.subr.bf16.mxu0 %v788
    %923 = vmatpush2.bf16.msra.mxu0 %v787
    %924 = vmatprep.subr.bf16.mxu0 %v784
    %925 = vmatpush2.bf16.msra.mxu0 %v783
    %926 = vmatprep.subr.bf16.mxu0 %v780
    %927 = vmatpush2.bf16.msra.mxu0 %v779
    %928 = vmatprep.subr.bf16.mxu0 %v776
    %929 = vmatpush2.bf16.msra.mxu0 %v775
    %930 = vmatprep.subr.bf16.mxu0 %v772
    %931 = vmatpush2.bf16.msra.mxu0 %v771
    %932 = vmatprep.subr.bf16.mxu0 %v768
    %933 = vmatpush2.bf16.msra.mxu0 %v767
    %934 = vmatprep.mubr.bf16.mxu0 %v453
    %935 = vmatmul.mubr.bf16.gmra.mxu0 %v452
    %v936 = vpop.f32.mrf.mxu0
    %v937 = vadd.f32 %v532, %v936
    %v938 = vpop.f32.mrf.mxu0
    %v939 = vadd.f32 %v536, %v938
    %v940 = vpop.f32.mrf.mxu0
    %v941 = vpop.f32.mrf.mxu0
    %942 = vdwg.mxu0
    %v943 = vrot.slane %v896, 4
    %v944 = vadd.f32 %v896, %v943
    %v945 = vrot.slane %v944, 2
    %v946 = vadd.f32 %v944, %v945
    %v947 = vrot.slane %v946, 1
    %v948 = vadd.f32 %v946, %v947
    %v949 = vrot.slane %v898, 4
    %v950 = vadd.f32 %v898, %v949
    %v951 = vrot.slane %v950, 2
    %v952 = vadd.f32 %v950, %v951
    %v953 = vrot.slane %v952, 1
    %v954 = vadd.f32 %v952, %v953
    %v955 = vrot.slane %v937, 4
    %v956 = vadd.f32 %v937, %v955
    %v957 = vrot.slane %v956, 2
    %v958 = vadd.f32 %v956, %v957
    %v959 = vrot.slane %v958, 1
    %v960 = vadd.f32 %v958, %v959
    %v961 = vrot.slane %v939, 4
    %v962 = vadd.f32 %v939, %v961
    %v963 = vrot.slane %v962, 2
    %v964 = vadd.f32 %v962, %v963
    %v965 = vrot.slane %v964, 1
    %v966 = vadd.f32 %v964, %v965
    %v967 = vmul.f32 %v948, %v349
    %v968 = vmul.f32 %v954, %v349
    %v969 = vmul.f32 %v960, %v349
    %v970 = vmul.f32 %v966, %v349
    %v971 = vmul.f32 %v896, %v896
    %v972 = vmul.f32 %v898, %v898
    %v973 = vmul.f32 %v937, %v937
    %v974 = vmul.f32 %v939, %v939
    %v975 = vrot.slane %v971, 4
    %v976 = vadd.f32 %v971, %v975
    %v977 = vrot.slane %v976, 2
    %v978 = vadd.f32 %v976, %v977
    %v979 = vrot.slane %v978, 1
    %v980 = vadd.f32 %v978, %v979
    %v981 = vrot.slane %v972, 4
    %v982 = vadd.f32 %v972, %v981
    %v983 = vrot.slane %v982, 2
    %v984 = vadd.f32 %v982, %v983
    %v985 = vrot.slane %v984, 1
    %v986 = vadd.f32 %v984, %v985
    %v987 = vrot.slane %v973, 4
    %v988 = vadd.f32 %v973, %v987
    %v989 = vrot.slane %v988, 2
    %v990 = vadd.f32 %v988, %v989
    %v991 = vrot.slane %v990, 1
    %v992 = vadd.f32 %v990, %v991
    %v993 = vrot.slane %v974, 4
    %v994 = vadd.f32 %v974, %v993
    %v995 = vrot.slane %v994, 2
    %v996 = vadd.f32 %v994, %v995
    %v997 = vrot.slane %v996, 1
    %v998 = vadd.f32 %v996, %v997
    %v999 = vmul.f32 %v980, %v349
    %v1000 = vmul.f32 %v986, %v349
    %v1001 = vmul.f32 %v992, %v349
    %v1002 = vmul.f32 %v998, %v349
    %v1003 = vmul.f32 %v967, %v967
    %v1004 = vmul.f32 %v968, %v968
    %v1005 = vmul.f32 %v969, %v969
    %v1006 = vmul.f32 %v970, %v970
    %v1007 = vsub.f32 %v999, %v1003
    %v1008 = vsub.f32 %v1000, %v1004
    %v1009 = vsub.f32 %v1001, %v1005
    %v1010 = vsub.f32 %v1002, %v1006
    %s1011 = scalar_lea.vmem [#allocation12], 5
    %v1012 = vld [vmem:[%s1011] ss:$8 sm:$0xf]
    %v1013 = vadd.f32 %v1007, 0.8
    %v1014 = vadd.f32 %v1008, 0.8
    %v1015 = vadd.f32 %v1009, 0.8
    %v1016 = vadd.f32 %v1010, 0.8
    %v1017 = vrsqrt.pop %v1013
    %v1018 = vrsqrt.pop %v1014
    %v1019 = vrsqrt.pop %v1015
    %v1020 = vrsqrt.pop %v1016
    %v1025 = vcombine.low %v1017, %v1018
    %v1026 = vcombine.low %v1019, %v1020
    %v1028 = vunpack.c.l.s4 1966171168
    %v1029 = vunpack.c.0.s8 %v1028
    %v1030 = vlaneseq
    %v1031 = vshrl.u32 %v1030, 7
    %v1032 = vsub.s32 %v1029, %v1031
    %v1033 = vrot.slane %v1025, %v1032
    %v1035 = vunpack.c.l.s4 1966171168
    %v1036 = vunpack.c.0.s8 %v1035
    %v1037 = vlaneseq
    %v1038 = vshrl.u32 %v1037, 7
    %v1039 = vsub.s32 %v1036, %v1038
    %v1040 = vrot.slane %v1026, %v1039
    %v1041 = vcombine.low %v1033, %v1040
    %v1043 = vunpack.c.l.s4 1966171168
    %v1044 = vunpack.c.0.s8 %v1043
    %v1045 = vlaneseq
    %v1046 = vshrl.u32 %v1045, 7
    %v1047 = vsub.s32 %v1044, %v1046
    %v1048 = vrot.slane %v1041, %v1047
    %v1050 = vmul.f32 %v1012, %v1048
    %s1051 = scalar_lea.vmem [#allocation12], 6
    %v1052 = vld [vmem:[%s1051] ss:$8 sm:$0xf]
    %v1054 = vlaneseq
    %v1055 = vshrl.u32 %v1054, 7
    %v1056 = vsub.s32 0, %v1055
    %v1057 = vrot.slane %v1050, %v1056
    %v1058 = vlaneseq
    %v1059 = vshrl.u32 %v1058, 7
    %v1060 = vsub.s32 1, %v1059
    %v1061 = vrot.slane %v1050, %v1060
    %v1062 = vlaneseq
    %v1063 = vshrl.u32 %v1062, 7
    %v1064 = vsub.s32 2, %v1063
    %v1065 = vrot.slane %v1050, %v1064
    %v1066 = vlaneseq
    %v1067 = vshrl.u32 %v1066, 7
    %v1068 = vsub.s32 3, %v1067
    %v1069 = vrot.slane %v1050, %v1068
    %v1074 = vmul.f32 %v967, %v1057
    %v1075 = vmul.f32 %v968, %v1061
    %v1076 = vmul.f32 %v969, %v1065
    %v1077 = vmul.f32 %v970, %v1069
    %v1082 = vcombine.low %v1074, %v1075
    %v1083 = vcombine.low %v1076, %v1077
    %v1085 = vunpack.c.l.s4 1966171168
    %v1086 = vunpack.c.0.s8 %v1085
    %v1087 = vlaneseq
    %v1088 = vshrl.u32 %v1087, 7
    %v1089 = vsub.s32 %v1086, %v1088
    %v1090 = vrot.slane %v1082, %v1089
    %v1092 = vunpack.c.l.s4 1966171168
    %v1093 = vunpack.c.0.s8 %v1092
    %v1094 = vlaneseq
    %v1095 = vshrl.u32 %v1094, 7
    %v1096 = vsub.s32 %v1093, %v1095
    %v1097 = vrot.slane %v1083, %v1096
    %v1098 = vcombine.low %v1090, %v1097
    %v1100 = vunpack.c.l.s4 1966171168
    %v1101 = vunpack.c.0.s8 %v1100
    %v1102 = vlaneseq
    %v1103 = vshrl.u32 %v1102, 7
    %v1104 = vsub.s32 %v1101, %v1103
    %v1105 = vrot.slane %v1098, %v1104
    %v1107 = vsub.f32 %v1052, %v1105
    %v1108 = vmul.f32 %v896, %v1057
    %v1109 = vmul.f32 %v898, %v1061
    %v1110 = vmul.f32 %v937, %v1065
    %v1111 = vmul.f32 %v939, %v1069
    %v1113 = vlaneseq
    %v1114 = vshrl.u32 %v1113, 7
    %v1115 = vsub.s32 0, %v1114
    %v1116 = vrot.slane %v1107, %v1115
    %v1117 = vlaneseq
    %v1118 = vshrl.u32 %v1117, 7
    %v1119 = vsub.s32 1, %v1118
    %v1120 = vrot.slane %v1107, %v1119
    %v1121 = vlaneseq
    %v1122 = vshrl.u32 %v1121, 7
    %v1123 = vsub.s32 2, %v1122
    %v1124 = vrot.slane %v1107, %v1123
    %v1125 = vlaneseq
    %v1126 = vshrl.u32 %v1125, 7
    %v1127 = vsub.s32 3, %v1126
    %v1128 = vrot.slane %v1107, %v1127
    %v1133 = vadd.f32 %v1108, %v1116
    %v1134 = vadd.f32 %v1109, %v1120
    %v1135 = vadd.f32 %v1110, %v1124
    %v1136 = vadd.f32 %v1111, %v1128
    %vm1137 = vcmp.gt.f32.partialorder %v1133, 0.0
    %vm1138 = vcmp.gt.f32.partialorder %v1134, 0.0
    %vm1139 = vcmp.gt.f32.partialorder %v1135, 0.0
    %vm1140 = vcmp.gt.f32.partialorder %v1136, 0.0
    %v1141 = vmul.f32 %v1133, 0.2
    %v1142 = vmul.f32 %v1134, 0.2
    %v1143 = vmul.f32 %v1135, 0.2
    %v1144 = vmul.f32 %v1136, 0.2
    %v1145 = vsel %vm1137, %v1133, %v1141
    %v1146 = vsel %vm1138, %v1134, %v1142
    %v1147 = vsel %vm1139, %v1135, %v1143
    %v1148 = vsel %vm1140, %v1136, %v1144
    %v1149 = vpack.c.bf16 %v1145, %v1145
    %v1150 = vpack.c.bf16 %v1146, %v1146
    %v1151 = vpack.c.bf16 %v1147, %v1147
    %v1152 = vpack.c.bf16 %v1148, %v1148
    %v1153 = vld [vmem:[#allocation9] sm:$0xff]
    %v1154 = vld [vmem:[#allocation9 + $0x8] sm:$0xff]
    %v1155 = vld [vmem:[#allocation9 + $0x10] sm:$0xff]
    %v1156 = vld [vmem:[#allocation9 + $0x18] sm:$0xff]
    %v1157 = vld [vmem:[#allocation9 + $0x20] sm:$0xff]
    %v1158 = vld [vmem:[#allocation9 + $0x28] sm:$0xff]
    %v1159 = vld [vmem:[#allocation9 + $0x30] sm:$0xff]
    %v1160 = vld [vmem:[#allocation9 + $0x38] sm:$0xff]
    %v1161 = vld [vmem:[#allocation9 + $0x40] sm:$0xff]
    %v1162 = vld [vmem:[#allocation9 + $0x48] sm:$0xff]
    %v1163 = vld [vmem:[#allocation9 + $0x50] sm:$0xff]
    %v1164 = vld [vmem:[#allocation9 + $0x58] sm:$0xff]
    %v1165 = vld [vmem:[#allocation9 + $0x60] sm:$0xff]
    %v1166 = vld [vmem:[#allocation9 + $0x68] sm:$0xff]
    %v1167 = vld [vmem:[#allocation9 + $0x70] sm:$0xff]
    %v1168 = vld [vmem:[#allocation9 + $0x78] sm:$0xff]
    %v1169 = vld [vmem:[#allocation9 + $0x80] sm:$0xff]
    %v1170 = vld [vmem:[#allocation9 + $0x88] sm:$0xff]
    %v1171 = vld [vmem:[#allocation9 + $0x90] sm:$0xff]
    %v1172 = vld [vmem:[#allocation9 + $0x98] sm:$0xff]
    %v1173 = vld [vmem:[#allocation9 + $0xa0] sm:$0xff]
    %v1174 = vld [vmem:[#allocation9 + $0xa8] sm:$0xff]
    %v1175 = vld [vmem:[#allocation9 + $0xb0] sm:$0xff]
    %v1176 = vld [vmem:[#allocation9 + $0xb8] sm:$0xff]
    %v1177 = vld [vmem:[#allocation9 + $0xc0] sm:$0xff]
    %v1178 = vld [vmem:[#allocation9 + $0xc8] sm:$0xff]
    %v1179 = vld [vmem:[#allocation9 + $0xd0] sm:$0xff]
    %v1180 = vld [vmem:[#allocation9 + $0xd8] sm:$0xff]
    %v1181 = vld [vmem:[#allocation9 + $0xe0] sm:$0xff]
    %v1182 = vld [vmem:[#allocation9 + $0xe8] sm:$0xff]
    %v1183 = vld [vmem:[#allocation9 + $0xf0] sm:$0xff]
    %v1184 = vld [vmem:[#allocation9 + $0xf8] sm:$0xff]
    %v1185 = vld [vmem:[#allocation9 + $0x100] sm:$0xff]
    %v1186 = vld [vmem:[#allocation9 + $0x108] sm:$0xff]
    %v1187 = vld [vmem:[#allocation9 + $0x110] sm:$0xff]
    %v1188 = vld [vmem:[#allocation9 + $0x118] sm:$0xff]
    %v1189 = vld [vmem:[#allocation9 + $0x120] sm:$0xff]
    %v1190 = vld [vmem:[#allocation9 + $0x128] sm:$0xff]
    %v1191 = vld [vmem:[#allocation9 + $0x130] sm:$0xff]
    %v1192 = vld [vmem:[#allocation9 + $0x138] sm:$0xff]
    %v1193 = vld [vmem:[#allocation9 + $0x140] sm:$0xff]
    %v1194 = vld [vmem:[#allocation9 + $0x148] sm:$0xff]
    %v1195 = vld [vmem:[#allocation9 + $0x150] sm:$0xff]
    %v1196 = vld [vmem:[#allocation9 + $0x158] sm:$0xff]
    %v1197 = vld [vmem:[#allocation9 + $0x160] sm:$0xff]
    %v1198 = vld [vmem:[#allocation9 + $0x168] sm:$0xff]
    %v1199 = vld [vmem:[#allocation9 + $0x170] sm:$0xff]
    %v1200 = vld [vmem:[#allocation9 + $0x178] sm:$0xff]
    %v1201 = vld [vmem:[#allocation9 + $0x180] sm:$0xff]
    %v1202 = vld [vmem:[#allocation9 + $0x188] sm:$0xff]
    %v1203 = vld [vmem:[#allocation9 + $0x190] sm:$0xff]
    %v1204 = vld [vmem:[#allocation9 + $0x198] sm:$0xff]
    %v1205 = vld [vmem:[#allocation9 + $0x1a0] sm:$0xff]
    %v1206 = vld [vmem:[#allocation9 + $0x1a8] sm:$0xff]
    %v1207 = vld [vmem:[#allocation9 + $0x1b0] sm:$0xff]
    %v1208 = vld [vmem:[#allocation9 + $0x1b8] sm:$0xff]
    %v1209 = vld [vmem:[#allocation9 + $0x1c0] sm:$0xff]
    %v1210 = vld [vmem:[#allocation9 + $0x1c8] sm:$0xff]
    %v1211 = vld [vmem:[#allocation9 + $0x1d0] sm:$0xff]
    %v1212 = vld [vmem:[#allocation9 + $0x1d8] sm:$0xff]
    %v1213 = vld [vmem:[#allocation9 + $0x1e0] sm:$0xff]
    %v1214 = vld [vmem:[#allocation9 + $0x1e8] sm:$0xff]
    %v1215 = vld [vmem:[#allocation9 + $0x1f0] sm:$0xff]
    %v1216 = vld [vmem:[#allocation9 + $0x1f8] sm:$0xff]
    %v1217 = vld [vmem:[#allocation9 + $0x200] sm:$0xff]
    %v1218 = vld [vmem:[#allocation9 + $0x208] sm:$0xff]
    %v1219 = vld [vmem:[#allocation9 + $0x210] sm:$0xff]
    %v1220 = vld [vmem:[#allocation9 + $0x218] sm:$0xff]
    %v1221 = vld [vmem:[#allocation9 + $0x220] sm:$0xff]
    %v1222 = vld [vmem:[#allocation9 + $0x228] sm:$0xff]
    %v1223 = vld [vmem:[#allocation9 + $0x230] sm:$0xff]
    %v1224 = vld [vmem:[#allocation9 + $0x238] sm:$0xff]
    %v1225 = vld [vmem:[#allocation9 + $0x240] sm:$0xff]
    %v1226 = vld [vmem:[#allocation9 + $0x248] sm:$0xff]
    %v1227 = vld [vmem:[#allocation9 + $0x250] sm:$0xff]
    %v1228 = vld [vmem:[#allocation9 + $0x258] sm:$0xff]
    %v1229 = vld [vmem:[#allocation9 + $0x260] sm:$0xff]
    %v1230 = vld [vmem:[#allocation9 + $0x268] sm:$0xff]
    %v1231 = vld [vmem:[#allocation9 + $0x270] sm:$0xff]
    %v1232 = vld [vmem:[#allocation9 + $0x278] sm:$0xff]
    %v1233 = vld [vmem:[#allocation9 + $0x280] sm:$0xff]
    %v1234 = vld [vmem:[#allocation9 + $0x288] sm:$0xff]
    %v1235 = vld [vmem:[#allocation9 + $0x290] sm:$0xff]
    %v1236 = vld [vmem:[#allocation9 + $0x298] sm:$0xff]
    %v1237 = vld [vmem:[#allocation9 + $0x2a0] sm:$0xff]
    %v1238 = vld [vmem:[#allocation9 + $0x2a8] sm:$0xff]
    %v1239 = vld [vmem:[#allocation9 + $0x2b0] sm:$0xff]
    %v1240 = vld [vmem:[#allocation9 + $0x2b8] sm:$0xff]
    %v1241 = vld [vmem:[#allocation9 + $0x2c0] sm:$0xff]
    %v1242 = vld [vmem:[#allocation9 + $0x2c8] sm:$0xff]
    %v1243 = vld [vmem:[#allocation9 + $0x2d0] sm:$0xff]
    %v1244 = vld [vmem:[#allocation9 + $0x2d8] sm:$0xff]
    %v1245 = vld [vmem:[#allocation9 + $0x2e0] sm:$0xff]
    %v1246 = vld [vmem:[#allocation9 + $0x2e8] sm:$0xff]
    %v1247 = vld [vmem:[#allocation9 + $0x2f0] sm:$0xff]
    %v1248 = vld [vmem:[#allocation9 + $0x2f8] sm:$0xff]
    %v1249 = vld [vmem:[#allocation9 + $0x300] sm:$0xff]
    %v1250 = vld [vmem:[#allocation9 + $0x308] sm:$0xff]
    %v1251 = vld [vmem:[#allocation9 + $0x310] sm:$0xff]
    %v1252 = vld [vmem:[#allocation9 + $0x318] sm:$0xff]
    %v1253 = vld [vmem:[#allocation9 + $0x320] sm:$0xff]
    %v1254 = vld [vmem:[#allocation9 + $0x328] sm:$0xff]
    %v1255 = vld [vmem:[#allocation9 + $0x330] sm:$0xff]
    %v1256 = vld [vmem:[#allocation9 + $0x338] sm:$0xff]
    %v1257 = vld [vmem:[#allocation9 + $0x340] sm:$0xff]
    %v1258 = vld [vmem:[#allocation9 + $0x348] sm:$0xff]
    %v1259 = vld [vmem:[#allocation9 + $0x350] sm:$0xff]
    %v1260 = vld [vmem:[#allocation9 + $0x358] sm:$0xff]
    %v1261 = vld [vmem:[#allocation9 + $0x360] sm:$0xff]
    %v1262 = vld [vmem:[#allocation9 + $0x368] sm:$0xff]
    %v1263 = vld [vmem:[#allocation9 + $0x370] sm:$0xff]
    %v1264 = vld [vmem:[#allocation9 + $0x378] sm:$0xff]
    %v1265 = vld [vmem:[#allocation9 + $0x380] sm:$0xff]
    %v1266 = vld [vmem:[#allocation9 + $0x388] sm:$0xff]
    %v1267 = vld [vmem:[#allocation9 + $0x390] sm:$0xff]
    %v1268 = vld [vmem:[#allocation9 + $0x398] sm:$0xff]
    %v1269 = vld [vmem:[#allocation9 + $0x3a0] sm:$0xff]
    %v1270 = vld [vmem:[#allocation9 + $0x3a8] sm:$0xff]
    %v1271 = vld [vmem:[#allocation9 + $0x3b0] sm:$0xff]
    %v1272 = vld [vmem:[#allocation9 + $0x3b8] sm:$0xff]
    %v1273 = vld [vmem:[#allocation9 + $0x3c0] sm:$0xff]
    %v1274 = vld [vmem:[#allocation9 + $0x3c8] sm:$0xff]
    %v1275 = vld [vmem:[#allocation9 + $0x3d0] sm:$0xff]
    %v1276 = vld [vmem:[#allocation9 + $0x3d8] sm:$0xff]
    %v1277 = vld [vmem:[#allocation9 + $0x3e0] sm:$0xff]
    %v1278 = vld [vmem:[#allocation9 + $0x3e8] sm:$0xff]
    %v1279 = vld [vmem:[#allocation9 + $0x3f0] sm:$0xff]
    %v1280 = vld [vmem:[#allocation9 + $0x3f8] sm:$0xff]
    %v1281 = vld [vmem:[#allocation9 + $0x400] sm:$0xff]
    %v1282 = vld [vmem:[#allocation9 + $0x408] sm:$0xff]
    %v1283 = vld [vmem:[#allocation9 + $0x410] sm:$0xff]
    %v1284 = vld [vmem:[#allocation9 + $0x418] sm:$0xff]
    %v1285 = vld [vmem:[#allocation9 + $0x420] sm:$0xff]
    %v1286 = vld [vmem:[#allocation9 + $0x428] sm:$0xff]
    %v1287 = vld [vmem:[#allocation9 + $0x430] sm:$0xff]
    %v1288 = vld [vmem:[#allocation9 + $0x438] sm:$0xff]
    %v1289 = vld [vmem:[#allocation9 + $0x440] sm:$0xff]
    %v1290 = vld [vmem:[#allocation9 + $0x448] sm:$0xff]
    %v1291 = vld [vmem:[#allocation9 + $0x450] sm:$0xff]
    %v1292 = vld [vmem:[#allocation9 + $0x458] sm:$0xff]
    %v1293 = vld [vmem:[#allocation9 + $0x460] sm:$0xff]
    %v1294 = vld [vmem:[#allocation9 + $0x468] sm:$0xff]
    %v1295 = vld [vmem:[#allocation9 + $0x470] sm:$0xff]
    %v1296 = vld [vmem:[#allocation9 + $0x478] sm:$0xff]
    %v1297 = vld [vmem:[#allocation9 + $0x480] sm:$0xff]
    %v1298 = vld [vmem:[#allocation9 + $0x488] sm:$0xff]
    %v1299 = vld [vmem:[#allocation9 + $0x490] sm:$0xff]
    %v1300 = vld [vmem:[#allocation9 + $0x498] sm:$0xff]
    %v1301 = vld [vmem:[#allocation9 + $0x4a0] sm:$0xff]
    %v1302 = vld [vmem:[#allocation9 + $0x4a8] sm:$0xff]
    %v1303 = vld [vmem:[#allocation9 + $0x4b0] sm:$0xff]
    %v1304 = vld [vmem:[#allocation9 + $0x4b8] sm:$0xff]
    %v1305 = vld [vmem:[#allocation9 + $0x4c0] sm:$0xff]
    %v1306 = vld [vmem:[#allocation9 + $0x4c8] sm:$0xff]
    %v1307 = vld [vmem:[#allocation9 + $0x4d0] sm:$0xff]
    %v1308 = vld [vmem:[#allocation9 + $0x4d8] sm:$0xff]
    %v1309 = vld [vmem:[#allocation9 + $0x4e0] sm:$0xff]
    %v1310 = vld [vmem:[#allocation9 + $0x4e8] sm:$0xff]
    %v1311 = vld [vmem:[#allocation9 + $0x4f0] sm:$0xff]
    %v1312 = vld [vmem:[#allocation9 + $0x4f8] sm:$0xff]
    %v1313 = vld [vmem:[#allocation9 + $0x500] sm:$0xff]
    %v1314 = vld [vmem:[#allocation9 + $0x508] sm:$0xff]
    %v1315 = vld [vmem:[#allocation9 + $0x510] sm:$0xff]
    %v1316 = vld [vmem:[#allocation9 + $0x518] sm:$0xff]
    %v1317 = vld [vmem:[#allocation9 + $0x520] sm:$0xff]
    %v1318 = vld [vmem:[#allocation9 + $0x528] sm:$0xff]
    %v1319 = vld [vmem:[#allocation9 + $0x530] sm:$0xff]
    %v1320 = vld [vmem:[#allocation9 + $0x538] sm:$0xff]
    %v1321 = vld [vmem:[#allocation9 + $0x540] sm:$0xff]
    %v1322 = vld [vmem:[#allocation9 + $0x548] sm:$0xff]
    %v1323 = vld [vmem:[#allocation9 + $0x550] sm:$0xff]
    %v1324 = vld [vmem:[#allocation9 + $0x558] sm:$0xff]
    %v1325 = vld [vmem:[#allocation9 + $0x560] sm:$0xff]
    %v1326 = vld [vmem:[#allocation9 + $0x568] sm:$0xff]
    %v1327 = vld [vmem:[#allocation9 + $0x570] sm:$0xff]
    %v1328 = vld [vmem:[#allocation9 + $0x578] sm:$0xff]
    %v1329 = vld [vmem:[#allocation9 + $0x580] sm:$0xff]
    %v1330 = vld [vmem:[#allocation9 + $0x588] sm:$0xff]
    %v1331 = vld [vmem:[#allocation9 + $0x590] sm:$0xff]
    %v1332 = vld [vmem:[#allocation9 + $0x598] sm:$0xff]
    %v1333 = vld [vmem:[#allocation9 + $0x5a0] sm:$0xff]
    %v1334 = vld [vmem:[#allocation9 + $0x5a8] sm:$0xff]
    %v1335 = vld [vmem:[#allocation9 + $0x5b0] sm:$0xff]
    %v1336 = vld [vmem:[#allocation9 + $0x5b8] sm:$0xff]
    %v1337 = vld [vmem:[#allocation9 + $0x5c0] sm:$0xff]
    %v1338 = vld [vmem:[#allocation9 + $0x5c8] sm:$0xff]
    %v1339 = vld [vmem:[#allocation9 + $0x5d0] sm:$0xff]
    %v1340 = vld [vmem:[#allocation9 + $0x5d8] sm:$0xff]
    %v1341 = vld [vmem:[#allocation9 + $0x5e0] sm:$0xff]
    %v1342 = vld [vmem:[#allocation9 + $0x5e8] sm:$0xff]
    %v1343 = vld [vmem:[#allocation9 + $0x5f0] sm:$0xff]
    %v1344 = vld [vmem:[#allocation9 + $0x5f8] sm:$0xff]
    %v1345 = vld [vmem:[#allocation9 + $0x600] sm:$0xff]
    %v1346 = vld [vmem:[#allocation9 + $0x608] sm:$0xff]
    %v1347 = vld [vmem:[#allocation9 + $0x610] sm:$0xff]
    %v1348 = vld [vmem:[#allocation9 + $0x618] sm:$0xff]
    %v1349 = vld [vmem:[#allocation9 + $0x620] sm:$0xff]
    %v1350 = vld [vmem:[#allocation9 + $0x628] sm:$0xff]
    %v1351 = vld [vmem:[#allocation9 + $0x630] sm:$0xff]
    %v1352 = vld [vmem:[#allocation9 + $0x638] sm:$0xff]
    %v1353 = vld [vmem:[#allocation9 + $0x640] sm:$0xff]
    %v1354 = vld [vmem:[#allocation9 + $0x648] sm:$0xff]
    %v1355 = vld [vmem:[#allocation9 + $0x650] sm:$0xff]
    %v1356 = vld [vmem:[#allocation9 + $0x658] sm:$0xff]
    %v1357 = vld [vmem:[#allocation9 + $0x660] sm:$0xff]
    %v1358 = vld [vmem:[#allocation9 + $0x668] sm:$0xff]
    %v1359 = vld [vmem:[#allocation9 + $0x670] sm:$0xff]
    %v1360 = vld [vmem:[#allocation9 + $0x678] sm:$0xff]
    %v1361 = vld [vmem:[#allocation9 + $0x680] sm:$0xff]
    %v1362 = vld [vmem:[#allocation9 + $0x688] sm:$0xff]
    %v1363 = vld [vmem:[#allocation9 + $0x690] sm:$0xff]
    %v1364 = vld [vmem:[#allocation9 + $0x698] sm:$0xff]
    %v1365 = vld [vmem:[#allocation9 + $0x6a0] sm:$0xff]
    %v1366 = vld [vmem:[#allocation9 + $0x6a8] sm:$0xff]
    %v1367 = vld [vmem:[#allocation9 + $0x6b0] sm:$0xff]
    %v1368 = vld [vmem:[#allocation9 + $0x6b8] sm:$0xff]
    %v1369 = vld [vmem:[#allocation9 + $0x6c0] sm:$0xff]
    %v1370 = vld [vmem:[#allocation9 + $0x6c8] sm:$0xff]
    %v1371 = vld [vmem:[#allocation9 + $0x6d0] sm:$0xff]
    %v1372 = vld [vmem:[#allocation9 + $0x6d8] sm:$0xff]
    %v1373 = vld [vmem:[#allocation9 + $0x6e0] sm:$0xff]
    %v1374 = vld [vmem:[#allocation9 + $0x6e8] sm:$0xff]
    %v1375 = vld [vmem:[#allocation9 + $0x6f0] sm:$0xff]
    %v1376 = vld [vmem:[#allocation9 + $0x6f8] sm:$0xff]
    %v1377 = vld [vmem:[#allocation9 + $0x700] sm:$0xff]
    %v1378 = vld [vmem:[#allocation9 + $0x708] sm:$0xff]
    %v1379 = vld [vmem:[#allocation9 + $0x710] sm:$0xff]
    %v1380 = vld [vmem:[#allocation9 + $0x718] sm:$0xff]
    %v1381 = vld [vmem:[#allocation9 + $0x720] sm:$0xff]
    %v1382 = vld [vmem:[#allocation9 + $0x728] sm:$0xff]
    %v1383 = vld [vmem:[#allocation9 + $0x730] sm:$0xff]
    %v1384 = vld [vmem:[#allocation9 + $0x738] sm:$0xff]
    %v1385 = vld [vmem:[#allocation9 + $0x740] sm:$0xff]
    %v1386 = vld [vmem:[#allocation9 + $0x748] sm:$0xff]
    %v1387 = vld [vmem:[#allocation9 + $0x750] sm:$0xff]
    %v1388 = vld [vmem:[#allocation9 + $0x758] sm:$0xff]
    %v1389 = vld [vmem:[#allocation9 + $0x760] sm:$0xff]
    %v1390 = vld [vmem:[#allocation9 + $0x768] sm:$0xff]
    %v1391 = vld [vmem:[#allocation9 + $0x770] sm:$0xff]
    %v1392 = vld [vmem:[#allocation9 + $0x778] sm:$0xff]
    %v1393 = vld [vmem:[#allocation9 + $0x780] sm:$0xff]
    %v1394 = vld [vmem:[#allocation9 + $0x788] sm:$0xff]
    %v1395 = vld [vmem:[#allocation9 + $0x790] sm:$0xff]
    %v1396 = vld [vmem:[#allocation9 + $0x798] sm:$0xff]
    %v1397 = vld [vmem:[#allocation9 + $0x7a0] sm:$0xff]
    %v1398 = vld [vmem:[#allocation9 + $0x7a8] sm:$0xff]
    %v1399 = vld [vmem:[#allocation9 + $0x7b0] sm:$0xff]
    %v1400 = vld [vmem:[#allocation9 + $0x7b8] sm:$0xff]
    %v1401 = vld [vmem:[#allocation9 + $0x7c0] sm:$0xff]
    %v1402 = vld [vmem:[#allocation9 + $0x7c8] sm:$0xff]
    %v1403 = vld [vmem:[#allocation9 + $0x7d0] sm:$0xff]
    %v1404 = vld [vmem:[#allocation9 + $0x7d8] sm:$0xff]
    %v1405 = vld [vmem:[#allocation9 + $0x7e0] sm:$0xff]
    %v1406 = vld [vmem:[#allocation9 + $0x7e8] sm:$0xff]
    %v1407 = vld [vmem:[#allocation9 + $0x7f0] sm:$0xff]
    %v1408 = vld [vmem:[#allocation9 + $0x7f8] sm:$0xff]
    %s1409 = scalar_lea.vmem [#allocation12], 7
    %v1410 = vld [vmem:[%s1409] ss:$8 sm:$0xf]
    %v1411 = vld [vmem:[%s1409] ss:$8 sm:$0xf0]
    %v1412 = vor.u32 %v1410, %v1411
    %v1414 = vlaneseq
    %v1415 = vshrl.u32 %v1414, 7
    %v1416 = vsub.s32 0, %v1415
    %v1417 = vrot.slane %v1412, %v1416
    %v1418 = vlaneseq
    %v1419 = vshrl.u32 %v1418, 7
    %v1420 = vsub.s32 1, %v1419
    %v1421 = vrot.slane %v1412, %v1420
    %v1422 = vlaneseq
    %v1423 = vshrl.u32 %v1422, 7
    %v1424 = vsub.s32 2, %v1423
    %v1425 = vrot.slane %v1412, %v1424
    %v1426 = vlaneseq
    %v1427 = vshrl.u32 %v1426, 7
    %v1428 = vsub.s32 3, %v1427
    %v1429 = vrot.slane %v1412, %v1428
    %v1430 = vlaneseq
    %v1431 = vshrl.u32 %v1430, 7
    %v1432 = vsub.s32 4, %v1431
    %v1433 = vrot.slane %v1412, %v1432
    %v1434 = vlaneseq
    %v1435 = vshrl.u32 %v1434, 7
    %v1436 = vsub.s32 5, %v1435
    %v1437 = vrot.slane %v1412, %v1436
    %v1438 = vlaneseq
    %v1439 = vshrl.u32 %v1438, 7
    %v1440 = vsub.s32 6, %v1439
    %v1441 = vrot.slane %v1412, %v1440
    %v1442 = vlaneseq
    %v1443 = vshrl.u32 %v1442, 7
    %v1444 = vsub.s32 7, %v1443
    %v1445 = vrot.slane %v1412, %v1444
    %v1710 = vunpack.c.l.b16 %v1153
    %v1711 = vunpack.c.h.b16 %v1153
    %v1712 = vunpack.c.l.b16 %v1154
    %v1713 = vunpack.c.h.b16 %v1154
    %v1714 = vunpack.c.l.b16 %v1155
    %v1715 = vunpack.c.h.b16 %v1155
    %v1716 = vunpack.c.l.b16 %v1156
    %v1717 = vunpack.c.h.b16 %v1156
    %v1718 = vunpack.c.l.b16 %v1157
    %v1719 = vunpack.c.h.b16 %v1157
    %v1720 = vunpack.c.l.b16 %v1158
    %v1721 = vunpack.c.h.b16 %v1158
    %v1722 = vunpack.c.l.b16 %v1159
    %v1723 = vunpack.c.h.b16 %v1159
    %v1724 = vunpack.c.l.b16 %v1160
    %v1725 = vunpack.c.h.b16 %v1160
    %v1726 = vunpack.c.l.b16 %v1161
    %v1727 = vunpack.c.h.b16 %v1161
    %v1728 = vunpack.c.l.b16 %v1162
    %v1729 = vunpack.c.h.b16 %v1162
    %v1730 = vunpack.c.l.b16 %v1163
    %v1731 = vunpack.c.h.b16 %v1163
    %v1732 = vunpack.c.l.b16 %v1164
    %v1733 = vunpack.c.h.b16 %v1164
    %v1734 = vunpack.c.l.b16 %v1165
    %v1735 = vunpack.c.h.b16 %v1165
    %v1736 = vunpack.c.l.b16 %v1166
    %v1737 = vunpack.c.h.b16 %v1166
    %v1738 = vunpack.c.l.b16 %v1167
    %v1739 = vunpack.c.h.b16 %v1167
    %v1740 = vunpack.c.l.b16 %v1168
    %v1741 = vunpack.c.h.b16 %v1168
    %v1742 = vunpack.c.l.b16 %v1169
    %v1743 = vunpack.c.h.b16 %v1169
    %v1744 = vunpack.c.l.b16 %v1170
    %v1745 = vunpack.c.h.b16 %v1170
    %v1746 = vunpack.c.l.b16 %v1171
    %v1747 = vunpack.c.h.b16 %v1171
    %v1748 = vunpack.c.l.b16 %v1172
    %v1749 = vunpack.c.h.b16 %v1172
    %v1750 = vunpack.c.l.b16 %v1173
    %v1751 = vunpack.c.h.b16 %v1173
    %v1752 = vunpack.c.l.b16 %v1174
    %v1753 = vunpack.c.h.b16 %v1174
    %v1754 = vunpack.c.l.b16 %v1175
    %v1755 = vunpack.c.h.b16 %v1175
    %v1756 = vunpack.c.l.b16 %v1176
    %v1757 = vunpack.c.h.b16 %v1176
    %v1758 = vunpack.c.l.b16 %v1177
    %v1759 = vunpack.c.h.b16 %v1177
    %v1760 = vunpack.c.l.b16 %v1178
    %v1761 = vunpack.c.h.b16 %v1178
    %v1762 = vunpack.c.l.b16 %v1179
    %v1763 = vunpack.c.h.b16 %v1179
    %v1764 = vunpack.c.l.b16 %v1180
    %v1765 = vunpack.c.h.b16 %v1180
    %v1766 = vunpack.c.l.b16 %v1181
    %v1767 = vunpack.c.h.b16 %v1181
    %v1768 = vunpack.c.l.b16 %v1182
    %v1769 = vunpack.c.h.b16 %v1182
    %v1770 = vunpack.c.l.b16 %v1183
    %v1771 = vunpack.c.h.b16 %v1183
    %v1772 = vunpack.c.l.b16 %v1184
    %v1773 = vunpack.c.h.b16 %v1184
    %v1774 = vunpack.c.l.b16 %v1185
    %v1775 = vunpack.c.h.b16 %v1185
    %v1776 = vunpack.c.l.b16 %v1186
    %v1777 = vunpack.c.h.b16 %v1186
    %v1778 = vunpack.c.l.b16 %v1187
    %v1779 = vunpack.c.h.b16 %v1187
    %v1780 = vunpack.c.l.b16 %v1188
    %v1781 = vunpack.c.h.b16 %v1188
    %v1782 = vunpack.c.l.b16 %v1189
    %v1783 = vunpack.c.h.b16 %v1189
    %v1784 = vunpack.c.l.b16 %v1190
    %v1785 = vunpack.c.h.b16 %v1190
    %v1786 = vunpack.c.l.b16 %v1191
    %v1787 = vunpack.c.h.b16 %v1191
    %v1788 = vunpack.c.l.b16 %v1192
    %v1789 = vunpack.c.h.b16 %v1192
    %v1790 = vunpack.c.l.b16 %v1193
    %v1791 = vunpack.c.h.b16 %v1193
    %v1792 = vunpack.c.l.b16 %v1194
    %v1793 = vunpack.c.h.b16 %v1194
    %v1794 = vunpack.c.l.b16 %v1195
    %v1795 = vunpack.c.h.b16 %v1195
    %v1796 = vunpack.c.l.b16 %v1196
    %v1797 = vunpack.c.h.b16 %v1196
    %v1798 = vunpack.c.l.b16 %v1197
    %v1799 = vunpack.c.h.b16 %v1197
    %v1800 = vunpack.c.l.b16 %v1198
    %v1801 = vunpack.c.h.b16 %v1198
    %v1802 = vunpack.c.l.b16 %v1199
    %v1803 = vunpack.c.h.b16 %v1199
    %v1804 = vunpack.c.l.b16 %v1200
    %v1805 = vunpack.c.h.b16 %v1200
    %v1806 = vunpack.c.l.b16 %v1201
    %v1807 = vunpack.c.h.b16 %v1201
    %v1808 = vunpack.c.l.b16 %v1202
    %v1809 = vunpack.c.h.b16 %v1202
    %v1810 = vunpack.c.l.b16 %v1203
    %v1811 = vunpack.c.h.b16 %v1203
    %v1812 = vunpack.c.l.b16 %v1204
    %v1813 = vunpack.c.h.b16 %v1204
    %v1814 = vunpack.c.l.b16 %v1205
    %v1815 = vunpack.c.h.b16 %v1205
    %v1816 = vunpack.c.l.b16 %v1206
    %v1817 = vunpack.c.h.b16 %v1206
    %v1818 = vunpack.c.l.b16 %v1207
    %v1819 = vunpack.c.h.b16 %v1207
    %v1820 = vunpack.c.l.b16 %v1208
    %v1821 = vunpack.c.h.b16 %v1208
    %v1822 = vunpack.c.l.b16 %v1209
    %v1823 = vunpack.c.h.b16 %v1209
    %v1824 = vunpack.c.l.b16 %v1210
    %v1825 = vunpack.c.h.b16 %v1210
    %v1826 = vunpack.c.l.b16 %v1211
    %v1827 = vunpack.c.h.b16 %v1211
    %v1828 = vunpack.c.l.b16 %v1212
    %v1829 = vunpack.c.h.b16 %v1212
    %v1830 = vunpack.c.l.b16 %v1213
    %v1831 = vunpack.c.h.b16 %v1213
    %v1832 = vunpack.c.l.b16 %v1214
    %v1833 = vunpack.c.h.b16 %v1214
    %v1834 = vunpack.c.l.b16 %v1215
    %v1835 = vunpack.c.h.b16 %v1215
    %v1836 = vunpack.c.l.b16 %v1216
    %v1837 = vunpack.c.h.b16 %v1216
    %v1838 = vunpack.c.l.b16 %v1217
    %v1839 = vunpack.c.h.b16 %v1217
    %v1840 = vunpack.c.l.b16 %v1218
    %v1841 = vunpack.c.h.b16 %v1218
    %v1842 = vunpack.c.l.b16 %v1219
    %v1843 = vunpack.c.h.b16 %v1219
    %v1844 = vunpack.c.l.b16 %v1220
    %v1845 = vunpack.c.h.b16 %v1220
    %v1846 = vunpack.c.l.b16 %v1221
    %v1847 = vunpack.c.h.b16 %v1221
    %v1848 = vunpack.c.l.b16 %v1222
    %v1849 = vunpack.c.h.b16 %v1222
    %v1850 = vunpack.c.l.b16 %v1223
    %v1851 = vunpack.c.h.b16 %v1223
    %v1852 = vunpack.c.l.b16 %v1224
    %v1853 = vunpack.c.h.b16 %v1224
    %v1854 = vunpack.c.l.b16 %v1225
    %v1855 = vunpack.c.h.b16 %v1225
    %v1856 = vunpack.c.l.b16 %v1226
    %v1857 = vunpack.c.h.b16 %v1226
    %v1858 = vunpack.c.l.b16 %v1227
    %v1859 = vunpack.c.h.b16 %v1227
    %v1860 = vunpack.c.l.b16 %v1228
    %v1861 = vunpack.c.h.b16 %v1228
    %v1862 = vunpack.c.l.b16 %v1229
    %v1863 = vunpack.c.h.b16 %v1229
    %v1864 = vunpack.c.l.b16 %v1230
    %v1865 = vunpack.c.h.b16 %v1230
    %v1866 = vunpack.c.l.b16 %v1231
    %v1867 = vunpack.c.h.b16 %v1231
    %v1868 = vunpack.c.l.b16 %v1232
    %v1869 = vunpack.c.h.b16 %v1232
    %v1870 = vunpack.c.l.b16 %v1233
    %v1871 = vunpack.c.h.b16 %v1233
    %v1872 = vunpack.c.l.b16 %v1234
    %v1873 = vunpack.c.h.b16 %v1234
    %v1874 = vunpack.c.l.b16 %v1235
    %v1875 = vunpack.c.h.b16 %v1235
    %v1876 = vunpack.c.l.b16 %v1236
    %v1877 = vunpack.c.h.b16 %v1236
    %v1878 = vunpack.c.l.b16 %v1237
    %v1879 = vunpack.c.h.b16 %v1237
    %v1880 = vunpack.c.l.b16 %v1238
    %v1881 = vunpack.c.h.b16 %v1238
    %v1882 = vunpack.c.l.b16 %v1239
    %v1883 = vunpack.c.h.b16 %v1239
    %v1884 = vunpack.c.l.b16 %v1240
    %v1885 = vunpack.c.h.b16 %v1240
    %v1886 = vunpack.c.l.b16 %v1241
    %v1887 = vunpack.c.h.b16 %v1241
    %v1888 = vunpack.c.l.b16 %v1242
    %v1889 = vunpack.c.h.b16 %v1242
    %v1890 = vunpack.c.l.b16 %v1243
    %v1891 = vunpack.c.h.b16 %v1243
    %v1892 = vunpack.c.l.b16 %v1244
    %v1893 = vunpack.c.h.b16 %v1244
    %v1894 = vunpack.c.l.b16 %v1245
    %v1895 = vunpack.c.h.b16 %v1245
    %v1896 = vunpack.c.l.b16 %v1246
    %v1897 = vunpack.c.h.b16 %v1246
    %v1898 = vunpack.c.l.b16 %v1247
    %v1899 = vunpack.c.h.b16 %v1247
    %v1900 = vunpack.c.l.b16 %v1248
    %v1901 = vunpack.c.h.b16 %v1248
    %v1902 = vunpack.c.l.b16 %v1249
    %v1903 = vunpack.c.h.b16 %v1249
    %v1904 = vunpack.c.l.b16 %v1250
    %v1905 = vunpack.c.h.b16 %v1250
    %v1906 = vunpack.c.l.b16 %v1251
    %v1907 = vunpack.c.h.b16 %v1251
    %v1908 = vunpack.c.l.b16 %v1252
    %v1909 = vunpack.c.h.b16 %v1252
    %v1910 = vunpack.c.l.b16 %v1253
    %v1911 = vunpack.c.h.b16 %v1253
    %v1912 = vunpack.c.l.b16 %v1254
    %v1913 = vunpack.c.h.b16 %v1254
    %v1914 = vunpack.c.l.b16 %v1255
    %v1915 = vunpack.c.h.b16 %v1255
    %v1916 = vunpack.c.l.b16 %v1256
    %v1917 = vunpack.c.h.b16 %v1256
    %v1918 = vunpack.c.l.b16 %v1257
    %v1919 = vunpack.c.h.b16 %v1257
    %v1920 = vunpack.c.l.b16 %v1258
    %v1921 = vunpack.c.h.b16 %v1258
    %v1922 = vunpack.c.l.b16 %v1259
    %v1923 = vunpack.c.h.b16 %v1259
    %v1924 = vunpack.c.l.b16 %v1260
    %v1925 = vunpack.c.h.b16 %v1260
    %v1926 = vunpack.c.l.b16 %v1261
    %v1927 = vunpack.c.h.b16 %v1261
    %v1928 = vunpack.c.l.b16 %v1262
    %v1929 = vunpack.c.h.b16 %v1262
    %v1930 = vunpack.c.l.b16 %v1263
    %v1931 = vunpack.c.h.b16 %v1263
    %v1932 = vunpack.c.l.b16 %v1264
    %v1933 = vunpack.c.h.b16 %v1264
    %v1934 = vunpack.c.l.b16 %v1265
    %v1935 = vunpack.c.h.b16 %v1265
    %v1936 = vunpack.c.l.b16 %v1266
    %v1937 = vunpack.c.h.b16 %v1266
    %v1938 = vunpack.c.l.b16 %v1267
    %v1939 = vunpack.c.h.b16 %v1267
    %v1940 = vunpack.c.l.b16 %v1268
    %v1941 = vunpack.c.h.b16 %v1268
    %v1942 = vunpack.c.l.b16 %v1269
    %v1943 = vunpack.c.h.b16 %v1269
    %v1944 = vunpack.c.l.b16 %v1270
    %v1945 = vunpack.c.h.b16 %v1270
    %v1946 = vunpack.c.l.b16 %v1271
    %v1947 = vunpack.c.h.b16 %v1271
    %v1948 = vunpack.c.l.b16 %v1272
    %v1949 = vunpack.c.h.b16 %v1272
    %v1950 = vunpack.c.l.b16 %v1273
    %v1951 = vunpack.c.h.b16 %v1273
    %v1952 = vunpack.c.l.b16 %v1274
    %v1953 = vunpack.c.h.b16 %v1274
    %v1954 = vunpack.c.l.b16 %v1275
    %v1955 = vunpack.c.h.b16 %v1275
    %v1956 = vunpack.c.l.b16 %v1276
    %v1957 = vunpack.c.h.b16 %v1276
    %v1958 = vunpack.c.l.b16 %v1277
    %v1959 = vunpack.c.h.b16 %v1277
    %v1960 = vunpack.c.l.b16 %v1278
    %v1961 = vunpack.c.h.b16 %v1278
    %v1962 = vunpack.c.l.b16 %v1279
    %v1963 = vunpack.c.h.b16 %v1279
    %v1964 = vunpack.c.l.b16 %v1280
    %v1965 = vunpack.c.h.b16 %v1280
    %v1966 = vunpack.c.l.b16 %v1281
    %v1967 = vunpack.c.h.b16 %v1281
    %v1968 = vunpack.c.l.b16 %v1282
    %v1969 = vunpack.c.h.b16 %v1282
    %v1970 = vunpack.c.l.b16 %v1283
    %v1971 = vunpack.c.h.b16 %v1283
    %v1972 = vunpack.c.l.b16 %v1284
    %v1973 = vunpack.c.h.b16 %v1284
    %v1974 = vunpack.c.l.b16 %v1285
    %v1975 = vunpack.c.h.b16 %v1285
    %v1976 = vunpack.c.l.b16 %v1286
    %v1977 = vunpack.c.h.b16 %v1286
    %v1978 = vunpack.c.l.b16 %v1287
    %v1979 = vunpack.c.h.b16 %v1287
    %v1980 = vunpack.c.l.b16 %v1288
    %v1981 = vunpack.c.h.b16 %v1288
    %v1982 = vunpack.c.l.b16 %v1289
    %v1983 = vunpack.c.h.b16 %v1289
    %v1984 = vunpack.c.l.b16 %v1290
    %v1985 = vunpack.c.h.b16 %v1290
    %v1986 = vunpack.c.l.b16 %v1291
    %v1987 = vunpack.c.h.b16 %v1291
    %v1988 = vunpack.c.l.b16 %v1292
    %v1989 = vunpack.c.h.b16 %v1292
    %v1990 = vunpack.c.l.b16 %v1293
    %v1991 = vunpack.c.h.b16 %v1293
    %v1992 = vunpack.c.l.b16 %v1294
    %v1993 = vunpack.c.h.b16 %v1294
    %v1994 = vunpack.c.l.b16 %v1295
    %v1995 = vunpack.c.h.b16 %v1295
    %v1996 = vunpack.c.l.b16 %v1296
    %v1997 = vunpack.c.h.b16 %v1296
    %v1998 = vunpack.c.l.b16 %v1297
    %v1999 = vunpack.c.h.b16 %v1297
    %v2000 = vunpack.c.l.b16 %v1298
    %v2001 = vunpack.c.h.b16 %v1298
    %v2002 = vunpack.c.l.b16 %v1299
    %v2003 = vunpack.c.h.b16 %v1299
    %v2004 = vunpack.c.l.b16 %v1300
    %v2005 = vunpack.c.h.b16 %v1300
    %v2006 = vunpack.c.l.b16 %v1301
    %v2007 = vunpack.c.h.b16 %v1301
    %v2008 = vunpack.c.l.b16 %v1302
    %v2009 = vunpack.c.h.b16 %v1302
    %v2010 = vunpack.c.l.b16 %v1303
    %v2011 = vunpack.c.h.b16 %v1303
    %v2012 = vunpack.c.l.b16 %v1304
    %v2013 = vunpack.c.h.b16 %v1304
    %v2014 = vunpack.c.l.b16 %v1305
    %v2015 = vunpack.c.h.b16 %v1305
    %v2016 = vunpack.c.l.b16 %v1306
    %v2017 = vunpack.c.h.b16 %v1306
    %v2018 = vunpack.c.l.b16 %v1307
    %v2019 = vunpack.c.h.b16 %v1307
    %v2020 = vunpack.c.l.b16 %v1308
    %v2021 = vunpack.c.h.b16 %v1308
    %v2022 = vunpack.c.l.b16 %v1309
    %v2023 = vunpack.c.h.b16 %v1309
    %v2024 = vunpack.c.l.b16 %v1310
    %v2025 = vunpack.c.h.b16 %v1310
    %v2026 = vunpack.c.l.b16 %v1311
    %v2027 = vunpack.c.h.b16 %v1311
    %v2028 = vunpack.c.l.b16 %v1312
    %v2029 = vunpack.c.h.b16 %v1312
    %v2030 = vunpack.c.l.b16 %v1313
    %v2031 = vunpack.c.h.b16 %v1313
    %v2032 = vunpack.c.l.b16 %v1314
    %v2033 = vunpack.c.h.b16 %v1314
    %v2034 = vunpack.c.l.b16 %v1315
    %v2035 = vunpack.c.h.b16 %v1315
    %v2036 = vunpack.c.l.b16 %v1316
    %v2037 = vunpack.c.h.b16 %v1316
    %v2038 = vunpack.c.l.b16 %v1317
    %v2039 = vunpack.c.h.b16 %v1317
    %v2040 = vunpack.c.l.b16 %v1318
    %v2041 = vunpack.c.h.b16 %v1318
    %v2042 = vunpack.c.l.b16 %v1319
    %v2043 = vunpack.c.h.b16 %v1319
    %v2044 = vunpack.c.l.b16 %v1320
    %v2045 = vunpack.c.h.b16 %v1320
    %v2046 = vunpack.c.l.b16 %v1321
    %v2047 = vunpack.c.h.b16 %v1321
    %v2048 = vunpack.c.l.b16 %v1322
    %v2049 = vunpack.c.h.b16 %v1322
    %v2050 = vunpack.c.l.b16 %v1323
    %v2051 = vunpack.c.h.b16 %v1323
    %v2052 = vunpack.c.l.b16 %v1324
    %v2053 = vunpack.c.h.b16 %v1324
    %v2054 = vunpack.c.l.b16 %v1325
    %v2055 = vunpack.c.h.b16 %v1325
    %v2056 = vunpack.c.l.b16 %v1326
    %v2057 = vunpack.c.h.b16 %v1326
    %v2058 = vunpack.c.l.b16 %v1327
    %v2059 = vunpack.c.h.b16 %v1327
    %v2060 = vunpack.c.l.b16 %v1328
    %v2061 = vunpack.c.h.b16 %v1328
    %v2062 = vunpack.c.l.b16 %v1329
    %v2063 = vunpack.c.h.b16 %v1329
    %v2064 = vunpack.c.l.b16 %v1330
    %v2065 = vunpack.c.h.b16 %v1330
    %v2066 = vunpack.c.l.b16 %v1331
    %v2067 = vunpack.c.h.b16 %v1331
    %v2068 = vunpack.c.l.b16 %v1332
    %v2069 = vunpack.c.h.b16 %v1332
    %v2070 = vunpack.c.l.b16 %v1333
    %v2071 = vunpack.c.h.b16 %v1333
    %v2072 = vunpack.c.l.b16 %v1334
    %v2073 = vunpack.c.h.b16 %v1334
    %v2074 = vunpack.c.l.b16 %v1335
    %v2075 = vunpack.c.h.b16 %v1335
    %v2076 = vunpack.c.l.b16 %v1336
    %v2077 = vunpack.c.h.b16 %v1336
    %v2078 = vunpack.c.l.b16 %v1337
    %v2079 = vunpack.c.h.b16 %v1337
    %v2080 = vunpack.c.l.b16 %v1338
    %v2081 = vunpack.c.h.b16 %v1338
    %v2082 = vunpack.c.l.b16 %v1339
    %v2083 = vunpack.c.h.b16 %v1339
    %v2084 = vunpack.c.l.b16 %v1340
    %v2085 = vunpack.c.h.b16 %v1340
    %v2086 = vunpack.c.l.b16 %v1341
    %v2087 = vunpack.c.h.b16 %v1341
    %v2088 = vunpack.c.l.b16 %v1342
    %v2089 = vunpack.c.h.b16 %v1342
    %v2090 = vunpack.c.l.b16 %v1343
    %v2091 = vunpack.c.h.b16 %v1343
    %v2092 = vunpack.c.l.b16 %v1344
    %v2093 = vunpack.c.h.b16 %v1344
    %v2094 = vunpack.c.l.b16 %v1345
    %v2095 = vunpack.c.h.b16 %v1345
    %v2096 = vunpack.c.l.b16 %v1346
    %v2097 = vunpack.c.h.b16 %v1346
    %v2098 = vunpack.c.l.b16 %v1347
    %v2099 = vunpack.c.h.b16 %v1347
    %v2100 = vunpack.c.l.b16 %v1348
    %v2101 = vunpack.c.h.b16 %v1348
    %v2102 = vunpack.c.l.b16 %v1349
    %v2103 = vunpack.c.h.b16 %v1349
    %v2104 = vunpack.c.l.b16 %v1350
    %v2105 = vunpack.c.h.b16 %v1350
    %v2106 = vunpack.c.l.b16 %v1351
    %v2107 = vunpack.c.h.b16 %v1351
    %v2108 = vunpack.c.l.b16 %v1352
    %v2109 = vunpack.c.h.b16 %v1352
    %v2110 = vunpack.c.l.b16 %v1353
    %v2111 = vunpack.c.h.b16 %v1353
    %v2112 = vunpack.c.l.b16 %v1354
    %v2113 = vunpack.c.h.b16 %v1354
    %v2114 = vunpack.c.l.b16 %v1355
    %v2115 = vunpack.c.h.b16 %v1355
    %v2116 = vunpack.c.l.b16 %v1356
    %v2117 = vunpack.c.h.b16 %v1356
    %v2118 = vunpack.c.l.b16 %v1357
    %v2119 = vunpack.c.h.b16 %v1357
    %v2120 = vunpack.c.l.b16 %v1358
    %v2121 = vunpack.c.h.b16 %v1358
    %v2122 = vunpack.c.l.b16 %v1359
    %v2123 = vunpack.c.h.b16 %v1359
    %v2124 = vunpack.c.l.b16 %v1360
    %v2125 = vunpack.c.h.b16 %v1360
    %v2126 = vunpack.c.l.b16 %v1361
    %v2127 = vunpack.c.h.b16 %v1361
    %v2128 = vunpack.c.l.b16 %v1362
    %v2129 = vunpack.c.h.b16 %v1362
    %v2130 = vunpack.c.l.b16 %v1363
    %v2131 = vunpack.c.h.b16 %v1363
    %v2132 = vunpack.c.l.b16 %v1364
    %v2133 = vunpack.c.h.b16 %v1364
    %v2134 = vunpack.c.l.b16 %v1365
    %v2135 = vunpack.c.h.b16 %v1365
    %v2136 = vunpack.c.l.b16 %v1366
    %v2137 = vunpack.c.h.b16 %v1366
    %v2138 = vunpack.c.l.b16 %v1367
    %v2139 = vunpack.c.h.b16 %v1367
    %v2140 = vunpack.c.l.b16 %v1368
    %v2141 = vunpack.c.h.b16 %v1368
    %v2142 = vunpack.c.l.b16 %v1369
    %v2143 = vunpack.c.h.b16 %v1369
    %v2144 = vunpack.c.l.b16 %v1370
    %v2145 = vunpack.c.h.b16 %v1370
    %v2146 = vunpack.c.l.b16 %v1371
    %v2147 = vunpack.c.h.b16 %v1371
    %v2148 = vunpack.c.l.b16 %v1372
    %v2149 = vunpack.c.h.b16 %v1372
    %v2150 = vunpack.c.l.b16 %v1373
    %v2151 = vunpack.c.h.b16 %v1373
    %v2152 = vunpack.c.l.b16 %v1374
    %v2153 = vunpack.c.h.b16 %v1374
    %v2154 = vunpack.c.l.b16 %v1375
    %v2155 = vunpack.c.h.b16 %v1375
    %v2156 = vunpack.c.l.b16 %v1376
    %v2157 = vunpack.c.h.b16 %v1376
    %v2158 = vunpack.c.l.b16 %v1377
    %v2159 = vunpack.c.h.b16 %v1377
    %v2160 = vunpack.c.l.b16 %v1378
    %v2161 = vunpack.c.h.b16 %v1378
    %v2162 = vunpack.c.l.b16 %v1379
    %v2163 = vunpack.c.h.b16 %v1379
    %v2164 = vunpack.c.l.b16 %v1380
    %v2165 = vunpack.c.h.b16 %v1380
    %v2166 = vunpack.c.l.b16 %v1381
    %v2167 = vunpack.c.h.b16 %v1381
    %v2168 = vunpack.c.l.b16 %v1382
    %v2169 = vunpack.c.h.b16 %v1382
    %v2170 = vunpack.c.l.b16 %v1383
    %v2171 = vunpack.c.h.b16 %v1383
    %v2172 = vunpack.c.l.b16 %v1384
    %v2173 = vunpack.c.h.b16 %v1384
    %v2174 = vunpack.c.l.b16 %v1385
    %v2175 = vunpack.c.h.b16 %v1385
    %v2176 = vunpack.c.l.b16 %v1386
    %v2177 = vunpack.c.h.b16 %v1386
    %v2178 = vunpack.c.l.b16 %v1387
    %v2179 = vunpack.c.h.b16 %v1387
    %v2180 = vunpack.c.l.b16 %v1388
    %v2181 = vunpack.c.h.b16 %v1388
    %v2182 = vunpack.c.l.b16 %v1389
    %v2183 = vunpack.c.h.b16 %v1389
    %v2184 = vunpack.c.l.b16 %v1390
    %v2185 = vunpack.c.h.b16 %v1390
    %v2186 = vunpack.c.l.b16 %v1391
    %v2187 = vunpack.c.h.b16 %v1391
    %v2188 = vunpack.c.l.b16 %v1392
    %v2189 = vunpack.c.h.b16 %v1392
    %v2190 = vunpack.c.l.b16 %v1393
    %v2191 = vunpack.c.h.b16 %v1393
    %v2192 = vunpack.c.l.b16 %v1394
    %v2193 = vunpack.c.h.b16 %v1394
    %v2194 = vunpack.c.l.b16 %v1395
    %v2195 = vunpack.c.h.b16 %v1395
    %v2196 = vunpack.c.l.b16 %v1396
    %v2197 = vunpack.c.h.b16 %v1396
    %v2198 = vunpack.c.l.b16 %v1397
    %v2199 = vunpack.c.h.b16 %v1397
    %v2200 = vunpack.c.l.b16 %v1398
    %v2201 = vunpack.c.h.b16 %v1398
    %v2202 = vunpack.c.l.b16 %v1399
    %v2203 = vunpack.c.h.b16 %v1399
    %v2204 = vunpack.c.l.b16 %v1400
    %v2205 = vunpack.c.h.b16 %v1400
    %v2206 = vunpack.c.l.b16 %v1401
    %v2207 = vunpack.c.h.b16 %v1401
    %v2208 = vunpack.c.l.b16 %v1402
    %v2209 = vunpack.c.h.b16 %v1402
    %v2210 = vunpack.c.l.b16 %v1403
    %v2211 = vunpack.c.h.b16 %v1403
    %v2212 = vunpack.c.l.b16 %v1404
    %v2213 = vunpack.c.h.b16 %v1404
    %v2214 = vunpack.c.l.b16 %v1405
    %v2215 = vunpack.c.h.b16 %v1405
    %v2216 = vunpack.c.l.b16 %v1406
    %v2217 = vunpack.c.h.b16 %v1406
    %v2218 = vunpack.c.l.b16 %v1407
    %v2219 = vunpack.c.h.b16 %v1407
    %v2220 = vunpack.c.l.b16 %v1408
    %v2221 = vunpack.c.h.b16 %v1408
    %v2222 = vpack.c.b16 %v1718, %v1710
    %v2223 = vpack.c.b16 %v1719, %v1711
    %v2224 = vpack.c.b16 %v1720, %v1712
    %v2225 = vpack.c.b16 %v1721, %v1713
    %v2226 = vpack.c.b16 %v1722, %v1714
    %v2227 = vpack.c.b16 %v1723, %v1715
    %v2228 = vpack.c.b16 %v1724, %v1716
    %v2229 = vpack.c.b16 %v1725, %v1717
    %v2230 = vpack.c.b16 %v1734, %v1726
    %v2231 = vpack.c.b16 %v1735, %v1727
    %v2232 = vpack.c.b16 %v1736, %v1728
    %v2233 = vpack.c.b16 %v1737, %v1729
    %v2234 = vpack.c.b16 %v1738, %v1730
    %v2235 = vpack.c.b16 %v1739, %v1731
    %v2236 = vpack.c.b16 %v1740, %v1732
    %v2237 = vpack.c.b16 %v1741, %v1733
    %v2238 = vpack.c.b16 %v1750, %v1742
    %v2239 = vpack.c.b16 %v1751, %v1743
    %v2240 = vpack.c.b16 %v1752, %v1744
    %v2241 = vpack.c.b16 %v1753, %v1745
    %v2242 = vpack.c.b16 %v1754, %v1746
    %v2243 = vpack.c.b16 %v1755, %v1747
    %v2244 = vpack.c.b16 %v1756, %v1748
    %v2245 = vpack.c.b16 %v1757, %v1749
    %v2246 = vpack.c.b16 %v1766, %v1758
    %v2247 = vpack.c.b16 %v1767, %v1759
    %v2248 = vpack.c.b16 %v1768, %v1760
    %v2249 = vpack.c.b16 %v1769, %v1761
    %v2250 = vpack.c.b16 %v1770, %v1762
    %v2251 = vpack.c.b16 %v1771, %v1763
    %v2252 = vpack.c.b16 %v1772, %v1764
    %v2253 = vpack.c.b16 %v1773, %v1765
    %v2254 = vpack.c.b16 %v1782, %v1774
    %v2255 = vpack.c.b16 %v1783, %v1775
    %v2256 = vpack.c.b16 %v1784, %v1776
    %v2257 = vpack.c.b16 %v1785, %v1777
    %v2258 = vpack.c.b16 %v1786, %v1778
    %v2259 = vpack.c.b16 %v1787, %v1779
    %v2260 = vpack.c.b16 %v1788, %v1780
    %v2261 = vpack.c.b16 %v1789, %v1781
    %v2262 = vpack.c.b16 %v1798, %v1790
    %v2263 = vpack.c.b16 %v1799, %v1791
    %v2264 = vpack.c.b16 %v1800, %v1792
    %v2265 = vpack.c.b16 %v1801, %v1793
    %v2266 = vpack.c.b16 %v1802, %v1794
    %v2267 = vpack.c.b16 %v1803, %v1795
    %v2268 = vpack.c.b16 %v1804, %v1796
    %v2269 = vpack.c.b16 %v1805, %v1797
    %v2270 = vpack.c.b16 %v1814, %v1806
    %v2271 = vpack.c.b16 %v1815, %v1807
    %v2272 = vpack.c.b16 %v1816, %v1808
    %v2273 = vpack.c.b16 %v1817, %v1809
    %v2274 = vpack.c.b16 %v1818, %v1810
    %v2275 = vpack.c.b16 %v1819, %v1811
    %v2276 = vpack.c.b16 %v1820, %v1812
    %v2277 = vpack.c.b16 %v1821, %v1813
    %v2278 = vpack.c.b16 %v1830, %v1822
    %v2279 = vpack.c.b16 %v1831, %v1823
    %v2280 = vpack.c.b16 %v1832, %v1824
    %v2281 = vpack.c.b16 %v1833, %v1825
    %v2282 = vpack.c.b16 %v1834, %v1826
    %v2283 = vpack.c.b16 %v1835, %v1827
    %v2284 = vpack.c.b16 %v1836, %v1828
    %v2285 = vpack.c.b16 %v1837, %v1829
    %v2286 = vpack.c.b16 %v1846, %v1838
    %v2287 = vpack.c.b16 %v1847, %v1839
    %v2288 = vpack.c.b16 %v1848, %v1840
    %v2289 = vpack.c.b16 %v1849, %v1841
    %v2290 = vpack.c.b16 %v1850, %v1842
    %v2291 = vpack.c.b16 %v1851, %v1843
    %v2292 = vpack.c.b16 %v1852, %v1844
    %v2293 = vpack.c.b16 %v1853, %v1845
    %v2294 = vpack.c.b16 %v1862, %v1854
    %v2295 = vpack.c.b16 %v1863, %v1855
    %v2296 = vpack.c.b16 %v1864, %v1856
    %v2297 = vpack.c.b16 %v1865, %v1857
    %v2298 = vpack.c.b16 %v1866, %v1858
    %v2299 = vpack.c.b16 %v1867, %v1859
    %v2300 = vpack.c.b16 %v1868, %v1860
    %v2301 = vpack.c.b16 %v1869, %v1861
    %v2302 = vpack.c.b16 %v1878, %v1870
    %v2303 = vpack.c.b16 %v1879, %v1871
    %v2304 = vpack.c.b16 %v1880, %v1872
    %v2305 = vpack.c.b16 %v1881, %v1873
    %v2306 = vpack.c.b16 %v1882, %v1874
    %v2307 = vpack.c.b16 %v1883, %v1875
    %v2308 = vpack.c.b16 %v1884, %v1876
    %v2309 = vpack.c.b16 %v1885, %v1877
    %v2310 = vpack.c.b16 %v1894, %v1886
    %v2311 = vpack.c.b16 %v1895, %v1887
    %v2312 = vpack.c.b16 %v1896, %v1888
    %v2313 = vpack.c.b16 %v1897, %v1889
    %v2314 = vpack.c.b16 %v1898, %v1890
    %v2315 = vpack.c.b16 %v1899, %v1891
    %v2316 = vpack.c.b16 %v1900, %v1892
    %v2317 = vpack.c.b16 %v1901, %v1893
    %v2318 = vpack.c.b16 %v1910, %v1902
    %v2319 = vpack.c.b16 %v1911, %v1903
    %v2320 = vpack.c.b16 %v1912, %v1904
    %v2321 = vpack.c.b16 %v1913, %v1905
    %v2322 = vpack.c.b16 %v1914, %v1906
    %v2323 = vpack.c.b16 %v1915, %v1907
    %v2324 = vpack.c.b16 %v1916, %v1908
    %v2325 = vpack.c.b16 %v1917, %v1909
    %v2326 = vpack.c.b16 %v1926, %v1918
    %v2327 = vpack.c.b16 %v1927, %v1919
    %v2328 = vpack.c.b16 %v1928, %v1920
    %v2329 = vpack.c.b16 %v1929, %v1921
    %v2330 = vpack.c.b16 %v1930, %v1922
    %v2331 = vpack.c.b16 %v1931, %v1923
    %v2332 = vpack.c.b16 %v1932, %v1924
    %v2333 = vpack.c.b16 %v1933, %v1925
    %v2334 = vpack.c.b16 %v1942, %v1934
    %v2335 = vpack.c.b16 %v1943, %v1935
    %v2336 = vpack.c.b16 %v1944, %v1936
    %v2337 = vpack.c.b16 %v1945, %v1937
    %v2338 = vpack.c.b16 %v1946, %v1938
    %v2339 = vpack.c.b16 %v1947, %v1939
    %v2340 = vpack.c.b16 %v1948, %v1940
    %v2341 = vpack.c.b16 %v1949, %v1941
    %v2342 = vpack.c.b16 %v1958, %v1950
    %v2343 = vpack.c.b16 %v1959, %v1951
    %v2344 = vpack.c.b16 %v1960, %v1952
    %v2345 = vpack.c.b16 %v1961, %v1953
    %v2346 = vpack.c.b16 %v1962, %v1954
    %v2347 = vpack.c.b16 %v1963, %v1955
    %v2348 = vpack.c.b16 %v1964, %v1956
    %v2349 = vpack.c.b16 %v1965, %v1957
    %v2350 = vpack.c.b16 %v1974, %v1966
    %v2351 = vpack.c.b16 %v1975, %v1967
    %v2352 = vpack.c.b16 %v1976, %v1968
    %v2353 = vpack.c.b16 %v1977, %v1969
    %v2354 = vpack.c.b16 %v1978, %v1970
    %v2355 = vpack.c.b16 %v1979, %v1971
    %v2356 = vpack.c.b16 %v1980, %v1972
    %v2357 = vpack.c.b16 %v1981, %v1973
    %v2358 = vpack.c.b16 %v1990, %v1982
    %v2359 = vpack.c.b16 %v1991, %v1983
    %v2360 = vpack.c.b16 %v1992, %v1984
    %v2361 = vpack.c.b16 %v1993, %v1985
    %v2362 = vpack.c.b16 %v1994, %v1986
    %v2363 = vpack.c.b16 %v1995, %v1987
    %v2364 = vpack.c.b16 %v1996, %v1988
    %v2365 = vpack.c.b16 %v1997, %v1989
    %v2366 = vpack.c.b16 %v2006, %v1998
    %v2367 = vpack.c.b16 %v2007, %v1999
    %v2368 = vpack.c.b16 %v2008, %v2000
    %v2369 = vpack.c.b16 %v2009, %v2001
    %v2370 = vpack.c.b16 %v2010, %v2002
    %v2371 = vpack.c.b16 %v2011, %v2003
    %v2372 = vpack.c.b16 %v2012, %v2004
    %v2373 = vpack.c.b16 %v2013, %v2005
    %v2374 = vpack.c.b16 %v2022, %v2014
    %v2375 = vpack.c.b16 %v2023, %v2015
    %v2376 = vpack.c.b16 %v2024, %v2016
    %v2377 = vpack.c.b16 %v2025, %v2017
    %v2378 = vpack.c.b16 %v2026, %v2018
    %v2379 = vpack.c.b16 %v2027, %v2019
    %v2380 = vpack.c.b16 %v2028, %v2020
    %v2381 = vpack.c.b16 %v2029, %v2021
    %v2382 = vpack.c.b16 %v2038, %v2030
    %v2383 = vpack.c.b16 %v2039, %v2031
    %v2384 = vpack.c.b16 %v2040, %v2032
    %v2385 = vpack.c.b16 %v2041, %v2033
    %v2386 = vpack.c.b16 %v2042, %v2034
    %v2387 = vpack.c.b16 %v2043, %v2035
    %v2388 = vpack.c.b16 %v2044, %v2036
    %v2389 = vpack.c.b16 %v2045, %v2037
    %v2390 = vpack.c.b16 %v2054, %v2046
    %v2391 = vpack.c.b16 %v2055, %v2047
    %v2392 = vpack.c.b16 %v2056, %v2048
    %v2393 = vpack.c.b16 %v2057, %v2049
    %v2394 = vpack.c.b16 %v2058, %v2050
    %v2395 = vpack.c.b16 %v2059, %v2051
    %v2396 = vpack.c.b16 %v2060, %v2052
    %v2397 = vpack.c.b16 %v2061, %v2053
    %v2398 = vpack.c.b16 %v2070, %v2062
    %v2399 = vpack.c.b16 %v2071, %v2063
    %v2400 = vpack.c.b16 %v2072, %v2064
    %v2401 = vpack.c.b16 %v2073, %v2065
    %v2402 = vpack.c.b16 %v2074, %v2066
    %v2403 = vpack.c.b16 %v2075, %v2067
    %v2404 = vpack.c.b16 %v2076, %v2068
    %v2405 = vpack.c.b16 %v2077, %v2069
    %v2406 = vpack.c.b16 %v2086, %v2078
    %v2407 = vpack.c.b16 %v2087, %v2079
    %v2408 = vpack.c.b16 %v2088, %v2080
    %v2409 = vpack.c.b16 %v2089, %v2081
    %v2410 = vpack.c.b16 %v2090, %v2082
    %v2411 = vpack.c.b16 %v2091, %v2083
    %v2412 = vpack.c.b16 %v2092, %v2084
    %v2413 = vpack.c.b16 %v2093, %v2085
    %v2414 = vpack.c.b16 %v2102, %v2094
    %v2415 = vpack.c.b16 %v2103, %v2095
    %v2416 = vpack.c.b16 %v2104, %v2096
    %v2417 = vpack.c.b16 %v2105, %v2097
    %v2418 = vpack.c.b16 %v2106, %v2098
    %v2419 = vpack.c.b16 %v2107, %v2099
    %v2420 = vpack.c.b16 %v2108, %v2100
    %v2421 = vpack.c.b16 %v2109, %v2101
    %v2422 = vpack.c.b16 %v2118, %v2110
    %v2423 = vpack.c.b16 %v2119, %v2111
    %v2424 = vpack.c.b16 %v2120, %v2112
    %v2425 = vpack.c.b16 %v2121, %v2113
    %v2426 = vpack.c.b16 %v2122, %v2114
    %v2427 = vpack.c.b16 %v2123, %v2115
    %v2428 = vpack.c.b16 %v2124, %v2116
    %v2429 = vpack.c.b16 %v2125, %v2117
    %v2430 = vpack.c.b16 %v2134, %v2126
    %v2431 = vpack.c.b16 %v2135, %v2127
    %v2432 = vpack.c.b16 %v2136, %v2128
    %v2433 = vpack.c.b16 %v2137, %v2129
    %v2434 = vpack.c.b16 %v2138, %v2130
    %v2435 = vpack.c.b16 %v2139, %v2131
    %v2436 = vpack.c.b16 %v2140, %v2132
    %v2437 = vpack.c.b16 %v2141, %v2133
    %v2438 = vpack.c.b16 %v2150, %v2142
    %v2439 = vpack.c.b16 %v2151, %v2143
    %v2440 = vpack.c.b16 %v2152, %v2144
    %v2441 = vpack.c.b16 %v2153, %v2145
    %v2442 = vpack.c.b16 %v2154, %v2146
    %v2443 = vpack.c.b16 %v2155, %v2147
    %v2444 = vpack.c.b16 %v2156, %v2148
    %v2445 = vpack.c.b16 %v2157, %v2149
    %v2446 = vpack.c.b16 %v2166, %v2158
    %v2447 = vpack.c.b16 %v2167, %v2159
    %v2448 = vpack.c.b16 %v2168, %v2160
    %v2449 = vpack.c.b16 %v2169, %v2161
    %v2450 = vpack.c.b16 %v2170, %v2162
    %v2451 = vpack.c.b16 %v2171, %v2163
    %v2452 = vpack.c.b16 %v2172, %v2164
    %v2453 = vpack.c.b16 %v2173, %v2165
    %v2454 = vpack.c.b16 %v2182, %v2174
    %v2455 = vpack.c.b16 %v2183, %v2175
    %v2456 = vpack.c.b16 %v2184, %v2176
    %v2457 = vpack.c.b16 %v2185, %v2177
    %v2458 = vpack.c.b16 %v2186, %v2178
    %v2459 = vpack.c.b16 %v2187, %v2179
    %v2460 = vpack.c.b16 %v2188, %v2180
    %v2461 = vpack.c.b16 %v2189, %v2181
    %v2462 = vpack.c.b16 %v2198, %v2190
    %v2463 = vpack.c.b16 %v2199, %v2191
    %v2464 = vpack.c.b16 %v2200, %v2192
    %v2465 = vpack.c.b16 %v2201, %v2193
    %v2466 = vpack.c.b16 %v2202, %v2194
    %v2467 = vpack.c.b16 %v2203, %v2195
    %v2468 = vpack.c.b16 %v2204, %v2196
    %v2469 = vpack.c.b16 %v2205, %v2197
    %v2470 = vpack.c.b16 %v2214, %v2206
    %v2471 = vpack.c.b16 %v2215, %v2207
    %v2472 = vpack.c.b16 %v2216, %v2208
    %v2473 = vpack.c.b16 %v2217, %v2209
    %v2474 = vpack.c.b16 %v2218, %v2210
    %v2475 = vpack.c.b16 %v2219, %v2211
    %v2476 = vpack.c.b16 %v2220, %v2212
    %v2477 = vpack.c.b16 %v2221, %v2213
    %2734 = vmatprep.subr.bf16.mxu0 %v2279
    %2735 = vmatpush1.bf16.msra.mxu0 %v2278
    %2736 = vmatprep.subr.bf16.mxu0 %v2271
    %2737 = vmatpush1.bf16.msra.mxu0 %v2270
    %2738 = vmatprep.subr.bf16.mxu0 %v2263
    %2739 = vmatpush1.bf16.msra.mxu0 %v2262
    %2740 = vmatprep.subr.bf16.mxu0 %v2255
    %2741 = vmatpush1.bf16.msra.mxu0 %v2254
    %2742 = vmatprep.subr.bf16.mxu0 %v2247
    %2743 = vmatpush1.bf16.msra.mxu0 %v2246
    %2744 = vmatprep.subr.bf16.mxu0 %v2239
    %2745 = vmatpush1.bf16.msra.mxu0 %v2238
    %2746 = vmatprep.subr.bf16.mxu0 %v2231
    %2747 = vmatpush1.bf16.msra.mxu0 %v2230
    %2748 = vmatprep.subr.bf16.mxu0 %v2223
    %2749 = vmatpush1.bf16.msra.mxu0 %v2222
    %2750 = vmatprep.subr.bf16.mxu0 %v2343
    %2751 = vmatpush2.bf16.msra.mxu0 %v2342
    %2752 = vmatprep.subr.bf16.mxu0 %v2335
    %2753 = vmatpush2.bf16.msra.mxu0 %v2334
    %2754 = vmatprep.subr.bf16.mxu0 %v2327
    %2755 = vmatpush2.bf16.msra.mxu0 %v2326
    %2756 = vmatprep.subr.bf16.mxu0 %v2319
    %2757 = vmatpush2.bf16.msra.mxu0 %v2318
    %2758 = vmatprep.subr.bf16.mxu0 %v2311
    %2759 = vmatpush2.bf16.msra.mxu0 %v2310
    %2760 = vmatprep.subr.bf16.mxu0 %v2303
    %2761 = vmatpush2.bf16.msra.mxu0 %v2302
    %2762 = vmatprep.subr.bf16.mxu0 %v2295
    %2763 = vmatpush2.bf16.msra.mxu0 %v2294
    %2764 = vmatprep.subr.bf16.mxu0 %v2287
    %2765 = vmatpush2.bf16.msra.mxu0 %v2286
    %2766 = vmatprep.mubr.bf16.mxu0 %v1150
    %2767 = vmatmul.mubr.bf16.gmra.mxu0 %v1149
    %v2768 = vpop.f32.mrf.mxu0
    %v2769 = vadd.f32 %v1417, %v2768
    %v2770 = vpop.f32.mrf.mxu0
    %v2771 = vadd.f32 %v1421, %v2770
    %v2772 = vpop.f32.mrf.mxu0
    %v2773 = vpop.f32.mrf.mxu0
    %2774 = vdwg.mxu0
    %2775 = vmatprep.subr.bf16.mxu0 %v2407
    %2776 = vmatpush1.bf16.msra.mxu0 %v2406
    %2777 = vmatprep.subr.bf16.mxu0 %v2399
    %2778 = vmatpush1.bf16.msra.mxu0 %v2398
    %2779 = vmatprep.subr.bf16.mxu0 %v2391
    %2780 = vmatpush1.bf16.msra.mxu0 %v2390
    %2781 = vmatprep.subr.bf16.mxu0 %v2383
    %2782 = vmatpush1.bf16.msra.mxu0 %v2382
    %2783 = vmatprep.subr.bf16.mxu0 %v2375
    %2784 = vmatpush1.bf16.msra.mxu0 %v2374
    %2785 = vmatprep.subr.bf16.mxu0 %v2367
    %2786 = vmatpush1.bf16.msra.mxu0 %v2366
    %2787 = vmatprep.subr.bf16.mxu0 %v2359
    %2788 = vmatpush1.bf16.msra.mxu0 %v2358
    %2789 = vmatprep.subr.bf16.mxu0 %v2351
    %2790 = vmatpush1.bf16.msra.mxu0 %v2350
    %2791 = vmatprep.subr.bf16.mxu0 %v2471
    %2792 = vmatpush2.bf16.msra.mxu0 %v2470
    %2793 = vmatprep.subr.bf16.mxu0 %v2463
    %2794 = vmatpush2.bf16.msra.mxu0 %v2462
    %2795 = vmatprep.subr.bf16.mxu0 %v2455
    %2796 = vmatpush2.bf16.msra.mxu0 %v2454
    %2797 = vmatprep.subr.bf16.mxu0 %v2447
    %2798 = vmatpush2.bf16.msra.mxu0 %v2446
    %2799 = vmatprep.subr.bf16.mxu0 %v2439
    %2800 = vmatpush2.bf16.msra.mxu0 %v2438
    %2801 = vmatprep.subr.bf16.mxu0 %v2431
    %2802 = vmatpush2.bf16.msra.mxu0 %v2430
    %2803 = vmatprep.subr.bf16.mxu0 %v2423
    %2804 = vmatpush2.bf16.msra.mxu0 %v2422
    %2805 = vmatprep.subr.bf16.mxu0 %v2415
    %2806 = vmatpush2.bf16.msra.mxu0 %v2414
    %2807 = vmatprep.mubr.bf16.mxu0 %v1152
    %2808 = vmatmul.mubr.bf16.gmra.mxu0 %v1151
    %v2809 = vpop.f32.mrf.mxu0
    %v2810 = vadd.f32 %v2769, %v2809
    %v2811 = vpop.f32.mrf.mxu0
    %v2812 = vadd.f32 %v2771, %v2811
    %v2813 = vpop.f32.mrf.mxu0
    %v2814 = vpop.f32.mrf.mxu0
    %2815 = vdwg.mxu0
    %2816 = vmatprep.subr.bf16.mxu0 %v2281
    %2817 = vmatpush1.bf16.msra.mxu0 %v2280
    %2818 = vmatprep.subr.bf16.mxu0 %v2273
    %2819 = vmatpush1.bf16.msra.mxu0 %v2272
    %2820 = vmatprep.subr.bf16.mxu0 %v2265
    %2821 = vmatpush1.bf16.msra.mxu0 %v2264
    %2822 = vmatprep.subr.bf16.mxu0 %v2257
    %2823 = vmatpush1.bf16.msra.mxu0 %v2256
    %2824 = vmatprep.subr.bf16.mxu0 %v2249
    %2825 = vmatpush1.bf16.msra.mxu0 %v2248
    %2826 = vmatprep.subr.bf16.mxu0 %v2241
    %2827 = vmatpush1.bf16.msra.mxu0 %v2240
    %2828 = vmatprep.subr.bf16.mxu0 %v2233
    %2829 = vmatpush1.bf16.msra.mxu0 %v2232
    %2830 = vmatprep.subr.bf16.mxu0 %v2225
    %2831 = vmatpush1.bf16.msra.mxu0 %v2224
    %2832 = vmatprep.subr.bf16.mxu0 %v2345
    %2833 = vmatpush2.bf16.msra.mxu0 %v2344
    %2834 = vmatprep.subr.bf16.mxu0 %v2337
    %2835 = vmatpush2.bf16.msra.mxu0 %v2336
    %2836 = vmatprep.subr.bf16.mxu0 %v2329
    %2837 = vmatpush2.bf16.msra.mxu0 %v2328
    %2838 = vmatprep.subr.bf16.mxu0 %v2321
    %2839 = vmatpush2.bf16.msra.mxu0 %v2320
    %2840 = vmatprep.subr.bf16.mxu0 %v2313
    %2841 = vmatpush2.bf16.msra.mxu0 %v2312
    %2842 = vmatprep.subr.bf16.mxu0 %v2305
    %2843 = vmatpush2.bf16.msra.mxu0 %v2304
    %2844 = vmatprep.subr.bf16.mxu0 %v2297
    %2845 = vmatpush2.bf16.msra.mxu0 %v2296
    %2846 = vmatprep.subr.bf16.mxu0 %v2289
    %2847 = vmatpush2.bf16.msra.mxu0 %v2288
    %2848 = vmatprep.mubr.bf16.mxu0 %v1150
    %2849 = vmatmul.mubr.bf16.gmra.mxu0 %v1149
    %v2850 = vpop.f32.mrf.mxu0
    %v2851 = vadd.f32 %v1425, %v2850
    %v2852 = vpop.f32.mrf.mxu0
    %v2853 = vadd.f32 %v1429, %v2852
    %v2854 = vpop.f32.mrf.mxu0
    %v2855 = vpop.f32.mrf.mxu0
    %2856 = vdwg.mxu0
    %2857 = vmatprep.subr.bf16.mxu0 %v2409
    %2858 = vmatpush1.bf16.msra.mxu0 %v2408
    %2859 = vmatprep.subr.bf16.mxu0 %v2401
    %2860 = vmatpush1.bf16.msra.mxu0 %v2400
    %2861 = vmatprep.subr.bf16.mxu0 %v2393
    %2862 = vmatpush1.bf16.msra.mxu0 %v2392
    %2863 = vmatprep.subr.bf16.mxu0 %v2385
    %2864 = vmatpush1.bf16.msra.mxu0 %v2384
    %2865 = vmatprep.subr.bf16.mxu0 %v2377
    %2866 = vmatpush1.bf16.msra.mxu0 %v2376
    %2867 = vmatprep.subr.bf16.mxu0 %v2369
    %2868 = vmatpush1.bf16.msra.mxu0 %v2368
    %2869 = vmatprep.subr.bf16.mxu0 %v2361
    %2870 = vmatpush1.bf16.msra.mxu0 %v2360
    %2871 = vmatprep.subr.bf16.mxu0 %v2353
    %2872 = vmatpush1.bf16.msra.mxu0 %v2352
    %2873 = vmatprep.subr.bf16.mxu0 %v2473
    %2874 = vmatpush2.bf16.msra.mxu0 %v2472
    %2875 = vmatprep.subr.bf16.mxu0 %v2465
    %2876 = vmatpush2.bf16.msra.mxu0 %v2464
    %2877 = vmatprep.subr.bf16.mxu0 %v2457
    %2878 = vmatpush2.bf16.msra.mxu0 %v2456
    %2879 = vmatprep.subr.bf16.mxu0 %v2449
    %2880 = vmatpush2.bf16.msra.mxu0 %v2448
    %2881 = vmatprep.subr.bf16.mxu0 %v2441
    %2882 = vmatpush2.bf16.msra.mxu0 %v2440
    %2883 = vmatprep.subr.bf16.mxu0 %v2433
    %2884 = vmatpush2.bf16.msra.mxu0 %v2432
    %2885 = vmatprep.subr.bf16.mxu0 %v2425
    %2886 = vmatpush2.bf16.msra.mxu0 %v2424
    %2887 = vmatprep.subr.bf16.mxu0 %v2417
    %2888 = vmatpush2.bf16.msra.mxu0 %v2416
    %2889 = vmatprep.mubr.bf16.mxu0 %v1152
    %2890 = vmatmul.mubr.bf16.gmra.mxu0 %v1151
    %v2891 = vpop.f32.mrf.mxu0
    %v2892 = vadd.f32 %v2851, %v2891
    %v2893 = vpop.f32.mrf.mxu0
    %v2894 = vadd.f32 %v2853, %v2893
    %v2895 = vpop.f32.mrf.mxu0
    %v2896 = vpop.f32.mrf.mxu0
    %2897 = vdwg.mxu0
    %2898 = vmatprep.subr.bf16.mxu0 %v2283
    %2899 = vmatpush1.bf16.msra.mxu0 %v2282
    %2900 = vmatprep.subr.bf16.mxu0 %v2275
    %2901 = vmatpush1.bf16.msra.mxu0 %v2274
    %2902 = vmatprep.subr.bf16.mxu0 %v2267
    %2903 = vmatpush1.bf16.msra.mxu0 %v2266
    %2904 = vmatprep.subr.bf16.mxu0 %v2259
    %2905 = vmatpush1.bf16.msra.mxu0 %v2258
    %2906 = vmatprep.subr.bf16.mxu0 %v2251
    %2907 = vmatpush1.bf16.msra.mxu0 %v2250
    %2908 = vmatprep.subr.bf16.mxu0 %v2243
    %2909 = vmatpush1.bf16.msra.mxu0 %v2242
    %2910 = vmatprep.subr.bf16.mxu0 %v2235
    %2911 = vmatpush1.bf16.msra.mxu0 %v2234
    %2912 = vmatprep.subr.bf16.mxu0 %v2227
    %2913 = vmatpush1.bf16.msra.mxu0 %v2226
    %2914 = vmatprep.subr.bf16.mxu0 %v2347
    %2915 = vmatpush2.bf16.msra.mxu0 %v2346
    %2916 = vmatprep.subr.bf16.mxu0 %v2339
    %2917 = vmatpush2.bf16.msra.mxu0 %v2338
    %2918 = vmatprep.subr.bf16.mxu0 %v2331
    %2919 = vmatpush2.bf16.msra.mxu0 %v2330
    %2920 = vmatprep.subr.bf16.mxu0 %v2323
    %2921 = vmatpush2.bf16.msra.mxu0 %v2322
    %2922 = vmatprep.subr.bf16.mxu0 %v2315
    %2923 = vmatpush2.bf16.msra.mxu0 %v2314
    %2924 = vmatprep.subr.bf16.mxu0 %v2307
    %2925 = vmatpush2.bf16.msra.mxu0 %v2306
    %2926 = vmatprep.subr.bf16.mxu0 %v2299
    %2927 = vmatpush2.bf16.msra.mxu0 %v2298
    %2928 = vmatprep.subr.bf16.mxu0 %v2291
    %2929 = vmatpush2.bf16.msra.mxu0 %v2290
    %2930 = vmatprep.mubr.bf16.mxu0 %v1150
    %2931 = vmatmul.mubr.bf16.gmra.mxu0 %v1149
    %v2932 = vpop.f32.mrf.mxu0
    %v2933 = vadd.f32 %v1433, %v2932
    %v2934 = vpop.f32.mrf.mxu0
    %v2935 = vadd.f32 %v1437, %v2934
    %v2936 = vpop.f32.mrf.mxu0
    %v2937 = vpop.f32.mrf.mxu0
    %2938 = vdwg.mxu0
    %2939 = vmatprep.subr.bf16.mxu0 %v2411
    %2940 = vmatpush1.bf16.msra.mxu0 %v2410
    %2941 = vmatprep.subr.bf16.mxu0 %v2403
    %2942 = vmatpush1.bf16.msra.mxu0 %v2402
    %2943 = vmatprep.subr.bf16.mxu0 %v2395
    %2944 = vmatpush1.bf16.msra.mxu0 %v2394
    %2945 = vmatprep.subr.bf16.mxu0 %v2387
    %2946 = vmatpush1.bf16.msra.mxu0 %v2386
    %2947 = vmatprep.subr.bf16.mxu0 %v2379
    %2948 = vmatpush1.bf16.msra.mxu0 %v2378
    %2949 = vmatprep.subr.bf16.mxu0 %v2371
    %2950 = vmatpush1.bf16.msra.mxu0 %v2370
    %2951 = vmatprep.subr.bf16.mxu0 %v2363
    %2952 = vmatpush1.bf16.msra.mxu0 %v2362
    %2953 = vmatprep.subr.bf16.mxu0 %v2355
    %2954 = vmatpush1.bf16.msra.mxu0 %v2354
    %2955 = vmatprep.subr.bf16.mxu0 %v2475
    %2956 = vmatpush2.bf16.msra.mxu0 %v2474
    %2957 = vmatprep.subr.bf16.mxu0 %v2467
    %2958 = vmatpush2.bf16.msra.mxu0 %v2466
    %2959 = vmatprep.subr.bf16.mxu0 %v2459
    %2960 = vmatpush2.bf16.msra.mxu0 %v2458
    %2961 = vmatprep.subr.bf16.mxu0 %v2451
    %2962 = vmatpush2.bf16.msra.mxu0 %v2450
    %2963 = vmatprep.subr.bf16.mxu0 %v2443
    %2964 = vmatpush2.bf16.msra.mxu0 %v2442
    %2965 = vmatprep.subr.bf16.mxu0 %v2435
    %2966 = vmatpush2.bf16.msra.mxu0 %v2434
    %2967 = vmatprep.subr.bf16.mxu0 %v2427
    %2968 = vmatpush2.bf16.msra.mxu0 %v2426
    %2969 = vmatprep.subr.bf16.mxu0 %v2419
    %2970 = vmatpush2.bf16.msra.mxu0 %v2418
    %2971 = vmatprep.mubr.bf16.mxu0 %v1152
    %2972 = vmatmul.mubr.bf16.gmra.mxu0 %v1151
    %v2973 = vpop.f32.mrf.mxu0
    %v2974 = vadd.f32 %v2933, %v2973
    %v2975 = vpop.f32.mrf.mxu0
    %v2976 = vadd.f32 %v2935, %v2975
    %v2977 = vpop.f32.mrf.mxu0
    %v2978 = vpop.f32.mrf.mxu0
    %2979 = vdwg.mxu0
    %2980 = vmatprep.subr.bf16.mxu0 %v2285
    %2981 = vmatpush1.bf16.msra.mxu0 %v2284
    %2982 = vmatprep.subr.bf16.mxu0 %v2277
    %2983 = vmatpush1.bf16.msra.mxu0 %v2276
    %2984 = vmatprep.subr.bf16.mxu0 %v2269
    %2985 = vmatpush1.bf16.msra.mxu0 %v2268
    %2986 = vmatprep.subr.bf16.mxu0 %v2261
    %2987 = vmatpush1.bf16.msra.mxu0 %v2260
    %2988 = vmatprep.subr.bf16.mxu0 %v2253
    %2989 = vmatpush1.bf16.msra.mxu0 %v2252
    %2990 = vmatprep.subr.bf16.mxu0 %v2245
    %2991 = vmatpush1.bf16.msra.mxu0 %v2244
    %2992 = vmatprep.subr.bf16.mxu0 %v2237
    %2993 = vmatpush1.bf16.msra.mxu0 %v2236
    %2994 = vmatprep.subr.bf16.mxu0 %v2229
    %2995 = vmatpush1.bf16.msra.mxu0 %v2228
    %2996 = vmatprep.subr.bf16.mxu0 %v2349
    %2997 = vmatpush2.bf16.msra.mxu0 %v2348
    %2998 = vmatprep.subr.bf16.mxu0 %v2341
    %2999 = vmatpush2.bf16.msra.mxu0 %v2340
    %3000 = vmatprep.subr.bf16.mxu0 %v2333
    %3001 = vmatpush2.bf16.msra.mxu0 %v2332
    %3002 = vmatprep.subr.bf16.mxu0 %v2325
    %3003 = vmatpush2.bf16.msra.mxu0 %v2324
    %3004 = vmatprep.subr.bf16.mxu0 %v2317
    %3005 = vmatpush2.bf16.msra.mxu0 %v2316
    %3006 = vmatprep.subr.bf16.mxu0 %v2309
    %3007 = vmatpush2.bf16.msra.mxu0 %v2308
    %3008 = vmatprep.subr.bf16.mxu0 %v2301
    %3009 = vmatpush2.bf16.msra.mxu0 %v2300
    %3010 = vmatprep.subr.bf16.mxu0 %v2293
    %3011 = vmatpush2.bf16.msra.mxu0 %v2292
    %3012 = vmatprep.mubr.bf16.mxu0 %v1150
    %3013 = vmatmul.mubr.bf16.gmra.mxu0 %v1149
    %v3014 = vpop.f32.mrf.mxu0
    %v3015 = vadd.f32 %v1441, %v3014
    %v3016 = vpop.f32.mrf.mxu0
    %v3017 = vadd.f32 %v1445, %v3016
    %v3018 = vpop.f32.mrf.mxu0
    %v3019 = vpop.f32.mrf.mxu0
    %3020 = vdwg.mxu0
    %3021 = vmatprep.subr.bf16.mxu0 %v2413
    %3022 = vmatpush1.bf16.msra.mxu0 %v2412
    %3023 = vmatprep.subr.bf16.mxu0 %v2405
    %3024 = vmatpush1.bf16.msra.mxu0 %v2404
    %3025 = vmatprep.subr.bf16.mxu0 %v2397
    %3026 = vmatpush1.bf16.msra.mxu0 %v2396
    %3027 = vmatprep.subr.bf16.mxu0 %v2389
    %3028 = vmatpush1.bf16.msra.mxu0 %v2388
    %3029 = vmatprep.subr.bf16.mxu0 %v2381
    %3030 = vmatpush1.bf16.msra.mxu0 %v2380
    %3031 = vmatprep.subr.bf16.mxu0 %v2373
    %3032 = vmatpush1.bf16.msra.mxu0 %v2372
    %3033 = vmatprep.subr.bf16.mxu0 %v2365
    %3034 = vmatpush1.bf16.msra.mxu0 %v2364
    %3035 = vmatprep.subr.bf16.mxu0 %v2357
    %3036 = vmatpush1.bf16.msra.mxu0 %v2356
    %3037 = vmatprep.subr.bf16.mxu0 %v2477
    %3038 = vmatpush2.bf16.msra.mxu0 %v2476
    %3039 = vmatprep.subr.bf16.mxu0 %v2469
    %3040 = vmatpush2.bf16.msra.mxu0 %v2468
    %3041 = vmatprep.subr.bf16.mxu0 %v2461
    %3042 = vmatpush2.bf16.msra.mxu0 %v2460
    %3043 = vmatprep.subr.bf16.mxu0 %v2453
    %3044 = vmatpush2.bf16.msra.mxu0 %v2452
    %3045 = vmatprep.subr.bf16.mxu0 %v2445
    %3046 = vmatpush2.bf16.msra.mxu0 %v2444
    %3047 = vmatprep.subr.bf16.mxu0 %v2437
    %3048 = vmatpush2.bf16.msra.mxu0 %v2436
    %3049 = vmatprep.subr.bf16.mxu0 %v2429
    %3050 = vmatpush2.bf16.msra.mxu0 %v2428
    %3051 = vmatprep.subr.bf16.mxu0 %v2421
    %3052 = vmatpush2.bf16.msra.mxu0 %v2420
    %3053 = vmatprep.mubr.bf16.mxu0 %v1152
    %3054 = vmatmul.mubr.bf16.gmra.mxu0 %v1151
    %v3055 = vpop.f32.mrf.mxu0
    %v3056 = vadd.f32 %v3015, %v3055
    %v3057 = vpop.f32.mrf.mxu0
    %v3058 = vadd.f32 %v3017, %v3057
    %v3059 = vpop.f32.mrf.mxu0
    %v3060 = vpop.f32.mrf.mxu0
    %3061 = vdwg.mxu0
    %v3062 = vrot.slane %v2810, 4
    %v3063 = vadd.f32 %v2810, %v3062
    %v3064 = vrot.slane %v3063, 2
    %v3065 = vadd.f32 %v3063, %v3064
    %v3066 = vrot.slane %v3065, 1
    %v3067 = vadd.f32 %v3065, %v3066
    %v3068 = vrot.slane %v2812, 4
    %v3069 = vadd.f32 %v2812, %v3068
    %v3070 = vrot.slane %v3069, 2
    %v3071 = vadd.f32 %v3069, %v3070
    %v3072 = vrot.slane %v3071, 1
    %v3073 = vadd.f32 %v3071, %v3072
    %v3074 = vrot.slane %v2892, 4
    %v3075 = vadd.f32 %v2892, %v3074
    %v3076 = vrot.slane %v3075, 2
    %v3077 = vadd.f32 %v3075, %v3076
    %v3078 = vrot.slane %v3077, 1
    %v3079 = vadd.f32 %v3077, %v3078
    %v3080 = vrot.slane %v2894, 4
    %v3081 = vadd.f32 %v2894, %v3080
    %v3082 = vrot.slane %v3081, 2
    %v3083 = vadd.f32 %v3081, %v3082
    %v3084 = vrot.slane %v3083, 1
    %v3085 = vadd.f32 %v3083, %v3084
    %v3086 = vrot.slane %v2974, 4
    %v3087 = vadd.f32 %v2974, %v3086
    %v3088 = vrot.slane %v3087, 2
    %v3089 = vadd.f32 %v3087, %v3088
    %v3090 = vrot.slane %v3089, 1
    %v3091 = vadd.f32 %v3089, %v3090
    %v3092 = vrot.slane %v2976, 4
    %v3093 = vadd.f32 %v2976, %v3092
    %v3094 = vrot.slane %v3093, 2
    %v3095 = vadd.f32 %v3093, %v3094
    %v3096 = vrot.slane %v3095, 1
    %v3097 = vadd.f32 %v3095, %v3096
    %v3098 = vrot.slane %v3056, 4
    %v3099 = vadd.f32 %v3056, %v3098
    %v3100 = vrot.slane %v3099, 2
    %v3101 = vadd.f32 %v3099, %v3100
    %v3102 = vrot.slane %v3101, 1
    %v3103 = vadd.f32 %v3101, %v3102
    %v3104 = vrot.slane %v3058, 4
    %v3105 = vadd.f32 %v3058, %v3104
    %v3106 = vrot.slane %v3105, 2
    %v3107 = vadd.f32 %v3105, %v3106
    %v3108 = vrot.slane %v3107, 1
    %v3109 = vadd.f32 %v3107, %v3108
    %v3110 = vmul.f32 %v3067, %v349
    %v3111 = vmul.f32 %v3073, %v349
    %v3112 = vmul.f32 %v3079, %v349
    %v3113 = vmul.f32 %v3085, %v349
    %v3114 = vmul.f32 %v3091, %v349
    %v3115 = vmul.f32 %v3097, %v349
    %v3116 = vmul.f32 %v3103, %v349
    %v3117 = vmul.f32 %v3109, %v349
    %v3118 = vmul.f32 %v2810, %v2810
    %v3119 = vmul.f32 %v2812, %v2812
    %v3120 = vmul.f32 %v2892, %v2892
    %v3121 = vmul.f32 %v2894, %v2894
    %v3122 = vmul.f32 %v2974, %v2974
    %v3123 = vmul.f32 %v2976, %v2976
    %v3124 = vmul.f32 %v3056, %v3056
    %v3125 = vmul.f32 %v3058, %v3058
    %v3126 = vrot.slane %v3118, 4
    %v3127 = vadd.f32 %v3118, %v3126
    %v3128 = vrot.slane %v3127, 2
    %v3129 = vadd.f32 %v3127, %v3128
    %v3130 = vrot.slane %v3129, 1
    %v3131 = vadd.f32 %v3129, %v3130
    %v3132 = vrot.slane %v3119, 4
    %v3133 = vadd.f32 %v3119, %v3132
    %v3134 = vrot.slane %v3133, 2
    %v3135 = vadd.f32 %v3133, %v3134
    %v3136 = vrot.slane %v3135, 1
    %v3137 = vadd.f32 %v3135, %v3136
    %v3138 = vrot.slane %v3120, 4
    %v3139 = vadd.f32 %v3120, %v3138
    %v3140 = vrot.slane %v3139, 2
    %v3141 = vadd.f32 %v3139, %v3140
    %v3142 = vrot.slane %v3141, 1
    %v3143 = vadd.f32 %v3141, %v3142
    %v3144 = vrot.slane %v3121, 4
    %v3145 = vadd.f32 %v3121, %v3144
    %v3146 = vrot.slane %v3145, 2
    %v3147 = vadd.f32 %v3145, %v3146
    %v3148 = vrot.slane %v3147, 1
    %v3149 = vadd.f32 %v3147, %v3148
    %v3150 = vrot.slane %v3122, 4
    %v3151 = vadd.f32 %v3122, %v3150
    %v3152 = vrot.slane %v3151, 2
    %v3153 = vadd.f32 %v3151, %v3152
    %v3154 = vrot.slane %v3153, 1
    %v3155 = vadd.f32 %v3153, %v3154
    %v3156 = vrot.slane %v3123, 4
    %v3157 = vadd.f32 %v3123, %v3156
    %v3158 = vrot.slane %v3157, 2
    %v3159 = vadd.f32 %v3157, %v3158
    %v3160 = vrot.slane %v3159, 1
    %v3161 = vadd.f32 %v3159, %v3160
    %v3162 = vrot.slane %v3124, 4
    %v3163 = vadd.f32 %v3124, %v3162
    %v3164 = vrot.slane %v3163, 2
    %v3165 = vadd.f32 %v3163, %v3164
    %v3166 = vrot.slane %v3165, 1
    %v3167 = vadd.f32 %v3165, %v3166
    %v3168 = vrot.slane %v3125, 4
    %v3169 = vadd.f32 %v3125, %v3168
    %v3170 = vrot.slane %v3169, 2
    %v3171 = vadd.f32 %v3169, %v3170
    %v3172 = vrot.slane %v3171, 1
    %v3173 = vadd.f32 %v3171, %v3172
    %v3174 = vmul.f32 %v3131, %v349
    %v3175 = vmul.f32 %v3137, %v349
    %v3176 = vmul.f32 %v3143, %v349
    %v3177 = vmul.f32 %v3149, %v349
    %v3178 = vmul.f32 %v3155, %v349
    %v3179 = vmul.f32 %v3161, %v349
    %v3180 = vmul.f32 %v3167, %v349
    %v3181 = vmul.f32 %v3173, %v349
    %v3182 = vmul.f32 %v3110, %v3110
    %v3183 = vmul.f32 %v3111, %v3111
    %v3184 = vmul.f32 %v3112, %v3112
    %v3185 = vmul.f32 %v3113, %v3113
    %v3186 = vmul.f32 %v3114, %v3114
    %v3187 = vmul.f32 %v3115, %v3115
    %v3188 = vmul.f32 %v3116, %v3116
    %v3189 = vmul.f32 %v3117, %v3117
    %v3190 = vsub.f32 %v3174, %v3182
    %v3191 = vsub.f32 %v3175, %v3183
    %v3192 = vsub.f32 %v3176, %v3184
    %v3193 = vsub.f32 %v3177, %v3185
    %v3194 = vsub.f32 %v3178, %v3186
    %v3195 = vsub.f32 %v3179, %v3187
    %v3196 = vsub.f32 %v3180, %v3188
    %v3197 = vsub.f32 %v3181, %v3189
    %s3198 = scalar_lea.vmem [#allocation12], 64
    %v3199 = vld [vmem:[%s3198] ss:$8 sm:$0xf]
    %v3200 = vld [vmem:[%s3198] ss:$8 sm:$0xf0]
    %v3201 = vor.u32 %v3199, %v3200
    %v3202 = vadd.f32 %v3190, 0.8
    %v3203 = vadd.f32 %v3191, 0.8
    %v3204 = vadd.f32 %v3192, 0.8
    %v3205 = vadd.f32 %v3193, 0.8
    %v3206 = vadd.f32 %v3194, 0.8
    %v3207 = vadd.f32 %v3195, 0.8
    %v3208 = vadd.f32 %v3196, 0.8
    %v3209 = vadd.f32 %v3197, 0.8
    %v3210 = vrsqrt.pop %v3202
    %v3211 = vrsqrt.pop %v3203
    %v3212 = vrsqrt.pop %v3204
    %v3213 = vrsqrt.pop %v3205
    %v3214 = vrsqrt.pop %v3206
    %v3215 = vrsqrt.pop %v3207
    %v3216 = vrsqrt.pop %v3208
    %v3217 = vrsqrt.pop %v3209
    %v3226 = vcombine.low %v3210, %v3211
    %v3227 = vcombine.low %v3212, %v3213
    %v3228 = vcombine.low %v3214, %v3215
    %v3229 = vcombine.low %v3216, %v3217
    %v3231 = vunpack.c.l.s4 1966171168
    %v3232 = vunpack.c.0.s8 %v3231
    %v3233 = vlaneseq
    %v3234 = vshrl.u32 %v3233, 7
    %v3235 = vsub.s32 %v3232, %v3234
    %v3236 = vrot.slane %v3226, %v3235
    %v3238 = vunpack.c.l.s4 1966171168
    %v3239 = vunpack.c.0.s8 %v3238
    %v3240 = vlaneseq
    %v3241 = vshrl.u32 %v3240, 7
    %v3242 = vsub.s32 %v3239, %v3241
    %v3243 = vrot.slane %v3227, %v3242
    %v3245 = vunpack.c.l.s4 1966171168
    %v3246 = vunpack.c.0.s8 %v3245
    %v3247 = vlaneseq
    %v3248 = vshrl.u32 %v3247, 7
    %v3249 = vsub.s32 %v3246, %v3248
    %v3250 = vrot.slane %v3228, %v3249
    %v3252 = vunpack.c.l.s4 1966171168
    %v3253 = vunpack.c.0.s8 %v3252
    %v3254 = vlaneseq
    %v3255 = vshrl.u32 %v3254, 7
    %v3256 = vsub.s32 %v3253, %v3255
    %v3257 = vrot.slane %v3229, %v3256
    %v3258 = vcombine.low %v3236, %v3243
    %v3259 = vcombine.low %v3250, %v3257
    %v3261 = vunpack.c.l.s4 1966171168
    %v3262 = vunpack.c.0.s8 %v3261
    %v3263 = vlaneseq
    %v3264 = vshrl.u32 %v3263, 7
    %v3265 = vsub.s32 %v3262, %v3264
    %v3266 = vrot.slane %v3258, %v3265
    %v3268 = vunpack.c.l.s4 1966171168
    %v3269 = vunpack.c.0.s8 %v3268
    %v3270 = vlaneseq
    %v3271 = vshrl.u32 %v3270, 7
    %v3272 = vsub.s32 %v3269, %v3271
    %v3273 = vrot.slane %v3259, %v3272
    %v3274 = vcombine.low %v3266, %v3273
    %v3276 = vmul.f32 %v3201, %v3274
    %s3277 = scalar_lea.vmem [#allocation12], 65
    %v3278 = vld [vmem:[%s3277] ss:$8 sm:$0xf]
    %v3279 = vld [vmem:[%s3277] ss:$8 sm:$0xf0]
    %v3280 = vor.u32 %v3278, %v3279
    %v3282 = vlaneseq
    %v3283 = vshrl.u32 %v3282, 7
    %v3284 = vsub.s32 0, %v3283
    %v3285 = vrot.slane %v3276, %v3284
    %v3286 = vlaneseq
    %v3287 = vshrl.u32 %v3286, 7
    %v3288 = vsub.s32 1, %v3287
    %v3289 = vrot.slane %v3276, %v3288
    %v3290 = vlaneseq
    %v3291 = vshrl.u32 %v3290, 7
    %v3292 = vsub.s32 2, %v3291
    %v3293 = vrot.slane %v3276, %v3292
    %v3294 = vlaneseq
    %v3295 = vshrl.u32 %v3294, 7
    %v3296 = vsub.s32 3, %v3295
    %v3297 = vrot.slane %v3276, %v3296
    %v3298 = vlaneseq
    %v3299 = vshrl.u32 %v3298, 7
    %v3300 = vsub.s32 4, %v3299
    %v3301 = vrot.slane %v3276, %v3300
    %v3302 = vlaneseq
    %v3303 = vshrl.u32 %v3302, 7
    %v3304 = vsub.s32 5, %v3303
    %v3305 = vrot.slane %v3276, %v3304
    %v3306 = vlaneseq
    %v3307 = vshrl.u32 %v3306, 7
    %v3308 = vsub.s32 6, %v3307
    %v3309 = vrot.slane %v3276, %v3308
    %v3310 = vlaneseq
    %v3311 = vshrl.u32 %v3310, 7
    %v3312 = vsub.s32 7, %v3311
    %v3313 = vrot.slane %v3276, %v3312
    %v3322 = vmul.f32 %v3110, %v3285
    %v3323 = vmul.f32 %v3111, %v3289
    %v3324 = vmul.f32 %v3112, %v3293
    %v3325 = vmul.f32 %v3113, %v3297
    %v3326 = vmul.f32 %v3114, %v3301
    %v3327 = vmul.f32 %v3115, %v3305
    %v3328 = vmul.f32 %v3116, %v3309
    %v3329 = vmul.f32 %v3117, %v3313
    %v3338 = vcombine.low %v3322, %v3323
    %v3339 = vcombine.low %v3324, %v3325
    %v3340 = vcombine.low %v3326, %v3327
    %v3341 = vcombine.low %v3328, %v3329
    %v3343 = vunpack.c.l.s4 1966171168
    %v3344 = vunpack.c.0.s8 %v3343
    %v3345 = vlaneseq
    %v3346 = vshrl.u32 %v3345, 7
    %v3347 = vsub.s32 %v3344, %v3346
    %v3348 = vrot.slane %v3338, %v3347
    %v3350 = vunpack.c.l.s4 1966171168
    %v3351 = vunpack.c.0.s8 %v3350
    %v3352 = vlaneseq
    %v3353 = vshrl.u32 %v3352, 7
    %v3354 = vsub.s32 %v3351, %v3353
    %v3355 = vrot.slane %v3339, %v3354
    %v3357 = vunpack.c.l.s4 1966171168
    %v3358 = vunpack.c.0.s8 %v3357
    %v3359 = vlaneseq
    %v3360 = vshrl.u32 %v3359, 7
    %v3361 = vsub.s32 %v3358, %v3360
    %v3362 = vrot.slane %v3340, %v3361
    %v3364 = vunpack.c.l.s4 1966171168
    %v3365 = vunpack.c.0.s8 %v3364
    %v3366 = vlaneseq
    %v3367 = vshrl.u32 %v3366, 7
    %v3368 = vsub.s32 %v3365, %v3367
    %v3369 = vrot.slane %v3341, %v3368
    %v3370 = vcombine.low %v3348, %v3355
    %v3371 = vcombine.low %v3362, %v3369
    %v3373 = vunpack.c.l.s4 1966171168
    %v3374 = vunpack.c.0.s8 %v3373
    %v3375 = vlaneseq
    %v3376 = vshrl.u32 %v3375, 7
    %v3377 = vsub.s32 %v3374, %v3376
    %v3378 = vrot.slane %v3370, %v3377
    %v3380 = vunpack.c.l.s4 1966171168
    %v3381 = vunpack.c.0.s8 %v3380
    %v3382 = vlaneseq
    %v3383 = vshrl.u32 %v3382, 7
    %v3384 = vsub.s32 %v3381, %v3383
    %v3385 = vrot.slane %v3371, %v3384
    %v3386 = vcombine.low %v3378, %v3385
    %v3388 = vsub.f32 %v3280, %v3386
    %v3389 = vmul.f32 %v2810, %v3285
    %v3390 = vmul.f32 %v2812, %v3289
    %v3391 = vmul.f32 %v2892, %v3293
    %v3392 = vmul.f32 %v2894, %v3297
    %v3393 = vmul.f32 %v2974, %v3301
    %v3394 = vmul.f32 %v2976, %v3305
    %v3395 = vmul.f32 %v3056, %v3309
    %v3396 = vmul.f32 %v3058, %v3313
    %v3398 = vlaneseq
    %v3399 = vshrl.u32 %v3398, 7
    %v3400 = vsub.s32 0, %v3399
    %v3401 = vrot.slane %v3388, %v3400
    %v3402 = vlaneseq
    %v3403 = vshrl.u32 %v3402, 7
    %v3404 = vsub.s32 1, %v3403
    %v3405 = vrot.slane %v3388, %v3404
    %v3406 = vlaneseq
    %v3407 = vshrl.u32 %v3406, 7
    %v3408 = vsub.s32 2, %v3407
    %v3409 = vrot.slane %v3388, %v3408
    %v3410 = vlaneseq
    %v3411 = vshrl.u32 %v3410, 7
    %v3412 = vsub.s32 3, %v3411
    %v3413 = vrot.slane %v3388, %v3412
    %v3414 = vlaneseq
    %v3415 = vshrl.u32 %v3414, 7
    %v3416 = vsub.s32 4, %v3415
    %v3417 = vrot.slane %v3388, %v3416
    %v3418 = vlaneseq
    %v3419 = vshrl.u32 %v3418, 7
    %v3420 = vsub.s32 5, %v3419
    %v3421 = vrot.slane %v3388, %v3420
    %v3422 = vlaneseq
    %v3423 = vshrl.u32 %v3422, 7
    %v3424 = vsub.s32 6, %v3423
    %v3425 = vrot.slane %v3388, %v3424
    %v3426 = vlaneseq
    %v3427 = vshrl.u32 %v3426, 7
    %v3428 = vsub.s32 7, %v3427
    %v3429 = vrot.slane %v3388, %v3428
    %v3438 = vadd.f32 %v3389, %v3401
    %v3439 = vadd.f32 %v3390, %v3405
    %v3440 = vadd.f32 %v3391, %v3409
    %v3441 = vadd.f32 %v3392, %v3413
    %v3442 = vadd.f32 %v3393, %v3417
    %v3443 = vadd.f32 %v3394, %v3421
    %v3444 = vadd.f32 %v3395, %v3425
    %v3445 = vadd.f32 %v3396, %v3429
    %vm3446 = vcmp.gt.f32.partialorder %v3438, 0.0
    %vm3447 = vcmp.gt.f32.partialorder %v3439, 0.0
    %vm3448 = vcmp.gt.f32.partialorder %v3440, 0.0
    %vm3449 = vcmp.gt.f32.partialorder %v3441, 0.0
    %vm3450 = vcmp.gt.f32.partialorder %v3442, 0.0
    %vm3451 = vcmp.gt.f32.partialorder %v3443, 0.0
    %vm3452 = vcmp.gt.f32.partialorder %v3444, 0.0
    %vm3453 = vcmp.gt.f32.partialorder %v3445, 0.0
    %v3454 = vmul.f32 %v3438, 0.2
    %v3455 = vmul.f32 %v3439, 0.2
    %v3456 = vmul.f32 %v3440, 0.2
    %v3457 = vmul.f32 %v3441, 0.2
    %v3458 = vmul.f32 %v3442, 0.2
    %v3459 = vmul.f32 %v3443, 0.2
    %v3460 = vmul.f32 %v3444, 0.2
    %v3461 = vmul.f32 %v3445, 0.2
    %v3462 = vsel %vm3446, %v3438, %v3454
    %v3463 = vsel %vm3447, %v3439, %v3455
    %v3464 = vsel %vm3448, %v3440, %v3456
    %v3465 = vsel %vm3449, %v3441, %v3457
    %v3466 = vsel %vm3450, %v3442, %v3458
    %v3467 = vsel %vm3451, %v3443, %v3459
    %v3468 = vsel %vm3452, %v3444, %v3460
    %v3469 = vsel %vm3453, %v3445, %v3461
    %v3470 = vpack.c.bf16 %v3462, %v3462
    %v3471 = vpack.c.bf16 %v3463, %v3463
    %v3472 = vpack.c.bf16 %v3464, %v3464
    %v3473 = vpack.c.bf16 %v3465, %v3465
    %v3474 = vpack.c.bf16 %v3466, %v3466
    %v3475 = vpack.c.bf16 %v3467, %v3467
    %v3476 = vpack.c.bf16 %v3468, %v3468
    %v3477 = vpack.c.bf16 %v3469, %v3469
    %v3478 = vld [vmem:[#allocation10] sm:$0xff]
    %v3479 = vld [vmem:[#allocation10 + $0x8] sm:$0xff]
    %v3480 = vld [vmem:[#allocation10 + $0x10] sm:$0xff]
    %v3481 = vld [vmem:[#allocation10 + $0x18] sm:$0xf]
    %v3482 = vld [vmem:[#allocation10 + $0x1c] sm:$0xff]
    %v3483 = vld [vmem:[#allocation10 + $0x24] sm:$0xff]
    %v3484 = vld [vmem:[#allocation10 + $0x2c] sm:$0xff]
    %v3485 = vld [vmem:[#allocation10 + $0x34] sm:$0xf]
    %v3486 = vld [vmem:[#allocation10 + $0x38] sm:$0xff]
    %v3487 = vld [vmem:[#allocation10 + $0x40] sm:$0xff]
    %v3488 = vld [vmem:[#allocation10 + $0x48] sm:$0xff]
    %v3489 = vld [vmem:[#allocation10 + $0x50] sm:$0xf]
    %v3490 = vld [vmem:[#allocation10 + $0x54] sm:$0xff]
    %v3491 = vld [vmem:[#allocation10 + $0x5c] sm:$0xff]
    %v3492 = vld [vmem:[#allocation10 + $0x64] sm:$0xff]
    %v3493 = vld [vmem:[#allocation10 + $0x6c] sm:$0xf]
    %v3494 = vld [vmem:[#allocation10 + $0x70] sm:$0xff]
    %v3495 = vld [vmem:[#allocation10 + $0x78] sm:$0xff]
    %v3496 = vld [vmem:[#allocation10 + $0x80] sm:$0xff]
    %v3497 = vld [vmem:[#allocation10 + $0x88] sm:$0xf]
    %v3498 = vld [vmem:[#allocation10 + $0x8c] sm:$0xff]
    %v3499 = vld [vmem:[#allocation10 + $0x94] sm:$0xff]
    %v3500 = vld [vmem:[#allocation10 + $0x9c] sm:$0xff]
    %v3501 = vld [vmem:[#allocation10 + $0xa4] sm:$0xf]
    %v3502 = vld [vmem:[#allocation10 + $0xa8] sm:$0xff]
    %v3503 = vld [vmem:[#allocation10 + $0xb0] sm:$0xff]
    %v3504 = vld [vmem:[#allocation10 + $0xb8] sm:$0xff]
    %v3505 = vld [vmem:[#allocation10 + $0xc0] sm:$0xf]
    %v3506 = vld [vmem:[#allocation10 + $0xc4] sm:$0xff]
    %v3507 = vld [vmem:[#allocation10 + $0xcc] sm:$0xff]
    %v3508 = vld [vmem:[#allocation10 + $0xd4] sm:$0xff]
    %v3509 = vld [vmem:[#allocation10 + $0xdc] sm:$0xf]
    %v3510 = vld [vmem:[#allocation10 + $0xe0] sm:$0xff]
    %v3511 = vld [vmem:[#allocation10 + $0xe8] sm:$0xff]
    %v3512 = vld [vmem:[#allocation10 + $0xf0] sm:$0xff]
    %v3513 = vld [vmem:[#allocation10 + $0xf8] sm:$0xf]
    %v3514 = vld [vmem:[#allocation10 + $0xfc] sm:$0xff]
    %v3515 = vld [vmem:[#allocation10 + $0x104] sm:$0xff]
    %v3516 = vld [vmem:[#allocation10 + $0x10c] sm:$0xff]
    %v3517 = vld [vmem:[#allocation10 + $0x114] sm:$0xf]
    %v3518 = vld [vmem:[#allocation10 + $0x118] sm:$0xff]
    %v3519 = vld [vmem:[#allocation10 + $0x120] sm:$0xff]
    %v3520 = vld [vmem:[#allocation10 + $0x128] sm:$0xff]
    %v3521 = vld [vmem:[#allocation10 + $0x130] sm:$0xf]
    %v3522 = vld [vmem:[#allocation10 + $0x134] sm:$0xff]
    %v3523 = vld [vmem:[#allocation10 + $0x13c] sm:$0xff]
    %v3524 = vld [vmem:[#allocation10 + $0x144] sm:$0xff]
    %v3525 = vld [vmem:[#allocation10 + $0x14c] sm:$0xf]
    %v3526 = vld [vmem:[#allocation10 + $0x150] sm:$0xff]
    %v3527 = vld [vmem:[#allocation10 + $0x158] sm:$0xff]
    %v3528 = vld [vmem:[#allocation10 + $0x160] sm:$0xff]
    %v3529 = vld [vmem:[#allocation10 + $0x168] sm:$0xf]
    %v3530 = vld [vmem:[#allocation10 + $0x16c] sm:$0xff]
    %v3531 = vld [vmem:[#allocation10 + $0x174] sm:$0xff]
    %v3532 = vld [vmem:[#allocation10 + $0x17c] sm:$0xff]
    %v3533 = vld [vmem:[#allocation10 + $0x184] sm:$0xf]
    %v3534 = vld [vmem:[#allocation10 + $0x188] sm:$0xff]
    %v3535 = vld [vmem:[#allocation10 + $0x190] sm:$0xff]
    %v3536 = vld [vmem:[#allocation10 + $0x198] sm:$0xff]
    %v3537 = vld [vmem:[#allocation10 + $0x1a0] sm:$0xf]
    %v3538 = vld [vmem:[#allocation10 + $0x1a4] sm:$0xff]
    %v3539 = vld [vmem:[#allocation10 + $0x1ac] sm:$0xff]
    %v3540 = vld [vmem:[#allocation10 + $0x1b4] sm:$0xff]
    %v3541 = vld [vmem:[#allocation10 + $0x1bc] sm:$0xf]
    %v3542 = vld [vmem:[#allocation10 + $0x1c0] sm:$0xff]
    %v3543 = vld [vmem:[#allocation10 + $0x1c8] sm:$0xff]
    %v3544 = vld [vmem:[#allocation10 + $0x1d0] sm:$0xff]
    %v3545 = vld [vmem:[#allocation10 + $0x1d8] sm:$0xf]
    %v3546 = vld [vmem:[#allocation10 + $0x1dc] sm:$0xff]
    %v3547 = vld [vmem:[#allocation10 + $0x1e4] sm:$0xff]
    %v3548 = vld [vmem:[#allocation10 + $0x1ec] sm:$0xff]
    %v3549 = vld [vmem:[#allocation10 + $0x1f4] sm:$0xf]
    %v3550 = vld [vmem:[#allocation10 + $0x1f8] sm:$0xff]
    %v3551 = vld [vmem:[#allocation10 + $0x200] sm:$0xff]
    %v3552 = vld [vmem:[#allocation10 + $0x208] sm:$0xff]
    %v3553 = vld [vmem:[#allocation10 + $0x210] sm:$0xf]
    %v3554 = vld [vmem:[#allocation10 + $0x214] sm:$0xff]
    %v3555 = vld [vmem:[#allocation10 + $0x21c] sm:$0xff]
    %v3556 = vld [vmem:[#allocation10 + $0x224] sm:$0xff]
    %v3557 = vld [vmem:[#allocation10 + $0x22c] sm:$0xf]
    %v3558 = vld [vmem:[#allocation10 + $0x230] sm:$0xff]
    %v3559 = vld [vmem:[#allocation10 + $0x238] sm:$0xff]
    %v3560 = vld [vmem:[#allocation10 + $0x240] sm:$0xff]
    %v3561 = vld [vmem:[#allocation10 + $0x248] sm:$0xf]
    %v3562 = vld [vmem:[#allocation10 + $0x24c] sm:$0xff]
    %v3563 = vld [vmem:[#allocation10 + $0x254] sm:$0xff]
    %v3564 = vld [vmem:[#allocation10 + $0x25c] sm:$0xff]
    %v3565 = vld [vmem:[#allocation10 + $0x264] sm:$0xf]
    %v3566 = vld [vmem:[#allocation10 + $0x268] sm:$0xff]
    %v3567 = vld [vmem:[#allocation10 + $0x270] sm:$0xff]
    %v3568 = vld [vmem:[#allocation10 + $0x278] sm:$0xff]
    %v3569 = vld [vmem:[#allocation10 + $0x280] sm:$0xf]
    %v3570 = vld [vmem:[#allocation10 + $0x284] sm:$0xff]
    %v3571 = vld [vmem:[#allocation10 + $0x28c] sm:$0xff]
    %v3572 = vld [vmem:[#allocation10 + $0x294] sm:$0xff]
    %v3573 = vld [vmem:[#allocation10 + $0x29c] sm:$0xf]
    %v3574 = vld [vmem:[#allocation10 + $0x2a0] sm:$0xff]
    %v3575 = vld [vmem:[#allocation10 + $0x2a8] sm:$0xff]
    %v3576 = vld [vmem:[#allocation10 + $0x2b0] sm:$0xff]
    %v3577 = vld [vmem:[#allocation10 + $0x2b8] sm:$0xf]
    %v3578 = vld [vmem:[#allocation10 + $0x2bc] sm:$0xff]
    %v3579 = vld [vmem:[#allocation10 + $0x2c4] sm:$0xff]
    %v3580 = vld [vmem:[#allocation10 + $0x2cc] sm:$0xff]
    %v3581 = vld [vmem:[#allocation10 + $0x2d4] sm:$0xf]
    %v3582 = vld [vmem:[#allocation10 + $0x2d8] sm:$0xff]
    %v3583 = vld [vmem:[#allocation10 + $0x2e0] sm:$0xff]
    %v3584 = vld [vmem:[#allocation10 + $0x2e8] sm:$0xff]
    %v3585 = vld [vmem:[#allocation10 + $0x2f0] sm:$0xf]
    %v3586 = vld [vmem:[#allocation10 + $0x2f4] sm:$0xff]
    %v3587 = vld [vmem:[#allocation10 + $0x2fc] sm:$0xff]
    %v3588 = vld [vmem:[#allocation10 + $0x304] sm:$0xff]
    %v3589 = vld [vmem:[#allocation10 + $0x30c] sm:$0xf]
    %v3590 = vld [vmem:[#allocation10 + $0x310] sm:$0xff]
    %v3591 = vld [vmem:[#allocation10 + $0x318] sm:$0xff]
    %v3592 = vld [vmem:[#allocation10 + $0x320] sm:$0xff]
    %v3593 = vld [vmem:[#allocation10 + $0x328] sm:$0xf]
    %v3594 = vld [vmem:[#allocation10 + $0x32c] sm:$0xff]
    %v3595 = vld [vmem:[#allocation10 + $0x334] sm:$0xff]
    %v3596 = vld [vmem:[#allocation10 + $0x33c] sm:$0xff]
    %v3597 = vld [vmem:[#allocation10 + $0x344] sm:$0xf]
    %v3598 = vld [vmem:[#allocation10 + $0x348] sm:$0xff]
    %v3599 = vld [vmem:[#allocation10 + $0x350] sm:$0xff]
    %v3600 = vld [vmem:[#allocation10 + $0x358] sm:$0xff]
    %v3601 = vld [vmem:[#allocation10 + $0x360] sm:$0xf]
    %v3602 = vld [vmem:[#allocation10 + $0x364] sm:$0xff]
    %v3603 = vld [vmem:[#allocation10 + $0x36c] sm:$0xff]
    %v3604 = vld [vmem:[#allocation10 + $0x374] sm:$0xff]
    %v3605 = vld [vmem:[#allocation10 + $0x37c] sm:$0xf]
    %v3606 = vld [vmem:[#allocation10 + $0x380] sm:$0xff]
    %v3607 = vld [vmem:[#allocation10 + $0x388] sm:$0xff]
    %v3608 = vld [vmem:[#allocation10 + $0x390] sm:$0xff]
    %v3609 = vld [vmem:[#allocation10 + $0x398] sm:$0xf]
    %v3610 = vld [vmem:[#allocation10 + $0x39c] sm:$0xff]
    %v3611 = vld [vmem:[#allocation10 + $0x3a4] sm:$0xff]
    %v3612 = vld [vmem:[#allocation10 + $0x3ac] sm:$0xff]
    %v3613 = vld [vmem:[#allocation10 + $0x3b4] sm:$0xf]
    %v3614 = vld [vmem:[#allocation10 + $0x3b8] sm:$0xff]
    %v3615 = vld [vmem:[#allocation10 + $0x3c0] sm:$0xff]
    %v3616 = vld [vmem:[#allocation10 + $0x3c8] sm:$0xff]
    %v3617 = vld [vmem:[#allocation10 + $0x3d0] sm:$0xf]
    %v3618 = vld [vmem:[#allocation10 + $0x3d4] sm:$0xff]
    %v3619 = vld [vmem:[#allocation10 + $0x3dc] sm:$0xff]
    %v3620 = vld [vmem:[#allocation10 + $0x3e4] sm:$0xff]
    %v3621 = vld [vmem:[#allocation10 + $0x3ec] sm:$0xf]
    %v3622 = vld [vmem:[#allocation10 + $0x3f0] sm:$0xff]
    %v3623 = vld [vmem:[#allocation10 + $0x3f8] sm:$0xff]
    %v3624 = vld [vmem:[#allocation10 + $0x400] sm:$0xff]
    %v3625 = vld [vmem:[#allocation10 + $0x408] sm:$0xf]
    %v3626 = vld [vmem:[#allocation10 + $0x40c] sm:$0xff]
    %v3627 = vld [vmem:[#allocation10 + $0x414] sm:$0xff]
    %v3628 = vld [vmem:[#allocation10 + $0x41c] sm:$0xff]
    %v3629 = vld [vmem:[#allocation10 + $0x424] sm:$0xf]
    %v3630 = vld [vmem:[#allocation10 + $0x428] sm:$0xff]
    %v3631 = vld [vmem:[#allocation10 + $0x430] sm:$0xff]
    %v3632 = vld [vmem:[#allocation10 + $0x438] sm:$0xff]
    %v3633 = vld [vmem:[#allocation10 + $0x440] sm:$0xf]
    %v3634 = vld [vmem:[#allocation10 + $0x444] sm:$0xff]
    %v3635 = vld [vmem:[#allocation10 + $0x44c] sm:$0xff]
    %v3636 = vld [vmem:[#allocation10 + $0x454] sm:$0xff]
    %v3637 = vld [vmem:[#allocation10 + $0x45c] sm:$0xf]
    %v3638 = vld [vmem:[#allocation10 + $0x460] sm:$0xff]
    %v3639 = vld [vmem:[#allocation10 + $0x468] sm:$0xff]
    %v3640 = vld [vmem:[#allocation10 + $0x470] sm:$0xff]
    %v3641 = vld [vmem:[#allocation10 + $0x478] sm:$0xf]
    %v3642 = vld [vmem:[#allocation10 + $0x47c] sm:$0xff]
    %v3643 = vld [vmem:[#allocation10 + $0x484] sm:$0xff]
    %v3644 = vld [vmem:[#allocation10 + $0x48c] sm:$0xff]
    %v3645 = vld [vmem:[#allocation10 + $0x494] sm:$0xf]
    %v3646 = vld [vmem:[#allocation10 + $0x498] sm:$0xff]
    %v3647 = vld [vmem:[#allocation10 + $0x4a0] sm:$0xff]
    %v3648 = vld [vmem:[#allocation10 + $0x4a8] sm:$0xff]
    %v3649 = vld [vmem:[#allocation10 + $0x4b0] sm:$0xf]
    %v3650 = vld [vmem:[#allocation10 + $0x4b4] sm:$0xff]
    %v3651 = vld [vmem:[#allocation10 + $0x4bc] sm:$0xff]
    %v3652 = vld [vmem:[#allocation10 + $0x4c4] sm:$0xff]
    %v3653 = vld [vmem:[#allocation10 + $0x4cc] sm:$0xf]
    %v3654 = vld [vmem:[#allocation10 + $0x4d0] sm:$0xff]
    %v3655 = vld [vmem:[#allocation10 + $0x4d8] sm:$0xff]
    %v3656 = vld [vmem:[#allocation10 + $0x4e0] sm:$0xff]
    %v3657 = vld [vmem:[#allocation10 + $0x4e8] sm:$0xf]
    %v3658 = vld [vmem:[#allocation10 + $0x4ec] sm:$0xff]
    %v3659 = vld [vmem:[#allocation10 + $0x4f4] sm:$0xff]
    %v3660 = vld [vmem:[#allocation10 + $0x4fc] sm:$0xff]
    %v3661 = vld [vmem:[#allocation10 + $0x504] sm:$0xf]
    %v3662 = vld [vmem:[#allocation10 + $0x508] sm:$0xff]
    %v3663 = vld [vmem:[#allocation10 + $0x510] sm:$0xff]
    %v3664 = vld [vmem:[#allocation10 + $0x518] sm:$0xff]
    %v3665 = vld [vmem:[#allocation10 + $0x520] sm:$0xf]
    %v3666 = vld [vmem:[#allocation10 + $0x524] sm:$0xff]
    %v3667 = vld [vmem:[#allocation10 + $0x52c] sm:$0xff]
    %v3668 = vld [vmem:[#allocation10 + $0x534] sm:$0xff]
    %v3669 = vld [vmem:[#allocation10 + $0x53c] sm:$0xf]
    %v3670 = vld [vmem:[#allocation10 + $0x540] sm:$0xff]
    %v3671 = vld [vmem:[#allocation10 + $0x548] sm:$0xff]
    %v3672 = vld [vmem:[#allocation10 + $0x550] sm:$0xff]
    %v3673 = vld [vmem:[#allocation10 + $0x558] sm:$0xf]
    %v3674 = vld [vmem:[#allocation10 + $0x55c] sm:$0xff]
    %v3675 = vld [vmem:[#allocation10 + $0x564] sm:$0xff]
    %v3676 = vld [vmem:[#allocation10 + $0x56c] sm:$0xff]
    %v3677 = vld [vmem:[#allocation10 + $0x574] sm:$0xf]
    %v3678 = vld [vmem:[#allocation10 + $0x578] sm:$0xff]
    %v3679 = vld [vmem:[#allocation10 + $0x580] sm:$0xff]
    %v3680 = vld [vmem:[#allocation10 + $0x588] sm:$0xff]
    %v3681 = vld [vmem:[#allocation10 + $0x590] sm:$0xf]
    %v3682 = vld [vmem:[#allocation10 + $0x594] sm:$0xff]
    %v3683 = vld [vmem:[#allocation10 + $0x59c] sm:$0xff]
    %v3684 = vld [vmem:[#allocation10 + $0x5a4] sm:$0xff]
    %v3685 = vld [vmem:[#allocation10 + $0x5ac] sm:$0xf]
    %v3686 = vld [vmem:[#allocation10 + $0x5b0] sm:$0xff]
    %v3687 = vld [vmem:[#allocation10 + $0x5b8] sm:$0xff]
    %v3688 = vld [vmem:[#allocation10 + $0x5c0] sm:$0xff]
    %v3689 = vld [vmem:[#allocation10 + $0x5c8] sm:$0xf]
    %v3690 = vld [vmem:[#allocation10 + $0x5cc] sm:$0xff]
    %v3691 = vld [vmem:[#allocation10 + $0x5d4] sm:$0xff]
    %v3692 = vld [vmem:[#allocation10 + $0x5dc] sm:$0xff]
    %v3693 = vld [vmem:[#allocation10 + $0x5e4] sm:$0xf]
    %v3694 = vld [vmem:[#allocation10 + $0x5e8] sm:$0xff]
    %v3695 = vld [vmem:[#allocation10 + $0x5f0] sm:$0xff]
    %v3696 = vld [vmem:[#allocation10 + $0x5f8] sm:$0xff]
    %v3697 = vld [vmem:[#allocation10 + $0x600] sm:$0xf]
    %v3698 = vld [vmem:[#allocation10 + $0x604] sm:$0xff]
    %v3699 = vld [vmem:[#allocation10 + $0x60c] sm:$0xff]
    %v3700 = vld [vmem:[#allocation10 + $0x614] sm:$0xff]
    %v3701 = vld [vmem:[#allocation10 + $0x61c] sm:$0xf]
    %v3702 = vld [vmem:[#allocation10 + $0x620] sm:$0xff]
    %v3703 = vld [vmem:[#allocation10 + $0x628] sm:$0xff]
    %v3704 = vld [vmem:[#allocation10 + $0x630] sm:$0xff]
    %v3705 = vld [vmem:[#allocation10 + $0x638] sm:$0xf]
    %v3706 = vld [vmem:[#allocation10 + $0x63c] sm:$0xff]
    %v3707 = vld [vmem:[#allocation10 + $0x644] sm:$0xff]
    %v3708 = vld [vmem:[#allocation10 + $0x64c] sm:$0xff]
    %v3709 = vld [vmem:[#allocation10 + $0x654] sm:$0xf]
    %v3710 = vld [vmem:[#allocation10 + $0x658] sm:$0xff]
    %v3711 = vld [vmem:[#allocation10 + $0x660] sm:$0xff]
    %v3712 = vld [vmem:[#allocation10 + $0x668] sm:$0xff]
    %v3713 = vld [vmem:[#allocation10 + $0x670] sm:$0xf]
    %v3714 = vld [vmem:[#allocation10 + $0x674] sm:$0xff]
    %v3715 = vld [vmem:[#allocation10 + $0x67c] sm:$0xff]
    %v3716 = vld [vmem:[#allocation10 + $0x684] sm:$0xff]
    %v3717 = vld [vmem:[#allocation10 + $0x68c] sm:$0xf]
    %v3718 = vld [vmem:[#allocation10 + $0x690] sm:$0xff]
    %v3719 = vld [vmem:[#allocation10 + $0x698] sm:$0xff]
    %v3720 = vld [vmem:[#allocation10 + $0x6a0] sm:$0xff]
    %v3721 = vld [vmem:[#allocation10 + $0x6a8] sm:$0xf]
    %v3722 = vld [vmem:[#allocation10 + $0x6ac] sm:$0xff]
    %v3723 = vld [vmem:[#allocation10 + $0x6b4] sm:$0xff]
    %v3724 = vld [vmem:[#allocation10 + $0x6bc] sm:$0xff]
    %v3725 = vld [vmem:[#allocation10 + $0x6c4] sm:$0xf]
    %v3726 = vld [vmem:[#allocation10 + $0x6c8] sm:$0xff]
    %v3727 = vld [vmem:[#allocation10 + $0x6d0] sm:$0xff]
    %v3728 = vld [vmem:[#allocation10 + $0x6d8] sm:$0xff]
    %v3729 = vld [vmem:[#allocation10 + $0x6e0] sm:$0xf]
    %v3730 = vld [vmem:[#allocation10 + $0x6e4] sm:$0xff]
    %v3731 = vld [vmem:[#allocation10 + $0x6ec] sm:$0xff]
    %v3732 = vld [vmem:[#allocation10 + $0x6f4] sm:$0xff]
    %v3733 = vld [vmem:[#allocation10 + $0x6fc] sm:$0xf]
    %v3734 = vld [vmem:[#allocation10 + $0x700] sm:$0xff]
    %v3735 = vld [vmem:[#allocation10 + $0x708] sm:$0xff]
    %v3736 = vld [vmem:[#allocation10 + $0x710] sm:$0xff]
    %v3737 = vld [vmem:[#allocation10 + $0x718] sm:$0xf]
    %v3738 = vld [vmem:[#allocation10 + $0x71c] sm:$0xff]
    %v3739 = vld [vmem:[#allocation10 + $0x724] sm:$0xff]
    %v3740 = vld [vmem:[#allocation10 + $0x72c] sm:$0xff]
    %v3741 = vld [vmem:[#allocation10 + $0x734] sm:$0xf]
    %v3742 = vld [vmem:[#allocation10 + $0x738] sm:$0xff]
    %v3743 = vld [vmem:[#allocation10 + $0x740] sm:$0xff]
    %v3744 = vld [vmem:[#allocation10 + $0x748] sm:$0xff]
    %v3745 = vld [vmem:[#allocation10 + $0x750] sm:$0xf]
    %v3746 = vld [vmem:[#allocation10 + $0x754] sm:$0xff]
    %v3747 = vld [vmem:[#allocation10 + $0x75c] sm:$0xff]
    %v3748 = vld [vmem:[#allocation10 + $0x764] sm:$0xff]
    %v3749 = vld [vmem:[#allocation10 + $0x76c] sm:$0xf]
    %v3750 = vld [vmem:[#allocation10 + $0x770] sm:$0xff]
    %v3751 = vld [vmem:[#allocation10 + $0x778] sm:$0xff]
    %v3752 = vld [vmem:[#allocation10 + $0x780] sm:$0xff]
    %v3753 = vld [vmem:[#allocation10 + $0x788] sm:$0xf]
    %v3754 = vld [vmem:[#allocation10 + $0x78c] sm:$0xff]
    %v3755 = vld [vmem:[#allocation10 + $0x794] sm:$0xff]
    %v3756 = vld [vmem:[#allocation10 + $0x79c] sm:$0xff]
    %v3757 = vld [vmem:[#allocation10 + $0x7a4] sm:$0xf]
    %v3758 = vld [vmem:[#allocation10 + $0x7a8] sm:$0xff]
    %v3759 = vld [vmem:[#allocation10 + $0x7b0] sm:$0xff]
    %v3760 = vld [vmem:[#allocation10 + $0x7b8] sm:$0xff]
    %v3761 = vld [vmem:[#allocation10 + $0x7c0] sm:$0xf]
    %v3762 = vld [vmem:[#allocation10 + $0x7c4] sm:$0xff]
    %v3763 = vld [vmem:[#allocation10 + $0x7cc] sm:$0xff]
    %v3764 = vld [vmem:[#allocation10 + $0x7d4] sm:$0xff]
    %v3765 = vld [vmem:[#allocation10 + $0x7dc] sm:$0xf]
    %v3766 = vld [vmem:[#allocation10 + $0x7e0] sm:$0xff]
    %v3767 = vld [vmem:[#allocation10 + $0x7e8] sm:$0xff]
    %v3768 = vld [vmem:[#allocation10 + $0x7f0] sm:$0xff]
    %v3769 = vld [vmem:[#allocation10 + $0x7f8] sm:$0xf]
    %v3770 = vld [vmem:[#allocation10 + $0x7fc] sm:$0xff]
    %v3771 = vld [vmem:[#allocation10 + $0x804] sm:$0xff]
    %v3772 = vld [vmem:[#allocation10 + $0x80c] sm:$0xff]
    %v3773 = vld [vmem:[#allocation10 + $0x814] sm:$0xf]
    %v3774 = vld [vmem:[#allocation10 + $0x818] sm:$0xff]
    %v3775 = vld [vmem:[#allocation10 + $0x820] sm:$0xff]
    %v3776 = vld [vmem:[#allocation10 + $0x828] sm:$0xff]
    %v3777 = vld [vmem:[#allocation10 + $0x830] sm:$0xf]
    %v3778 = vld [vmem:[#allocation10 + $0x834] sm:$0xff]
    %v3779 = vld [vmem:[#allocation10 + $0x83c] sm:$0xff]
    %v3780 = vld [vmem:[#allocation10 + $0x844] sm:$0xff]
    %v3781 = vld [vmem:[#allocation10 + $0x84c] sm:$0xf]
    %v3782 = vld [vmem:[#allocation10 + $0x850] sm:$0xff]
    %v3783 = vld [vmem:[#allocation10 + $0x858] sm:$0xff]
    %v3784 = vld [vmem:[#allocation10 + $0x860] sm:$0xff]
    %v3785 = vld [vmem:[#allocation10 + $0x868] sm:$0xf]
    %v3786 = vld [vmem:[#allocation10 + $0x86c] sm:$0xff]
    %v3787 = vld [vmem:[#allocation10 + $0x874] sm:$0xff]
    %v3788 = vld [vmem:[#allocation10 + $0x87c] sm:$0xff]
    %v3789 = vld [vmem:[#allocation10 + $0x884] sm:$0xf]
    %v3790 = vld [vmem:[#allocation10 + $0x888] sm:$0xff]
    %v3791 = vld [vmem:[#allocation10 + $0x890] sm:$0xff]
    %v3792 = vld [vmem:[#allocation10 + $0x898] sm:$0xff]
    %v3793 = vld [vmem:[#allocation10 + $0x8a0] sm:$0xf]
    %v3794 = vld [vmem:[#allocation10 + $0x8a4] sm:$0xff]
    %v3795 = vld [vmem:[#allocation10 + $0x8ac] sm:$0xff]
    %v3796 = vld [vmem:[#allocation10 + $0x8b4] sm:$0xff]
    %v3797 = vld [vmem:[#allocation10 + $0x8bc] sm:$0xf]
    %v3798 = vld [vmem:[#allocation10 + $0x8c0] sm:$0xff]
    %v3799 = vld [vmem:[#allocation10 + $0x8c8] sm:$0xff]
    %v3800 = vld [vmem:[#allocation10 + $0x8d0] sm:$0xff]
    %v3801 = vld [vmem:[#allocation10 + $0x8d8] sm:$0xf]
    %v3802 = vld [vmem:[#allocation10 + $0x8dc] sm:$0xff]
    %v3803 = vld [vmem:[#allocation10 + $0x8e4] sm:$0xff]
    %v3804 = vld [vmem:[#allocation10 + $0x8ec] sm:$0xff]
    %v3805 = vld [vmem:[#allocation10 + $0x8f4] sm:$0xf]
    %v3806 = vld [vmem:[#allocation10 + $0x8f8] sm:$0xff]
    %v3807 = vld [vmem:[#allocation10 + $0x900] sm:$0xff]
    %v3808 = vld [vmem:[#allocation10 + $0x908] sm:$0xff]
    %v3809 = vld [vmem:[#allocation10 + $0x910] sm:$0xf]
    %v3810 = vld [vmem:[#allocation10 + $0x914] sm:$0xff]
    %v3811 = vld [vmem:[#allocation10 + $0x91c] sm:$0xff]
    %v3812 = vld [vmem:[#allocation10 + $0x924] sm:$0xff]
    %v3813 = vld [vmem:[#allocation10 + $0x92c] sm:$0xf]
    %v3814 = vld [vmem:[#allocation10 + $0x930] sm:$0xff]
    %v3815 = vld [vmem:[#allocation10 + $0x938] sm:$0xff]
    %v3816 = vld [vmem:[#allocation10 + $0x940] sm:$0xff]
    %v3817 = vld [vmem:[#allocation10 + $0x948] sm:$0xf]
    %v3818 = vld [vmem:[#allocation10 + $0x94c] sm:$0xff]
    %v3819 = vld [vmem:[#allocation10 + $0x954] sm:$0xff]
    %v3820 = vld [vmem:[#allocation10 + $0x95c] sm:$0xff]
    %v3821 = vld [vmem:[#allocation10 + $0x964] sm:$0xf]
    %v3822 = vld [vmem:[#allocation10 + $0x968] sm:$0xff]
    %v3823 = vld [vmem:[#allocation10 + $0x970] sm:$0xff]
    %v3824 = vld [vmem:[#allocation10 + $0x978] sm:$0xff]
    %v3825 = vld [vmem:[#allocation10 + $0x980] sm:$0xf]
    %v3826 = vld [vmem:[#allocation10 + $0x984] sm:$0xff]
    %v3827 = vld [vmem:[#allocation10 + $0x98c] sm:$0xff]
    %v3828 = vld [vmem:[#allocation10 + $0x994] sm:$0xff]
    %v3829 = vld [vmem:[#allocation10 + $0x99c] sm:$0xf]
    %v3830 = vld [vmem:[#allocation10 + $0x9a0] sm:$0xff]
    %v3831 = vld [vmem:[#allocation10 + $0x9a8] sm:$0xff]
    %v3832 = vld [vmem:[#allocation10 + $0x9b0] sm:$0xff]
    %v3833 = vld [vmem:[#allocation10 + $0x9b8] sm:$0xf]
    %v3834 = vld [vmem:[#allocation10 + $0x9bc] sm:$0xff]
    %v3835 = vld [vmem:[#allocation10 + $0x9c4] sm:$0xff]
    %v3836 = vld [vmem:[#allocation10 + $0x9cc] sm:$0xff]
    %v3837 = vld [vmem:[#allocation10 + $0x9d4] sm:$0xf]
    %v3838 = vld [vmem:[#allocation10 + $0x9d8] sm:$0xff]
    %v3839 = vld [vmem:[#allocation10 + $0x9e0] sm:$0xff]
    %v3840 = vld [vmem:[#allocation10 + $0x9e8] sm:$0xff]
    %v3841 = vld [vmem:[#allocation10 + $0x9f0] sm:$0xf]
    %v3842 = vld [vmem:[#allocation10 + $0x9f4] sm:$0xff]
    %v3843 = vld [vmem:[#allocation10 + $0x9fc] sm:$0xff]
    %v3844 = vld [vmem:[#allocation10 + $0xa04] sm:$0xff]
    %v3845 = vld [vmem:[#allocation10 + $0xa0c] sm:$0xf]
    %v3846 = vld [vmem:[#allocation10 + $0xa10] sm:$0xff]
    %v3847 = vld [vmem:[#allocation10 + $0xa18] sm:$0xff]
    %v3848 = vld [vmem:[#allocation10 + $0xa20] sm:$0xff]
    %v3849 = vld [vmem:[#allocation10 + $0xa28] sm:$0xf]
    %v3850 = vld [vmem:[#allocation10 + $0xa2c] sm:$0xff]
    %v3851 = vld [vmem:[#allocation10 + $0xa34] sm:$0xff]
    %v3852 = vld [vmem:[#allocation10 + $0xa3c] sm:$0xff]
    %v3853 = vld [vmem:[#allocation10 + $0xa44] sm:$0xf]
    %v3854 = vld [vmem:[#allocation10 + $0xa48] sm:$0xff]
    %v3855 = vld [vmem:[#allocation10 + $0xa50] sm:$0xff]
    %v3856 = vld [vmem:[#allocation10 + $0xa58] sm:$0xff]
    %v3857 = vld [vmem:[#allocation10 + $0xa60] sm:$0xf]
    %v3858 = vld [vmem:[#allocation10 + $0xa64] sm:$0xff]
    %v3859 = vld [vmem:[#allocation10 + $0xa6c] sm:$0xff]
    %v3860 = vld [vmem:[#allocation10 + $0xa74] sm:$0xff]
    %v3861 = vld [vmem:[#allocation10 + $0xa7c] sm:$0xf]
    %v3862 = vld [vmem:[#allocation10 + $0xa80] sm:$0xff]
    %v3863 = vld [vmem:[#allocation10 + $0xa88] sm:$0xff]
    %v3864 = vld [vmem:[#allocation10 + $0xa90] sm:$0xff]
    %v3865 = vld [vmem:[#allocation10 + $0xa98] sm:$0xf]
    %v3866 = vld [vmem:[#allocation10 + $0xa9c] sm:$0xff]
    %v3867 = vld [vmem:[#allocation10 + $0xaa4] sm:$0xff]
    %v3868 = vld [vmem:[#allocation10 + $0xaac] sm:$0xff]
    %v3869 = vld [vmem:[#allocation10 + $0xab4] sm:$0xf]
    %v3870 = vld [vmem:[#allocation10 + $0xab8] sm:$0xff]
    %v3871 = vld [vmem:[#allocation10 + $0xac0] sm:$0xff]
    %v3872 = vld [vmem:[#allocation10 + $0xac8] sm:$0xff]
    %v3873 = vld [vmem:[#allocation10 + $0xad0] sm:$0xf]
    %v3874 = vld [vmem:[#allocation10 + $0xad4] sm:$0xff]
    %v3875 = vld [vmem:[#allocation10 + $0xadc] sm:$0xff]
    %v3876 = vld [vmem:[#allocation10 + $0xae4] sm:$0xff]
    %v3877 = vld [vmem:[#allocation10 + $0xaec] sm:$0xf]
    %v3878 = vld [vmem:[#allocation10 + $0xaf0] sm:$0xff]
    %v3879 = vld [vmem:[#allocation10 + $0xaf8] sm:$0xff]
    %v3880 = vld [vmem:[#allocation10 + $0xb00] sm:$0xff]
    %v3881 = vld [vmem:[#allocation10 + $0xb08] sm:$0xf]
    %v3882 = vld [vmem:[#allocation10 + $0xb0c] sm:$0xff]
    %v3883 = vld [vmem:[#allocation10 + $0xb14] sm:$0xff]
    %v3884 = vld [vmem:[#allocation10 + $0xb1c] sm:$0xff]
    %v3885 = vld [vmem:[#allocation10 + $0xb24] sm:$0xf]
    %v3886 = vld [vmem:[#allocation10 + $0xb28] sm:$0xff]
    %v3887 = vld [vmem:[#allocation10 + $0xb30] sm:$0xff]
    %v3888 = vld [vmem:[#allocation10 + $0xb38] sm:$0xff]
    %v3889 = vld [vmem:[#allocation10 + $0xb40] sm:$0xf]
    %v3890 = vld [vmem:[#allocation10 + $0xb44] sm:$0xff]
    %v3891 = vld [vmem:[#allocation10 + $0xb4c] sm:$0xff]
    %v3892 = vld [vmem:[#allocation10 + $0xb54] sm:$0xff]
    %v3893 = vld [vmem:[#allocation10 + $0xb5c] sm:$0xf]
    %v3894 = vld [vmem:[#allocation10 + $0xb60] sm:$0xff]
    %v3895 = vld [vmem:[#allocation10 + $0xb68] sm:$0xff]
    %v3896 = vld [vmem:[#allocation10 + $0xb70] sm:$0xff]
    %v3897 = vld [vmem:[#allocation10 + $0xb78] sm:$0xf]
    %v3898 = vld [vmem:[#allocation10 + $0xb7c] sm:$0xff]
    %v3899 = vld [vmem:[#allocation10 + $0xb84] sm:$0xff]
    %v3900 = vld [vmem:[#allocation10 + $0xb8c] sm:$0xff]
    %v3901 = vld [vmem:[#allocation10 + $0xb94] sm:$0xf]
    %v3902 = vld [vmem:[#allocation10 + $0xb98] sm:$0xff]
    %v3903 = vld [vmem:[#allocation10 + $0xba0] sm:$0xff]
    %v3904 = vld [vmem:[#allocation10 + $0xba8] sm:$0xff]
    %v3905 = vld [vmem:[#allocation10 + $0xbb0] sm:$0xf]
    %v3906 = vld [vmem:[#allocation10 + $0xbb4] sm:$0xff]
    %v3907 = vld [vmem:[#allocation10 + $0xbbc] sm:$0xff]
    %v3908 = vld [vmem:[#allocation10 + $0xbc4] sm:$0xff]
    %v3909 = vld [vmem:[#allocation10 + $0xbcc] sm:$0xf]
    %v3910 = vld [vmem:[#allocation10 + $0xbd0] sm:$0xff]
    %v3911 = vld [vmem:[#allocation10 + $0xbd8] sm:$0xff]
    %v3912 = vld [vmem:[#allocation10 + $0xbe0] sm:$0xff]
    %v3913 = vld [vmem:[#allocation10 + $0xbe8] sm:$0xf]
    %v3914 = vld [vmem:[#allocation10 + $0xbec] sm:$0xff]
    %v3915 = vld [vmem:[#allocation10 + $0xbf4] sm:$0xff]
    %v3916 = vld [vmem:[#allocation10 + $0xbfc] sm:$0xff]
    %v3917 = vld [vmem:[#allocation10 + $0xc04] sm:$0xf]
    %v3918 = vld [vmem:[#allocation10 + $0xc08] sm:$0xff]
    %v3919 = vld [vmem:[#allocation10 + $0xc10] sm:$0xff]
    %v3920 = vld [vmem:[#allocation10 + $0xc18] sm:$0xff]
    %v3921 = vld [vmem:[#allocation10 + $0xc20] sm:$0xf]
    %v3922 = vld [vmem:[#allocation10 + $0xc24] sm:$0xff]
    %v3923 = vld [vmem:[#allocation10 + $0xc2c] sm:$0xff]
    %v3924 = vld [vmem:[#allocation10 + $0xc34] sm:$0xff]
    %v3925 = vld [vmem:[#allocation10 + $0xc3c] sm:$0xf]
    %v3926 = vld [vmem:[#allocation10 + $0xc40] sm:$0xff]
    %v3927 = vld [vmem:[#allocation10 + $0xc48] sm:$0xff]
    %v3928 = vld [vmem:[#allocation10 + $0xc50] sm:$0xff]
    %v3929 = vld [vmem:[#allocation10 + $0xc58] sm:$0xf]
    %v3930 = vld [vmem:[#allocation10 + $0xc5c] sm:$0xff]
    %v3931 = vld [vmem:[#allocation10 + $0xc64] sm:$0xff]
    %v3932 = vld [vmem:[#allocation10 + $0xc6c] sm:$0xff]
    %v3933 = vld [vmem:[#allocation10 + $0xc74] sm:$0xf]
    %v3934 = vld [vmem:[#allocation10 + $0xc78] sm:$0xff]
    %v3935 = vld [vmem:[#allocation10 + $0xc80] sm:$0xff]
    %v3936 = vld [vmem:[#allocation10 + $0xc88] sm:$0xff]
    %v3937 = vld [vmem:[#allocation10 + $0xc90] sm:$0xf]
    %v3938 = vld [vmem:[#allocation10 + $0xc94] sm:$0xff]
    %v3939 = vld [vmem:[#allocation10 + $0xc9c] sm:$0xff]
    %v3940 = vld [vmem:[#allocation10 + $0xca4] sm:$0xff]
    %v3941 = vld [vmem:[#allocation10 + $0xcac] sm:$0xf]
    %v3942 = vld [vmem:[#allocation10 + $0xcb0] sm:$0xff]
    %v3943 = vld [vmem:[#allocation10 + $0xcb8] sm:$0xff]
    %v3944 = vld [vmem:[#allocation10 + $0xcc0] sm:$0xff]
    %v3945 = vld [vmem:[#allocation10 + $0xcc8] sm:$0xf]
    %v3946 = vld [vmem:[#allocation10 + $0xccc] sm:$0xff]
    %v3947 = vld [vmem:[#allocation10 + $0xcd4] sm:$0xff]
    %v3948 = vld [vmem:[#allocation10 + $0xcdc] sm:$0xff]
    %v3949 = vld [vmem:[#allocation10 + $0xce4] sm:$0xf]
    %v3950 = vld [vmem:[#allocation10 + $0xce8] sm:$0xff]
    %v3951 = vld [vmem:[#allocation10 + $0xcf0] sm:$0xff]
    %v3952 = vld [vmem:[#allocation10 + $0xcf8] sm:$0xff]
    %v3953 = vld [vmem:[#allocation10 + $0xd00] sm:$0xf]
    %v3954 = vld [vmem:[#allocation10 + $0xd04] sm:$0xff]
    %v3955 = vld [vmem:[#allocation10 + $0xd0c] sm:$0xff]
    %v3956 = vld [vmem:[#allocation10 + $0xd14] sm:$0xff]
    %v3957 = vld [vmem:[#allocation10 + $0xd1c] sm:$0xf]
    %v3958 = vld [vmem:[#allocation10 + $0xd20] sm:$0xff]
    %v3959 = vld [vmem:[#allocation10 + $0xd28] sm:$0xff]
    %v3960 = vld [vmem:[#allocation10 + $0xd30] sm:$0xff]
    %v3961 = vld [vmem:[#allocation10 + $0xd38] sm:$0xf]
    %v3962 = vld [vmem:[#allocation10 + $0xd3c] sm:$0xff]
    %v3963 = vld [vmem:[#allocation10 + $0xd44] sm:$0xff]
    %v3964 = vld [vmem:[#allocation10 + $0xd4c] sm:$0xff]
    %v3965 = vld [vmem:[#allocation10 + $0xd54] sm:$0xf]
    %v3966 = vld [vmem:[#allocation10 + $0xd58] sm:$0xff]
    %v3967 = vld [vmem:[#allocation10 + $0xd60] sm:$0xff]
    %v3968 = vld [vmem:[#allocation10 + $0xd68] sm:$0xff]
    %v3969 = vld [vmem:[#allocation10 + $0xd70] sm:$0xf]
    %v3970 = vld [vmem:[#allocation10 + $0xd74] sm:$0xff]
    %v3971 = vld [vmem:[#allocation10 + $0xd7c] sm:$0xff]
    %v3972 = vld [vmem:[#allocation10 + $0xd84] sm:$0xff]
    %v3973 = vld [vmem:[#allocation10 + $0xd8c] sm:$0xf]
    %v3974 = vld [vmem:[#allocation10 + $0xd90] sm:$0xff]
    %v3975 = vld [vmem:[#allocation10 + $0xd98] sm:$0xff]
    %v3976 = vld [vmem:[#allocation10 + $0xda0] sm:$0xff]
    %v3977 = vld [vmem:[#allocation10 + $0xda8] sm:$0xf]
    %v3978 = vld [vmem:[#allocation10 + $0xdac] sm:$0xff]
    %v3979 = vld [vmem:[#allocation10 + $0xdb4] sm:$0xff]
    %v3980 = vld [vmem:[#allocation10 + $0xdbc] sm:$0xff]
    %v3981 = vld [vmem:[#allocation10 + $0xdc4] sm:$0xf]
    %v3982 = vld [vmem:[#allocation10 + $0xdc8] sm:$0xff]
    %v3983 = vld [vmem:[#allocation10 + $0xdd0] sm:$0xff]
    %v3984 = vld [vmem:[#allocation10 + $0xdd8] sm:$0xff]
    %v3985 = vld [vmem:[#allocation10 + $0xde0] sm:$0xf]
    %v3986 = vld [vmem:[#allocation10 + $0xde4] sm:$0xff]
    %v3987 = vld [vmem:[#allocation10 + $0xdec] sm:$0xff]
    %v3988 = vld [vmem:[#allocation10 + $0xdf4] sm:$0xff]
    %v3989 = vld [vmem:[#allocation10 + $0xdfc] sm:$0xf]
    %s3990 = scalar_lea.vmem [#allocation12], 66
    %v3991 = vld [vmem:[%s3990] ss:$8 sm:$0xf]
    %v3992 = vld [vmem:[%s3990] ss:$8 sm:$0xf0]
    %v3993 = vor.u32 %v3991, %v3992
    %v3995 = vlaneseq
    %v3996 = vshrl.u32 %v3995, 7
    %v3997 = vsub.s32 0, %v3996
    %v3998 = vrot.slane %v3993, %v3997
    %v3999 = vlaneseq
    %v4000 = vshrl.u32 %v3999, 7
    %v4001 = vsub.s32 1, %v4000
    %v4002 = vrot.slane %v3993, %v4001
    %v4003 = vlaneseq
    %v4004 = vshrl.u32 %v4003, 7
    %v4005 = vsub.s32 2, %v4004
    %v4006 = vrot.slane %v3993, %v4005
    %v4007 = vlaneseq
    %v4008 = vshrl.u32 %v4007, 7
    %v4009 = vsub.s32 3, %v4008
    %v4010 = vrot.slane %v3993, %v4009
    %v4011 = vlaneseq
    %v4012 = vshrl.u32 %v4011, 7
    %v4013 = vsub.s32 4, %v4012
    %v4014 = vrot.slane %v3993, %v4013
    %v4015 = vlaneseq
    %v4016 = vshrl.u32 %v4015, 7
    %v4017 = vsub.s32 5, %v4016
    %v4018 = vrot.slane %v3993, %v4017
    %v4019 = vlaneseq
    %v4020 = vshrl.u32 %v4019, 7
    %v4021 = vsub.s32 6, %v4020
    %v4022 = vrot.slane %v3993, %v4021
    %v4542 = vunpack.c.l.b16 %v3478
    %v4543 = vunpack.c.h.b16 %v3478
    %v4544 = vunpack.c.l.b16 %v3479
    %v4545 = vunpack.c.h.b16 %v3479
    %v4546 = vunpack.c.l.b16 %v3480
    %v4547 = vunpack.c.h.b16 %v3480
    %v4548 = vunpack.c.l.b16 %v3481
    %v4549 = vunpack.c.l.b16 %v3482
    %v4550 = vunpack.c.h.b16 %v3482
    %v4551 = vunpack.c.l.b16 %v3483
    %v4552 = vunpack.c.h.b16 %v3483
    %v4553 = vunpack.c.l.b16 %v3484
    %v4554 = vunpack.c.h.b16 %v3484
    %v4555 = vunpack.c.l.b16 %v3485
    %v4556 = vunpack.c.l.b16 %v3486
    %v4557 = vunpack.c.h.b16 %v3486
    %v4558 = vunpack.c.l.b16 %v3487
    %v4559 = vunpack.c.h.b16 %v3487
    %v4560 = vunpack.c.l.b16 %v3488
    %v4561 = vunpack.c.h.b16 %v3488
    %v4562 = vunpack.c.l.b16 %v3489
    %v4563 = vunpack.c.l.b16 %v3490
    %v4564 = vunpack.c.h.b16 %v3490
    %v4565 = vunpack.c.l.b16 %v3491
    %v4566 = vunpack.c.h.b16 %v3491
    %v4567 = vunpack.c.l.b16 %v3492
    %v4568 = vunpack.c.h.b16 %v3492
    %v4569 = vunpack.c.l.b16 %v3493
    %v4570 = vunpack.c.l.b16 %v3494
    %v4571 = vunpack.c.h.b16 %v3494
    %v4572 = vunpack.c.l.b16 %v3495
    %v4573 = vunpack.c.h.b16 %v3495
    %v4574 = vunpack.c.l.b16 %v3496
    %v4575 = vunpack.c.h.b16 %v3496
    %v4576 = vunpack.c.l.b16 %v3497
    %v4577 = vunpack.c.l.b16 %v3498
    %v4578 = vunpack.c.h.b16 %v3498
    %v4579 = vunpack.c.l.b16 %v3499
    %v4580 = vunpack.c.h.b16 %v3499
    %v4581 = vunpack.c.l.b16 %v3500
    %v4582 = vunpack.c.h.b16 %v3500
    %v4583 = vunpack.c.l.b16 %v3501
    %v4584 = vunpack.c.l.b16 %v3502
    %v4585 = vunpack.c.h.b16 %v3502
    %v4586 = vunpack.c.l.b16 %v3503
    %v4587 = vunpack.c.h.b16 %v3503
    %v4588 = vunpack.c.l.b16 %v3504
    %v4589 = vunpack.c.h.b16 %v3504
    %v4590 = vunpack.c.l.b16 %v3505
    %v4591 = vunpack.c.l.b16 %v3506
    %v4592 = vunpack.c.h.b16 %v3506
    %v4593 = vunpack.c.l.b16 %v3507
    %v4594 = vunpack.c.h.b16 %v3507
    %v4595 = vunpack.c.l.b16 %v3508
    %v4596 = vunpack.c.h.b16 %v3508
    %v4597 = vunpack.c.l.b16 %v3509
    %v4598 = vunpack.c.l.b16 %v3510
    %v4599 = vunpack.c.h.b16 %v3510
    %v4600 = vunpack.c.l.b16 %v3511
    %v4601 = vunpack.c.h.b16 %v3511
    %v4602 = vunpack.c.l.b16 %v3512
    %v4603 = vunpack.c.h.b16 %v3512
    %v4604 = vunpack.c.l.b16 %v3513
    %v4605 = vunpack.c.l.b16 %v3514
    %v4606 = vunpack.c.h.b16 %v3514
    %v4607 = vunpack.c.l.b16 %v3515
    %v4608 = vunpack.c.h.b16 %v3515
    %v4609 = vunpack.c.l.b16 %v3516
    %v4610 = vunpack.c.h.b16 %v3516
    %v4611 = vunpack.c.l.b16 %v3517
    %v4612 = vunpack.c.l.b16 %v3518
    %v4613 = vunpack.c.h.b16 %v3518
    %v4614 = vunpack.c.l.b16 %v3519
    %v4615 = vunpack.c.h.b16 %v3519
    %v4616 = vunpack.c.l.b16 %v3520
    %v4617 = vunpack.c.h.b16 %v3520
    %v4618 = vunpack.c.l.b16 %v3521
    %v4619 = vunpack.c.l.b16 %v3522
    %v4620 = vunpack.c.h.b16 %v3522
    %v4621 = vunpack.c.l.b16 %v3523
    %v4622 = vunpack.c.h.b16 %v3523
    %v4623 = vunpack.c.l.b16 %v3524
    %v4624 = vunpack.c.h.b16 %v3524
    %v4625 = vunpack.c.l.b16 %v3525
    %v4626 = vunpack.c.l.b16 %v3526
    %v4627 = vunpack.c.h.b16 %v3526
    %v4628 = vunpack.c.l.b16 %v3527
    %v4629 = vunpack.c.h.b16 %v3527
    %v4630 = vunpack.c.l.b16 %v3528
    %v4631 = vunpack.c.h.b16 %v3528
    %v4632 = vunpack.c.l.b16 %v3529
    %v4633 = vunpack.c.l.b16 %v3530
    %v4634 = vunpack.c.h.b16 %v3530
    %v4635 = vunpack.c.l.b16 %v3531
    %v4636 = vunpack.c.h.b16 %v3531
    %v4637 = vunpack.c.l.b16 %v3532
    %v4638 = vunpack.c.h.b16 %v3532
    %v4639 = vunpack.c.l.b16 %v3533
    %v4640 = vunpack.c.l.b16 %v3534
    %v4641 = vunpack.c.h.b16 %v3534
    %v4642 = vunpack.c.l.b16 %v3535
    %v4643 = vunpack.c.h.b16 %v3535
    %v4644 = vunpack.c.l.b16 %v3536
    %v4645 = vunpack.c.h.b16 %v3536
    %v4646 = vunpack.c.l.b16 %v3537
    %v4647 = vunpack.c.l.b16 %v3538
    %v4648 = vunpack.c.h.b16 %v3538
    %v4649 = vunpack.c.l.b16 %v3539
    %v4650 = vunpack.c.h.b16 %v3539
    %v4651 = vunpack.c.l.b16 %v3540
    %v4652 = vunpack.c.h.b16 %v3540
    %v4653 = vunpack.c.l.b16 %v3541
    %v4654 = vunpack.c.l.b16 %v3542
    %v4655 = vunpack.c.h.b16 %v3542
    %v4656 = vunpack.c.l.b16 %v3543
    %v4657 = vunpack.c.h.b16 %v3543
    %v4658 = vunpack.c.l.b16 %v3544
    %v4659 = vunpack.c.h.b16 %v3544
    %v4660 = vunpack.c.l.b16 %v3545
    %v4661 = vunpack.c.l.b16 %v3546
    %v4662 = vunpack.c.h.b16 %v3546
    %v4663 = vunpack.c.l.b16 %v3547
    %v4664 = vunpack.c.h.b16 %v3547
    %v4665 = vunpack.c.l.b16 %v3548
    %v4666 = vunpack.c.h.b16 %v3548
    %v4667 = vunpack.c.l.b16 %v3549
    %v4668 = vunpack.c.l.b16 %v3550
    %v4669 = vunpack.c.h.b16 %v3550
    %v4670 = vunpack.c.l.b16 %v3551
    %v4671 = vunpack.c.h.b16 %v3551
    %v4672 = vunpack.c.l.b16 %v3552
    %v4673 = vunpack.c.h.b16 %v3552
    %v4674 = vunpack.c.l.b16 %v3553
    %v4675 = vunpack.c.l.b16 %v3554
    %v4676 = vunpack.c.h.b16 %v3554
    %v4677 = vunpack.c.l.b16 %v3555
    %v4678 = vunpack.c.h.b16 %v3555
    %v4679 = vunpack.c.l.b16 %v3556
    %v4680 = vunpack.c.h.b16 %v3556
    %v4681 = vunpack.c.l.b16 %v3557
    %v4682 = vunpack.c.l.b16 %v3558
    %v4683 = vunpack.c.h.b16 %v3558
    %v4684 = vunpack.c.l.b16 %v3559
    %v4685 = vunpack.c.h.b16 %v3559
    %v4686 = vunpack.c.l.b16 %v3560
    %v4687 = vunpack.c.h.b16 %v3560
    %v4688 = vunpack.c.l.b16 %v3561
    %v4689 = vunpack.c.l.b16 %v3562
    %v4690 = vunpack.c.h.b16 %v3562
    %v4691 = vunpack.c.l.b16 %v3563
    %v4692 = vunpack.c.h.b16 %v3563
    %v4693 = vunpack.c.l.b16 %v3564
    %v4694 = vunpack.c.h.b16 %v3564
    %v4695 = vunpack.c.l.b16 %v3565
    %v4696 = vunpack.c.l.b16 %v3566
    %v4697 = vunpack.c.h.b16 %v3566
    %v4698 = vunpack.c.l.b16 %v3567
    %v4699 = vunpack.c.h.b16 %v3567
    %v4700 = vunpack.c.l.b16 %v3568
    %v4701 = vunpack.c.h.b16 %v3568
    %v4702 = vunpack.c.l.b16 %v3569
    %v4703 = vunpack.c.l.b16 %v3570
    %v4704 = vunpack.c.h.b16 %v3570
    %v4705 = vunpack.c.l.b16 %v3571
    %v4706 = vunpack.c.h.b16 %v3571
    %v4707 = vunpack.c.l.b16 %v3572
    %v4708 = vunpack.c.h.b16 %v3572
    %v4709 = vunpack.c.l.b16 %v3573
    %v4710 = vunpack.c.l.b16 %v3574
    %v4711 = vunpack.c.h.b16 %v3574
    %v4712 = vunpack.c.l.b16 %v3575
    %v4713 = vunpack.c.h.b16 %v3575
    %v4714 = vunpack.c.l.b16 %v3576
    %v4715 = vunpack.c.h.b16 %v3576
    %v4716 = vunpack.c.l.b16 %v3577
    %v4717 = vunpack.c.l.b16 %v3578
    %v4718 = vunpack.c.h.b16 %v3578
    %v4719 = vunpack.c.l.b16 %v3579
    %v4720 = vunpack.c.h.b16 %v3579
    %v4721 = vunpack.c.l.b16 %v3580
    %v4722 = vunpack.c.h.b16 %v3580
    %v4723 = vunpack.c.l.b16 %v3581
    %v4724 = vunpack.c.l.b16 %v3582
    %v4725 = vunpack.c.h.b16 %v3582
    %v4726 = vunpack.c.l.b16 %v3583
    %v4727 = vunpack.c.h.b16 %v3583
    %v4728 = vunpack.c.l.b16 %v3584
    %v4729 = vunpack.c.h.b16 %v3584
    %v4730 = vunpack.c.l.b16 %v3585
    %v4731 = vunpack.c.l.b16 %v3586
    %v4732 = vunpack.c.h.b16 %v3586
    %v4733 = vunpack.c.l.b16 %v3587
    %v4734 = vunpack.c.h.b16 %v3587
    %v4735 = vunpack.c.l.b16 %v3588
    %v4736 = vunpack.c.h.b16 %v3588
    %v4737 = vunpack.c.l.b16 %v3589
    %v4738 = vunpack.c.l.b16 %v3590
    %v4739 = vunpack.c.h.b16 %v3590
    %v4740 = vunpack.c.l.b16 %v3591
    %v4741 = vunpack.c.h.b16 %v3591
    %v4742 = vunpack.c.l.b16 %v3592
    %v4743 = vunpack.c.h.b16 %v3592
    %v4744 = vunpack.c.l.b16 %v3593
    %v4745 = vunpack.c.l.b16 %v3594
    %v4746 = vunpack.c.h.b16 %v3594
    %v4747 = vunpack.c.l.b16 %v3595
    %v4748 = vunpack.c.h.b16 %v3595
    %v4749 = vunpack.c.l.b16 %v3596
    %v4750 = vunpack.c.h.b16 %v3596
    %v4751 = vunpack.c.l.b16 %v3597
    %v4752 = vunpack.c.l.b16 %v3598
    %v4753 = vunpack.c.h.b16 %v3598
    %v4754 = vunpack.c.l.b16 %v3599
    %v4755 = vunpack.c.h.b16 %v3599
    %v4756 = vunpack.c.l.b16 %v3600
    %v4757 = vunpack.c.h.b16 %v3600
    %v4758 = vunpack.c.l.b16 %v3601
    %v4759 = vunpack.c.l.b16 %v3602
    %v4760 = vunpack.c.h.b16 %v3602
    %v4761 = vunpack.c.l.b16 %v3603
    %v4762 = vunpack.c.h.b16 %v3603
    %v4763 = vunpack.c.l.b16 %v3604
    %v4764 = vunpack.c.h.b16 %v3604
    %v4765 = vunpack.c.l.b16 %v3605
    %v4766 = vunpack.c.l.b16 %v3606
    %v4767 = vunpack.c.h.b16 %v3606
    %v4768 = vunpack.c.l.b16 %v3607
    %v4769 = vunpack.c.h.b16 %v3607
    %v4770 = vunpack.c.l.b16 %v3608
    %v4771 = vunpack.c.h.b16 %v3608
    %v4772 = vunpack.c.l.b16 %v3609
    %v4773 = vunpack.c.l.b16 %v3610
    %v4774 = vunpack.c.h.b16 %v3610
    %v4775 = vunpack.c.l.b16 %v3611
    %v4776 = vunpack.c.h.b16 %v3611
    %v4777 = vunpack.c.l.b16 %v3612
    %v4778 = vunpack.c.h.b16 %v3612
    %v4779 = vunpack.c.l.b16 %v3613
    %v4780 = vunpack.c.l.b16 %v3614
    %v4781 = vunpack.c.h.b16 %v3614
    %v4782 = vunpack.c.l.b16 %v3615
    %v4783 = vunpack.c.h.b16 %v3615
    %v4784 = vunpack.c.l.b16 %v3616
    %v4785 = vunpack.c.h.b16 %v3616
    %v4786 = vunpack.c.l.b16 %v3617
    %v4787 = vunpack.c.l.b16 %v3618
    %v4788 = vunpack.c.h.b16 %v3618
    %v4789 = vunpack.c.l.b16 %v3619
    %v4790 = vunpack.c.h.b16 %v3619
    %v4791 = vunpack.c.l.b16 %v3620
    %v4792 = vunpack.c.h.b16 %v3620
    %v4793 = vunpack.c.l.b16 %v3621
    %v4794 = vunpack.c.l.b16 %v3622
    %v4795 = vunpack.c.h.b16 %v3622
    %v4796 = vunpack.c.l.b16 %v3623
    %v4797 = vunpack.c.h.b16 %v3623
    %v4798 = vunpack.c.l.b16 %v3624
    %v4799 = vunpack.c.h.b16 %v3624
    %v4800 = vunpack.c.l.b16 %v3625
    %v4801 = vunpack.c.l.b16 %v3626
    %v4802 = vunpack.c.h.b16 %v3626
    %v4803 = vunpack.c.l.b16 %v3627
    %v4804 = vunpack.c.h.b16 %v3627
    %v4805 = vunpack.c.l.b16 %v3628
    %v4806 = vunpack.c.h.b16 %v3628
    %v4807 = vunpack.c.l.b16 %v3629
    %v4808 = vunpack.c.l.b16 %v3630
    %v4809 = vunpack.c.h.b16 %v3630
    %v4810 = vunpack.c.l.b16 %v3631
    %v4811 = vunpack.c.h.b16 %v3631
    %v4812 = vunpack.c.l.b16 %v3632
    %v4813 = vunpack.c.h.b16 %v3632
    %v4814 = vunpack.c.l.b16 %v3633
    %v4815 = vunpack.c.l.b16 %v3634
    %v4816 = vunpack.c.h.b16 %v3634
    %v4817 = vunpack.c.l.b16 %v3635
    %v4818 = vunpack.c.h.b16 %v3635
    %v4819 = vunpack.c.l.b16 %v3636
    %v4820 = vunpack.c.h.b16 %v3636
    %v4821 = vunpack.c.l.b16 %v3637
    %v4822 = vunpack.c.l.b16 %v3638
    %v4823 = vunpack.c.h.b16 %v3638
    %v4824 = vunpack.c.l.b16 %v3639
    %v4825 = vunpack.c.h.b16 %v3639
    %v4826 = vunpack.c.l.b16 %v3640
    %v4827 = vunpack.c.h.b16 %v3640
    %v4828 = vunpack.c.l.b16 %v3641
    %v4829 = vunpack.c.l.b16 %v3642
    %v4830 = vunpack.c.h.b16 %v3642
    %v4831 = vunpack.c.l.b16 %v3643
    %v4832 = vunpack.c.h.b16 %v3643
    %v4833 = vunpack.c.l.b16 %v3644
    %v4834 = vunpack.c.h.b16 %v3644
    %v4835 = vunpack.c.l.b16 %v3645
    %v4836 = vunpack.c.l.b16 %v3646
    %v4837 = vunpack.c.h.b16 %v3646
    %v4838 = vunpack.c.l.b16 %v3647
    %v4839 = vunpack.c.h.b16 %v3647
    %v4840 = vunpack.c.l.b16 %v3648
    %v4841 = vunpack.c.h.b16 %v3648
    %v4842 = vunpack.c.l.b16 %v3649
    %v4843 = vunpack.c.l.b16 %v3650
    %v4844 = vunpack.c.h.b16 %v3650
    %v4845 = vunpack.c.l.b16 %v3651
    %v4846 = vunpack.c.h.b16 %v3651
    %v4847 = vunpack.c.l.b16 %v3652
    %v4848 = vunpack.c.h.b16 %v3652
    %v4849 = vunpack.c.l.b16 %v3653
    %v4850 = vunpack.c.l.b16 %v3654
    %v4851 = vunpack.c.h.b16 %v3654
    %v4852 = vunpack.c.l.b16 %v3655
    %v4853 = vunpack.c.h.b16 %v3655
    %v4854 = vunpack.c.l.b16 %v3656
    %v4855 = vunpack.c.h.b16 %v3656
    %v4856 = vunpack.c.l.b16 %v3657
    %v4857 = vunpack.c.l.b16 %v3658
    %v4858 = vunpack.c.h.b16 %v3658
    %v4859 = vunpack.c.l.b16 %v3659
    %v4860 = vunpack.c.h.b16 %v3659
    %v4861 = vunpack.c.l.b16 %v3660
    %v4862 = vunpack.c.h.b16 %v3660
    %v4863 = vunpack.c.l.b16 %v3661
    %v4864 = vunpack.c.l.b16 %v3662
    %v4865 = vunpack.c.h.b16 %v3662
    %v4866 = vunpack.c.l.b16 %v3663
    %v4867 = vunpack.c.h.b16 %v3663
    %v4868 = vunpack.c.l.b16 %v3664
    %v4869 = vunpack.c.h.b16 %v3664
    %v4870 = vunpack.c.l.b16 %v3665
    %v4871 = vunpack.c.l.b16 %v3666
    %v4872 = vunpack.c.h.b16 %v3666
    %v4873 = vunpack.c.l.b16 %v3667
    %v4874 = vunpack.c.h.b16 %v3667
    %v4875 = vunpack.c.l.b16 %v3668
    %v4876 = vunpack.c.h.b16 %v3668
    %v4877 = vunpack.c.l.b16 %v3669
    %v4878 = vunpack.c.l.b16 %v3670
    %v4879 = vunpack.c.h.b16 %v3670
    %v4880 = vunpack.c.l.b16 %v3671
    %v4881 = vunpack.c.h.b16 %v3671
    %v4882 = vunpack.c.l.b16 %v3672
    %v4883 = vunpack.c.h.b16 %v3672
    %v4884 = vunpack.c.l.b16 %v3673
    %v4885 = vunpack.c.l.b16 %v3674
    %v4886 = vunpack.c.h.b16 %v3674
    %v4887 = vunpack.c.l.b16 %v3675
    %v4888 = vunpack.c.h.b16 %v3675
    %v4889 = vunpack.c.l.b16 %v3676
    %v4890 = vunpack.c.h.b16 %v3676
    %v4891 = vunpack.c.l.b16 %v3677
    %v4892 = vunpack.c.l.b16 %v3678
    %v4893 = vunpack.c.h.b16 %v3678
    %v4894 = vunpack.c.l.b16 %v3679
    %v4895 = vunpack.c.h.b16 %v3679
    %v4896 = vunpack.c.l.b16 %v3680
    %v4897 = vunpack.c.h.b16 %v3680
    %v4898 = vunpack.c.l.b16 %v3681
    %v4899 = vunpack.c.l.b16 %v3682
    %v4900 = vunpack.c.h.b16 %v3682
    %v4901 = vunpack.c.l.b16 %v3683
    %v4902 = vunpack.c.h.b16 %v3683
    %v4903 = vunpack.c.l.b16 %v3684
    %v4904 = vunpack.c.h.b16 %v3684
    %v4905 = vunpack.c.l.b16 %v3685
    %v4906 = vunpack.c.l.b16 %v3686
    %v4907 = vunpack.c.h.b16 %v3686
    %v4908 = vunpack.c.l.b16 %v3687
    %v4909 = vunpack.c.h.b16 %v3687
    %v4910 = vunpack.c.l.b16 %v3688
    %v4911 = vunpack.c.h.b16 %v3688
    %v4912 = vunpack.c.l.b16 %v3689
    %v4913 = vunpack.c.l.b16 %v3690
    %v4914 = vunpack.c.h.b16 %v3690
    %v4915 = vunpack.c.l.b16 %v3691
    %v4916 = vunpack.c.h.b16 %v3691
    %v4917 = vunpack.c.l.b16 %v3692
    %v4918 = vunpack.c.h.b16 %v3692
    %v4919 = vunpack.c.l.b16 %v3693
    %v4920 = vunpack.c.l.b16 %v3694
    %v4921 = vunpack.c.h.b16 %v3694
    %v4922 = vunpack.c.l.b16 %v3695
    %v4923 = vunpack.c.h.b16 %v3695
    %v4924 = vunpack.c.l.b16 %v3696
    %v4925 = vunpack.c.h.b16 %v3696
    %v4926 = vunpack.c.l.b16 %v3697
    %v4927 = vunpack.c.l.b16 %v3698
    %v4928 = vunpack.c.h.b16 %v3698
    %v4929 = vunpack.c.l.b16 %v3699
    %v4930 = vunpack.c.h.b16 %v3699
    %v4931 = vunpack.c.l.b16 %v3700
    %v4932 = vunpack.c.h.b16 %v3700
    %v4933 = vunpack.c.l.b16 %v3701
    %v4934 = vunpack.c.l.b16 %v3702
    %v4935 = vunpack.c.h.b16 %v3702
    %v4936 = vunpack.c.l.b16 %v3703
    %v4937 = vunpack.c.h.b16 %v3703
    %v4938 = vunpack.c.l.b16 %v3704
    %v4939 = vunpack.c.h.b16 %v3704
    %v4940 = vunpack.c.l.b16 %v3705
    %v4941 = vunpack.c.l.b16 %v3706
    %v4942 = vunpack.c.h.b16 %v3706
    %v4943 = vunpack.c.l.b16 %v3707
    %v4944 = vunpack.c.h.b16 %v3707
    %v4945 = vunpack.c.l.b16 %v3708
    %v4946 = vunpack.c.h.b16 %v3708
    %v4947 = vunpack.c.l.b16 %v3709
    %v4948 = vunpack.c.l.b16 %v3710
    %v4949 = vunpack.c.h.b16 %v3710
    %v4950 = vunpack.c.l.b16 %v3711
    %v4951 = vunpack.c.h.b16 %v3711
    %v4952 = vunpack.c.l.b16 %v3712
    %v4953 = vunpack.c.h.b16 %v3712
    %v4954 = vunpack.c.l.b16 %v3713
    %v4955 = vunpack.c.l.b16 %v3714
    %v4956 = vunpack.c.h.b16 %v3714
    %v4957 = vunpack.c.l.b16 %v3715
    %v4958 = vunpack.c.h.b16 %v3715
    %v4959 = vunpack.c.l.b16 %v3716
    %v4960 = vunpack.c.h.b16 %v3716
    %v4961 = vunpack.c.l.b16 %v3717
    %v4962 = vunpack.c.l.b16 %v3718
    %v4963 = vunpack.c.h.b16 %v3718
    %v4964 = vunpack.c.l.b16 %v3719
    %v4965 = vunpack.c.h.b16 %v3719
    %v4966 = vunpack.c.l.b16 %v3720
    %v4967 = vunpack.c.h.b16 %v3720
    %v4968 = vunpack.c.l.b16 %v3721
    %v4969 = vunpack.c.l.b16 %v3722
    %v4970 = vunpack.c.h.b16 %v3722
    %v4971 = vunpack.c.l.b16 %v3723
    %v4972 = vunpack.c.h.b16 %v3723
    %v4973 = vunpack.c.l.b16 %v3724
    %v4974 = vunpack.c.h.b16 %v3724
    %v4975 = vunpack.c.l.b16 %v3725
    %v4976 = vunpack.c.l.b16 %v3726
    %v4977 = vunpack.c.h.b16 %v3726
    %v4978 = vunpack.c.l.b16 %v3727
    %v4979 = vunpack.c.h.b16 %v3727
    %v4980 = vunpack.c.l.b16 %v3728
    %v4981 = vunpack.c.h.b16 %v3728
    %v4982 = vunpack.c.l.b16 %v3729
    %v4983 = vunpack.c.l.b16 %v3730
    %v4984 = vunpack.c.h.b16 %v3730
    %v4985 = vunpack.c.l.b16 %v3731
    %v4986 = vunpack.c.h.b16 %v3731
    %v4987 = vunpack.c.l.b16 %v3732
    %v4988 = vunpack.c.h.b16 %v3732
    %v4989 = vunpack.c.l.b16 %v3733
    %v4990 = vunpack.c.l.b16 %v3734
    %v4991 = vunpack.c.h.b16 %v3734
    %v4992 = vunpack.c.l.b16 %v3735
    %v4993 = vunpack.c.h.b16 %v3735
    %v4994 = vunpack.c.l.b16 %v3736
    %v4995 = vunpack.c.h.b16 %v3736
    %v4996 = vunpack.c.l.b16 %v3737
    %v4997 = vunpack.c.l.b16 %v3738
    %v4998 = vunpack.c.h.b16 %v3738
    %v4999 = vunpack.c.l.b16 %v3739
    %v5000 = vunpack.c.h.b16 %v3739
    %v5001 = vunpack.c.l.b16 %v3740
    %v5002 = vunpack.c.h.b16 %v3740
    %v5003 = vunpack.c.l.b16 %v3741
    %v5004 = vunpack.c.l.b16 %v3742
    %v5005 = vunpack.c.h.b16 %v3742
    %v5006 = vunpack.c.l.b16 %v3743
    %v5007 = vunpack.c.h.b16 %v3743
    %v5008 = vunpack.c.l.b16 %v3744
    %v5009 = vunpack.c.h.b16 %v3744
    %v5010 = vunpack.c.l.b16 %v3745
    %v5011 = vunpack.c.l.b16 %v3746
    %v5012 = vunpack.c.h.b16 %v3746
    %v5013 = vunpack.c.l.b16 %v3747
    %v5014 = vunpack.c.h.b16 %v3747
    %v5015 = vunpack.c.l.b16 %v3748
    %v5016 = vunpack.c.h.b16 %v3748
    %v5017 = vunpack.c.l.b16 %v3749
    %v5018 = vunpack.c.l.b16 %v3750
    %v5019 = vunpack.c.h.b16 %v3750
    %v5020 = vunpack.c.l.b16 %v3751
    %v5021 = vunpack.c.h.b16 %v3751
    %v5022 = vunpack.c.l.b16 %v3752
    %v5023 = vunpack.c.h.b16 %v3752
    %v5024 = vunpack.c.l.b16 %v3753
    %v5025 = vunpack.c.l.b16 %v3754
    %v5026 = vunpack.c.h.b16 %v3754
    %v5027 = vunpack.c.l.b16 %v3755
    %v5028 = vunpack.c.h.b16 %v3755
    %v5029 = vunpack.c.l.b16 %v3756
    %v5030 = vunpack.c.h.b16 %v3756
    %v5031 = vunpack.c.l.b16 %v3757
    %v5032 = vunpack.c.l.b16 %v3758
    %v5033 = vunpack.c.h.b16 %v3758
    %v5034 = vunpack.c.l.b16 %v3759
    %v5035 = vunpack.c.h.b16 %v3759
    %v5036 = vunpack.c.l.b16 %v3760
    %v5037 = vunpack.c.h.b16 %v3760
    %v5038 = vunpack.c.l.b16 %v3761
    %v5039 = vunpack.c.l.b16 %v3762
    %v5040 = vunpack.c.h.b16 %v3762
    %v5041 = vunpack.c.l.b16 %v3763
    %v5042 = vunpack.c.h.b16 %v3763
    %v5043 = vunpack.c.l.b16 %v3764
    %v5044 = vunpack.c.h.b16 %v3764
    %v5045 = vunpack.c.l.b16 %v3765
    %v5046 = vunpack.c.l.b16 %v3766
    %v5047 = vunpack.c.h.b16 %v3766
    %v5048 = vunpack.c.l.b16 %v3767
    %v5049 = vunpack.c.h.b16 %v3767
    %v5050 = vunpack.c.l.b16 %v3768
    %v5051 = vunpack.c.h.b16 %v3768
    %v5052 = vunpack.c.l.b16 %v3769
    %v5053 = vunpack.c.l.b16 %v3770
    %v5054 = vunpack.c.h.b16 %v3770
    %v5055 = vunpack.c.l.b16 %v3771
    %v5056 = vunpack.c.h.b16 %v3771
    %v5057 = vunpack.c.l.b16 %v3772
    %v5058 = vunpack.c.h.b16 %v3772
    %v5059 = vunpack.c.l.b16 %v3773
    %v5060 = vunpack.c.l.b16 %v3774
    %v5061 = vunpack.c.h.b16 %v3774
    %v5062 = vunpack.c.l.b16 %v3775
    %v5063 = vunpack.c.h.b16 %v3775
    %v5064 = vunpack.c.l.b16 %v3776
    %v5065 = vunpack.c.h.b16 %v3776
    %v5066 = vunpack.c.l.b16 %v3777
    %v5067 = vunpack.c.l.b16 %v3778
    %v5068 = vunpack.c.h.b16 %v3778
    %v5069 = vunpack.c.l.b16 %v3779
    %v5070 = vunpack.c.h.b16 %v3779
    %v5071 = vunpack.c.l.b16 %v3780
    %v5072 = vunpack.c.h.b16 %v3780
    %v5073 = vunpack.c.l.b16 %v3781
    %v5074 = vunpack.c.l.b16 %v3782
    %v5075 = vunpack.c.h.b16 %v3782
    %v5076 = vunpack.c.l.b16 %v3783
    %v5077 = vunpack.c.h.b16 %v3783
    %v5078 = vunpack.c.l.b16 %v3784
    %v5079 = vunpack.c.h.b16 %v3784
    %v5080 = vunpack.c.l.b16 %v3785
    %v5081 = vunpack.c.l.b16 %v3786
    %v5082 = vunpack.c.h.b16 %v3786
    %v5083 = vunpack.c.l.b16 %v3787
    %v5084 = vunpack.c.h.b16 %v3787
    %v5085 = vunpack.c.l.b16 %v3788
    %v5086 = vunpack.c.h.b16 %v3788
    %v5087 = vunpack.c.l.b16 %v3789
    %v5088 = vunpack.c.l.b16 %v3790
    %v5089 = vunpack.c.h.b16 %v3790
    %v5090 = vunpack.c.l.b16 %v3791
    %v5091 = vunpack.c.h.b16 %v3791
    %v5092 = vunpack.c.l.b16 %v3792
    %v5093 = vunpack.c.h.b16 %v3792
    %v5094 = vunpack.c.l.b16 %v3793
    %v5095 = vunpack.c.l.b16 %v3794
    %v5096 = vunpack.c.h.b16 %v3794
    %v5097 = vunpack.c.l.b16 %v3795
    %v5098 = vunpack.c.h.b16 %v3795
    %v5099 = vunpack.c.l.b16 %v3796
    %v5100 = vunpack.c.h.b16 %v3796
    %v5101 = vunpack.c.l.b16 %v3797
    %v5102 = vunpack.c.l.b16 %v3798
    %v5103 = vunpack.c.h.b16 %v3798
    %v5104 = vunpack.c.l.b16 %v3799
    %v5105 = vunpack.c.h.b16 %v3799
    %v5106 = vunpack.c.l.b16 %v3800
    %v5107 = vunpack.c.h.b16 %v3800
    %v5108 = vunpack.c.l.b16 %v3801
    %v5109 = vunpack.c.l.b16 %v3802
    %v5110 = vunpack.c.h.b16 %v3802
    %v5111 = vunpack.c.l.b16 %v3803
    %v5112 = vunpack.c.h.b16 %v3803
    %v5113 = vunpack.c.l.b16 %v3804
    %v5114 = vunpack.c.h.b16 %v3804
    %v5115 = vunpack.c.l.b16 %v3805
    %v5116 = vunpack.c.l.b16 %v3806
    %v5117 = vunpack.c.h.b16 %v3806
    %v5118 = vunpack.c.l.b16 %v3807
    %v5119 = vunpack.c.h.b16 %v3807
    %v5120 = vunpack.c.l.b16 %v3808
    %v5121 = vunpack.c.h.b16 %v3808
    %v5122 = vunpack.c.l.b16 %v3809
    %v5123 = vunpack.c.l.b16 %v3810
    %v5124 = vunpack.c.h.b16 %v3810
    %v5125 = vunpack.c.l.b16 %v3811
    %v5126 = vunpack.c.h.b16 %v3811
    %v5127 = vunpack.c.l.b16 %v3812
    %v5128 = vunpack.c.h.b16 %v3812
    %v5129 = vunpack.c.l.b16 %v3813
    %v5130 = vunpack.c.l.b16 %v3814
    %v5131 = vunpack.c.h.b16 %v3814
    %v5132 = vunpack.c.l.b16 %v3815
    %v5133 = vunpack.c.h.b16 %v3815
    %v5134 = vunpack.c.l.b16 %v3816
    %v5135 = vunpack.c.h.b16 %v3816
    %v5136 = vunpack.c.l.b16 %v3817
    %v5137 = vunpack.c.l.b16 %v3818
    %v5138 = vunpack.c.h.b16 %v3818
    %v5139 = vunpack.c.l.b16 %v3819
    %v5140 = vunpack.c.h.b16 %v3819
    %v5141 = vunpack.c.l.b16 %v3820
    %v5142 = vunpack.c.h.b16 %v3820
    %v5143 = vunpack.c.l.b16 %v3821
    %v5144 = vunpack.c.l.b16 %v3822
    %v5145 = vunpack.c.h.b16 %v3822
    %v5146 = vunpack.c.l.b16 %v3823
    %v5147 = vunpack.c.h.b16 %v3823
    %v5148 = vunpack.c.l.b16 %v3824
    %v5149 = vunpack.c.h.b16 %v3824
    %v5150 = vunpack.c.l.b16 %v3825
    %v5151 = vunpack.c.l.b16 %v3826
    %v5152 = vunpack.c.h.b16 %v3826
    %v5153 = vunpack.c.l.b16 %v3827
    %v5154 = vunpack.c.h.b16 %v3827
    %v5155 = vunpack.c.l.b16 %v3828
    %v5156 = vunpack.c.h.b16 %v3828
    %v5157 = vunpack.c.l.b16 %v3829
    %v5158 = vunpack.c.l.b16 %v3830
    %v5159 = vunpack.c.h.b16 %v3830
    %v5160 = vunpack.c.l.b16 %v3831
    %v5161 = vunpack.c.h.b16 %v3831
    %v5162 = vunpack.c.l.b16 %v3832
    %v5163 = vunpack.c.h.b16 %v3832
    %v5164 = vunpack.c.l.b16 %v3833
    %v5165 = vunpack.c.l.b16 %v3834
    %v5166 = vunpack.c.h.b16 %v3834
    %v5167 = vunpack.c.l.b16 %v3835
    %v5168 = vunpack.c.h.b16 %v3835
    %v5169 = vunpack.c.l.b16 %v3836
    %v5170 = vunpack.c.h.b16 %v3836
    %v5171 = vunpack.c.l.b16 %v3837
    %v5172 = vunpack.c.l.b16 %v3838
    %v5173 = vunpack.c.h.b16 %v3838
    %v5174 = vunpack.c.l.b16 %v3839
    %v5175 = vunpack.c.h.b16 %v3839
    %v5176 = vunpack.c.l.b16 %v3840
    %v5177 = vunpack.c.h.b16 %v3840
    %v5178 = vunpack.c.l.b16 %v3841
    %v5179 = vunpack.c.l.b16 %v3842
    %v5180 = vunpack.c.h.b16 %v3842
    %v5181 = vunpack.c.l.b16 %v3843
    %v5182 = vunpack.c.h.b16 %v3843
    %v5183 = vunpack.c.l.b16 %v3844
    %v5184 = vunpack.c.h.b16 %v3844
    %v5185 = vunpack.c.l.b16 %v3845
    %v5186 = vunpack.c.l.b16 %v3846
    %v5187 = vunpack.c.h.b16 %v3846
    %v5188 = vunpack.c.l.b16 %v3847
    %v5189 = vunpack.c.h.b16 %v3847
    %v5190 = vunpack.c.l.b16 %v3848
    %v5191 = vunpack.c.h.b16 %v3848
    %v5192 = vunpack.c.l.b16 %v3849
    %v5193 = vunpack.c.l.b16 %v3850
    %v5194 = vunpack.c.h.b16 %v3850
    %v5195 = vunpack.c.l.b16 %v3851
    %v5196 = vunpack.c.h.b16 %v3851
    %v5197 = vunpack.c.l.b16 %v3852
    %v5198 = vunpack.c.h.b16 %v3852
    %v5199 = vunpack.c.l.b16 %v3853
    %v5200 = vunpack.c.l.b16 %v3854
    %v5201 = vunpack.c.h.b16 %v3854
    %v5202 = vunpack.c.l.b16 %v3855
    %v5203 = vunpack.c.h.b16 %v3855
    %v5204 = vunpack.c.l.b16 %v3856
    %v5205 = vunpack.c.h.b16 %v3856
    %v5206 = vunpack.c.l.b16 %v3857
    %v5207 = vunpack.c.l.b16 %v3858
    %v5208 = vunpack.c.h.b16 %v3858
    %v5209 = vunpack.c.l.b16 %v3859
    %v5210 = vunpack.c.h.b16 %v3859
    %v5211 = vunpack.c.l.b16 %v3860
    %v5212 = vunpack.c.h.b16 %v3860
    %v5213 = vunpack.c.l.b16 %v3861
    %v5214 = vunpack.c.l.b16 %v3862
    %v5215 = vunpack.c.h.b16 %v3862
    %v5216 = vunpack.c.l.b16 %v3863
    %v5217 = vunpack.c.h.b16 %v3863
    %v5218 = vunpack.c.l.b16 %v3864
    %v5219 = vunpack.c.h.b16 %v3864
    %v5220 = vunpack.c.l.b16 %v3865
    %v5221 = vunpack.c.l.b16 %v3866
    %v5222 = vunpack.c.h.b16 %v3866
    %v5223 = vunpack.c.l.b16 %v3867
    %v5224 = vunpack.c.h.b16 %v3867
    %v5225 = vunpack.c.l.b16 %v3868
    %v5226 = vunpack.c.h.b16 %v3868
    %v5227 = vunpack.c.l.b16 %v3869
    %v5228 = vunpack.c.l.b16 %v3870
    %v5229 = vunpack.c.h.b16 %v3870
    %v5230 = vunpack.c.l.b16 %v3871
    %v5231 = vunpack.c.h.b16 %v3871
    %v5232 = vunpack.c.l.b16 %v3872
    %v5233 = vunpack.c.h.b16 %v3872
    %v5234 = vunpack.c.l.b16 %v3873
    %v5235 = vunpack.c.l.b16 %v3874
    %v5236 = vunpack.c.h.b16 %v3874
    %v5237 = vunpack.c.l.b16 %v3875
    %v5238 = vunpack.c.h.b16 %v3875
    %v5239 = vunpack.c.l.b16 %v3876
    %v5240 = vunpack.c.h.b16 %v3876
    %v5241 = vunpack.c.l.b16 %v3877
    %v5242 = vunpack.c.l.b16 %v3878
    %v5243 = vunpack.c.h.b16 %v3878
    %v5244 = vunpack.c.l.b16 %v3879
    %v5245 = vunpack.c.h.b16 %v3879
    %v5246 = vunpack.c.l.b16 %v3880
    %v5247 = vunpack.c.h.b16 %v3880
    %v5248 = vunpack.c.l.b16 %v3881
    %v5249 = vunpack.c.l.b16 %v3882
    %v5250 = vunpack.c.h.b16 %v3882
    %v5251 = vunpack.c.l.b16 %v3883
    %v5252 = vunpack.c.h.b16 %v3883
    %v5253 = vunpack.c.l.b16 %v3884
    %v5254 = vunpack.c.h.b16 %v3884
    %v5255 = vunpack.c.l.b16 %v3885
    %v5256 = vunpack.c.l.b16 %v3886
    %v5257 = vunpack.c.h.b16 %v3886
    %v5258 = vunpack.c.l.b16 %v3887
    %v5259 = vunpack.c.h.b16 %v3887
    %v5260 = vunpack.c.l.b16 %v3888
    %v5261 = vunpack.c.h.b16 %v3888
    %v5262 = vunpack.c.l.b16 %v3889
    %v5263 = vunpack.c.l.b16 %v3890
    %v5264 = vunpack.c.h.b16 %v3890
    %v5265 = vunpack.c.l.b16 %v3891
    %v5266 = vunpack.c.h.b16 %v3891
    %v5267 = vunpack.c.l.b16 %v3892
    %v5268 = vunpack.c.h.b16 %v3892
    %v5269 = vunpack.c.l.b16 %v3893
    %v5270 = vunpack.c.l.b16 %v3894
    %v5271 = vunpack.c.h.b16 %v3894
    %v5272 = vunpack.c.l.b16 %v3895
    %v5273 = vunpack.c.h.b16 %v3895
    %v5274 = vunpack.c.l.b16 %v3896
    %v5275 = vunpack.c.h.b16 %v3896
    %v5276 = vunpack.c.l.b16 %v3897
    %v5277 = vunpack.c.l.b16 %v3898
    %v5278 = vunpack.c.h.b16 %v3898
    %v5279 = vunpack.c.l.b16 %v3899
    %v5280 = vunpack.c.h.b16 %v3899
    %v5281 = vunpack.c.l.b16 %v3900
    %v5282 = vunpack.c.h.b16 %v3900
    %v5283 = vunpack.c.l.b16 %v3901
    %v5284 = vunpack.c.l.b16 %v3902
    %v5285 = vunpack.c.h.b16 %v3902
    %v5286 = vunpack.c.l.b16 %v3903
    %v5287 = vunpack.c.h.b16 %v3903
    %v5288 = vunpack.c.l.b16 %v3904
    %v5289 = vunpack.c.h.b16 %v3904
    %v5290 = vunpack.c.l.b16 %v3905
    %v5291 = vunpack.c.l.b16 %v3906
    %v5292 = vunpack.c.h.b16 %v3906
    %v5293 = vunpack.c.l.b16 %v3907
    %v5294 = vunpack.c.h.b16 %v3907
    %v5295 = vunpack.c.l.b16 %v3908
    %v5296 = vunpack.c.h.b16 %v3908
    %v5297 = vunpack.c.l.b16 %v3909
    %v5298 = vunpack.c.l.b16 %v3910
    %v5299 = vunpack.c.h.b16 %v3910
    %v5300 = vunpack.c.l.b16 %v3911
    %v5301 = vunpack.c.h.b16 %v3911
    %v5302 = vunpack.c.l.b16 %v3912
    %v5303 = vunpack.c.h.b16 %v3912
    %v5304 = vunpack.c.l.b16 %v3913
    %v5305 = vunpack.c.l.b16 %v3914
    %v5306 = vunpack.c.h.b16 %v3914
    %v5307 = vunpack.c.l.b16 %v3915
    %v5308 = vunpack.c.h.b16 %v3915
    %v5309 = vunpack.c.l.b16 %v3916
    %v5310 = vunpack.c.h.b16 %v3916
    %v5311 = vunpack.c.l.b16 %v3917
    %v5312 = vunpack.c.l.b16 %v3918
    %v5313 = vunpack.c.h.b16 %v3918
    %v5314 = vunpack.c.l.b16 %v3919
    %v5315 = vunpack.c.h.b16 %v3919
    %v5316 = vunpack.c.l.b16 %v3920
    %v5317 = vunpack.c.h.b16 %v3920
    %v5318 = vunpack.c.l.b16 %v3921
    %v5319 = vunpack.c.l.b16 %v3922
    %v5320 = vunpack.c.h.b16 %v3922
    %v5321 = vunpack.c.l.b16 %v3923
    %v5322 = vunpack.c.h.b16 %v3923
    %v5323 = vunpack.c.l.b16 %v3924
    %v5324 = vunpack.c.h.b16 %v3924
    %v5325 = vunpack.c.l.b16 %v3925
    %v5326 = vunpack.c.l.b16 %v3926
    %v5327 = vunpack.c.h.b16 %v3926
    %v5328 = vunpack.c.l.b16 %v3927
    %v5329 = vunpack.c.h.b16 %v3927
    %v5330 = vunpack.c.l.b16 %v3928
    %v5331 = vunpack.c.h.b16 %v3928
    %v5332 = vunpack.c.l.b16 %v3929
    %v5333 = vunpack.c.l.b16 %v3930
    %v5334 = vunpack.c.h.b16 %v3930
    %v5335 = vunpack.c.l.b16 %v3931
    %v5336 = vunpack.c.h.b16 %v3931
    %v5337 = vunpack.c.l.b16 %v3932
    %v5338 = vunpack.c.h.b16 %v3932
    %v5339 = vunpack.c.l.b16 %v3933
    %v5340 = vunpack.c.l.b16 %v3934
    %v5341 = vunpack.c.h.b16 %v3934
    %v5342 = vunpack.c.l.b16 %v3935
    %v5343 = vunpack.c.h.b16 %v3935
    %v5344 = vunpack.c.l.b16 %v3936
    %v5345 = vunpack.c.h.b16 %v3936
    %v5346 = vunpack.c.l.b16 %v3937
    %v5347 = vunpack.c.l.b16 %v3938
    %v5348 = vunpack.c.h.b16 %v3938
    %v5349 = vunpack.c.l.b16 %v3939
    %v5350 = vunpack.c.h.b16 %v3939
    %v5351 = vunpack.c.l.b16 %v3940
    %v5352 = vunpack.c.h.b16 %v3940
    %v5353 = vunpack.c.l.b16 %v3941
    %v5354 = vunpack.c.l.b16 %v3942
    %v5355 = vunpack.c.h.b16 %v3942
    %v5356 = vunpack.c.l.b16 %v3943
    %v5357 = vunpack.c.h.b16 %v3943
    %v5358 = vunpack.c.l.b16 %v3944
    %v5359 = vunpack.c.h.b16 %v3944
    %v5360 = vunpack.c.l.b16 %v3945
    %v5361 = vunpack.c.l.b16 %v3946
    %v5362 = vunpack.c.h.b16 %v3946
    %v5363 = vunpack.c.l.b16 %v3947
    %v5364 = vunpack.c.h.b16 %v3947
    %v5365 = vunpack.c.l.b16 %v3948
    %v5366 = vunpack.c.h.b16 %v3948
    %v5367 = vunpack.c.l.b16 %v3949
    %v5368 = vunpack.c.l.b16 %v3950
    %v5369 = vunpack.c.h.b16 %v3950
    %v5370 = vunpack.c.l.b16 %v3951
    %v5371 = vunpack.c.h.b16 %v3951
    %v5372 = vunpack.c.l.b16 %v3952
    %v5373 = vunpack.c.h.b16 %v3952
    %v5374 = vunpack.c.l.b16 %v3953
    %v5375 = vunpack.c.l.b16 %v3954
    %v5376 = vunpack.c.h.b16 %v3954
    %v5377 = vunpack.c.l.b16 %v3955
    %v5378 = vunpack.c.h.b16 %v3955
    %v5379 = vunpack.c.l.b16 %v3956
    %v5380 = vunpack.c.h.b16 %v3956
    %v5381 = vunpack.c.l.b16 %v3957
    %v5382 = vunpack.c.l.b16 %v3958
    %v5383 = vunpack.c.h.b16 %v3958
    %v5384 = vunpack.c.l.b16 %v3959
    %v5385 = vunpack.c.h.b16 %v3959
    %v5386 = vunpack.c.l.b16 %v3960
    %v5387 = vunpack.c.h.b16 %v3960
    %v5388 = vunpack.c.l.b16 %v3961
    %v5389 = vunpack.c.l.b16 %v3962
    %v5390 = vunpack.c.h.b16 %v3962
    %v5391 = vunpack.c.l.b16 %v3963
    %v5392 = vunpack.c.h.b16 %v3963
    %v5393 = vunpack.c.l.b16 %v3964
    %v5394 = vunpack.c.h.b16 %v3964
    %v5395 = vunpack.c.l.b16 %v3965
    %v5396 = vunpack.c.l.b16 %v3966
    %v5397 = vunpack.c.h.b16 %v3966
    %v5398 = vunpack.c.l.b16 %v3967
    %v5399 = vunpack.c.h.b16 %v3967
    %v5400 = vunpack.c.l.b16 %v3968
    %v5401 = vunpack.c.h.b16 %v3968
    %v5402 = vunpack.c.l.b16 %v3969
    %v5403 = vunpack.c.l.b16 %v3970
    %v5404 = vunpack.c.h.b16 %v3970
    %v5405 = vunpack.c.l.b16 %v3971
    %v5406 = vunpack.c.h.b16 %v3971
    %v5407 = vunpack.c.l.b16 %v3972
    %v5408 = vunpack.c.h.b16 %v3972
    %v5409 = vunpack.c.l.b16 %v3973
    %v5410 = vunpack.c.l.b16 %v3974
    %v5411 = vunpack.c.h.b16 %v3974
    %v5412 = vunpack.c.l.b16 %v3975
    %v5413 = vunpack.c.h.b16 %v3975
    %v5414 = vunpack.c.l.b16 %v3976
    %v5415 = vunpack.c.h.b16 %v3976
    %v5416 = vunpack.c.l.b16 %v3977
    %v5417 = vunpack.c.l.b16 %v3978
    %v5418 = vunpack.c.h.b16 %v3978
    %v5419 = vunpack.c.l.b16 %v3979
    %v5420 = vunpack.c.h.b16 %v3979
    %v5421 = vunpack.c.l.b16 %v3980
    %v5422 = vunpack.c.h.b16 %v3980
    %v5423 = vunpack.c.l.b16 %v3981
    %v5424 = vunpack.c.l.b16 %v3982
    %v5425 = vunpack.c.h.b16 %v3982
    %v5426 = vunpack.c.l.b16 %v3983
    %v5427 = vunpack.c.h.b16 %v3983
    %v5428 = vunpack.c.l.b16 %v3984
    %v5429 = vunpack.c.h.b16 %v3984
    %v5430 = vunpack.c.l.b16 %v3985
    %v5431 = vunpack.c.l.b16 %v3986
    %v5432 = vunpack.c.h.b16 %v3986
    %v5433 = vunpack.c.l.b16 %v3987
    %v5434 = vunpack.c.h.b16 %v3987
    %v5435 = vunpack.c.l.b16 %v3988
    %v5436 = vunpack.c.h.b16 %v3988
    %v5437 = vunpack.c.l.b16 %v3989
    %v5438 = vpack.c.b16 %v4549, %v4542
    %v5439 = vpack.c.b16 %v4550, %v4543
    %v5440 = vpack.c.b16 %v4551, %v4544
    %v5441 = vpack.c.b16 %v4552, %v4545
    %v5442 = vpack.c.b16 %v4553, %v4546
    %v5443 = vpack.c.b16 %v4554, %v4547
    %v5444 = vpack.c.b16 %v4555, %v4548
    %v5445 = vpack.c.b16 %v4563, %v4556
    %v5446 = vpack.c.b16 %v4564, %v4557
    %v5447 = vpack.c.b16 %v4565, %v4558
    %v5448 = vpack.c.b16 %v4566, %v4559
    %v5449 = vpack.c.b16 %v4567, %v4560
    %v5450 = vpack.c.b16 %v4568, %v4561
    %v5451 = vpack.c.b16 %v4569, %v4562
    %v5452 = vpack.c.b16 %v4577, %v4570
    %v5453 = vpack.c.b16 %v4578, %v4571
    %v5454 = vpack.c.b16 %v4579, %v4572
    %v5455 = vpack.c.b16 %v4580, %v4573
    %v5456 = vpack.c.b16 %v4581, %v4574
    %v5457 = vpack.c.b16 %v4582, %v4575
    %v5458 = vpack.c.b16 %v4583, %v4576
    %v5459 = vpack.c.b16 %v4591, %v4584
    %v5460 = vpack.c.b16 %v4592, %v4585
    %v5461 = vpack.c.b16 %v4593, %v4586
    %v5462 = vpack.c.b16 %v4594, %v4587
    %v5463 = vpack.c.b16 %v4595, %v4588
    %v5464 = vpack.c.b16 %v4596, %v4589
    %v5465 = vpack.c.b16 %v4597, %v4590
    %v5466 = vpack.c.b16 %v4605, %v4598
    %v5467 = vpack.c.b16 %v4606, %v4599
    %v5468 = vpack.c.b16 %v4607, %v4600
    %v5469 = vpack.c.b16 %v4608, %v4601
    %v5470 = vpack.c.b16 %v4609, %v4602
    %v5471 = vpack.c.b16 %v4610, %v4603
    %v5472 = vpack.c.b16 %v4611, %v4604
    %v5473 = vpack.c.b16 %v4619, %v4612
    %v5474 = vpack.c.b16 %v4620, %v4613
    %v5475 = vpack.c.b16 %v4621, %v4614
    %v5476 = vpack.c.b16 %v4622, %v4615
    %v5477 = vpack.c.b16 %v4623, %v4616
    %v5478 = vpack.c.b16 %v4624, %v4617
    %v5479 = vpack.c.b16 %v4625, %v4618
    %v5480 = vpack.c.b16 %v4633, %v4626
    %v5481 = vpack.c.b16 %v4634, %v4627
    %v5482 = vpack.c.b16 %v4635, %v4628
    %v5483 = vpack.c.b16 %v4636, %v4629
    %v5484 = vpack.c.b16 %v4637, %v4630
    %v5485 = vpack.c.b16 %v4638, %v4631
    %v5486 = vpack.c.b16 %v4639, %v4632
    %v5487 = vpack.c.b16 %v4647, %v4640
    %v5488 = vpack.c.b16 %v4648, %v4641
    %v5489 = vpack.c.b16 %v4649, %v4642
    %v5490 = vpack.c.b16 %v4650, %v4643
    %v5491 = vpack.c.b16 %v4651, %v4644
    %v5492 = vpack.c.b16 %v4652, %v4645
    %v5493 = vpack.c.b16 %v4653, %v4646
    %v5494 = vpack.c.b16 %v4661, %v4654
    %v5495 = vpack.c.b16 %v4662, %v4655
    %v5496 = vpack.c.b16 %v4663, %v4656
    %v5497 = vpack.c.b16 %v4664, %v4657
    %v5498 = vpack.c.b16 %v4665, %v4658
    %v5499 = vpack.c.b16 %v4666, %v4659
    %v5500 = vpack.c.b16 %v4667, %v4660
    %v5501 = vpack.c.b16 %v4675, %v4668
    %v5502 = vpack.c.b16 %v4676, %v4669
    %v5503 = vpack.c.b16 %v4677, %v4670
    %v5504 = vpack.c.b16 %v4678, %v4671
    %v5505 = vpack.c.b16 %v4679, %v4672
    %v5506 = vpack.c.b16 %v4680, %v4673
    %v5507 = vpack.c.b16 %v4681, %v4674
    %v5508 = vpack.c.b16 %v4689, %v4682
    %v5509 = vpack.c.b16 %v4690, %v4683
    %v5510 = vpack.c.b16 %v4691, %v4684
    %v5511 = vpack.c.b16 %v4692, %v4685
    %v5512 = vpack.c.b16 %v4693, %v4686
    %v5513 = vpack.c.b16 %v4694, %v4687
    %v5514 = vpack.c.b16 %v4695, %v4688
    %v5515 = vpack.c.b16 %v4703, %v4696
    %v5516 = vpack.c.b16 %v4704, %v4697
    %v5517 = vpack.c.b16 %v4705, %v4698
    %v5518 = vpack.c.b16 %v4706, %v4699
    %v5519 = vpack.c.b16 %v4707, %v4700
    %v5520 = vpack.c.b16 %v4708, %v4701
    %v5521 = vpack.c.b16 %v4709, %v4702
    %v5522 = vpack.c.b16 %v4717, %v4710
    %v5523 = vpack.c.b16 %v4718, %v4711
    %v5524 = vpack.c.b16 %v4719, %v4712
    %v5525 = vpack.c.b16 %v4720, %v4713
    %v5526 = vpack.c.b16 %v4721, %v4714
    %v5527 = vpack.c.b16 %v4722, %v4715
    %v5528 = vpack.c.b16 %v4723, %v4716
    %v5529 = vpack.c.b16 %v4731, %v4724
    %v5530 = vpack.c.b16 %v4732, %v4725
    %v5531 = vpack.c.b16 %v4733, %v4726
    %v5532 = vpack.c.b16 %v4734, %v4727
    %v5533 = vpack.c.b16 %v4735, %v4728
    %v5534 = vpack.c.b16 %v4736, %v4729
    %v5535 = vpack.c.b16 %v4737, %v4730
    %v5536 = vpack.c.b16 %v4745, %v4738
    %v5537 = vpack.c.b16 %v4746, %v4739
    %v5538 = vpack.c.b16 %v4747, %v4740
    %v5539 = vpack.c.b16 %v4748, %v4741
    %v5540 = vpack.c.b16 %v4749, %v4742
    %v5541 = vpack.c.b16 %v4750, %v4743
    %v5542 = vpack.c.b16 %v4751, %v4744
    %v5543 = vpack.c.b16 %v4759, %v4752
    %v5544 = vpack.c.b16 %v4760, %v4753
    %v5545 = vpack.c.b16 %v4761, %v4754
    %v5546 = vpack.c.b16 %v4762, %v4755
    %v5547 = vpack.c.b16 %v4763, %v4756
    %v5548 = vpack.c.b16 %v4764, %v4757
    %v5549 = vpack.c.b16 %v4765, %v4758
    %v5550 = vpack.c.b16 %v4773, %v4766
    %v5551 = vpack.c.b16 %v4774, %v4767
    %v5552 = vpack.c.b16 %v4775, %v4768
    %v5553 = vpack.c.b16 %v4776, %v4769
    %v5554 = vpack.c.b16 %v4777, %v4770
    %v5555 = vpack.c.b16 %v4778, %v4771
    %v5556 = vpack.c.b16 %v4779, %v4772
    %v5557 = vpack.c.b16 %v4787, %v4780
    %v5558 = vpack.c.b16 %v4788, %v4781
    %v5559 = vpack.c.b16 %v4789, %v4782
    %v5560 = vpack.c.b16 %v4790, %v4783
    %v5561 = vpack.c.b16 %v4791, %v4784
    %v5562 = vpack.c.b16 %v4792, %v4785
    %v5563 = vpack.c.b16 %v4793, %v4786
    %v5564 = vpack.c.b16 %v4801, %v4794
    %v5565 = vpack.c.b16 %v4802, %v4795
    %v5566 = vpack.c.b16 %v4803, %v4796
    %v5567 = vpack.c.b16 %v4804, %v4797
    %v5568 = vpack.c.b16 %v4805, %v4798
    %v5569 = vpack.c.b16 %v4806, %v4799
    %v5570 = vpack.c.b16 %v4807, %v4800
    %v5571 = vpack.c.b16 %v4815, %v4808
    %v5572 = vpack.c.b16 %v4816, %v4809
    %v5573 = vpack.c.b16 %v4817, %v4810
    %v5574 = vpack.c.b16 %v4818, %v4811
    %v5575 = vpack.c.b16 %v4819, %v4812
    %v5576 = vpack.c.b16 %v4820, %v4813
    %v5577 = vpack.c.b16 %v4821, %v4814
    %v5578 = vpack.c.b16 %v4829, %v4822
    %v5579 = vpack.c.b16 %v4830, %v4823
    %v5580 = vpack.c.b16 %v4831, %v4824
    %v5581 = vpack.c.b16 %v4832, %v4825
    %v5582 = vpack.c.b16 %v4833, %v4826
    %v5583 = vpack.c.b16 %v4834, %v4827
    %v5584 = vpack.c.b16 %v4835, %v4828
    %v5585 = vpack.c.b16 %v4843, %v4836
    %v5586 = vpack.c.b16 %v4844, %v4837
    %v5587 = vpack.c.b16 %v4845, %v4838
    %v5588 = vpack.c.b16 %v4846, %v4839
    %v5589 = vpack.c.b16 %v4847, %v4840
    %v5590 = vpack.c.b16 %v4848, %v4841
    %v5591 = vpack.c.b16 %v4849, %v4842
    %v5592 = vpack.c.b16 %v4857, %v4850
    %v5593 = vpack.c.b16 %v4858, %v4851
    %v5594 = vpack.c.b16 %v4859, %v4852
    %v5595 = vpack.c.b16 %v4860, %v4853
    %v5596 = vpack.c.b16 %v4861, %v4854
    %v5597 = vpack.c.b16 %v4862, %v4855
    %v5598 = vpack.c.b16 %v4863, %v4856
    %v5599 = vpack.c.b16 %v4871, %v4864
    %v5600 = vpack.c.b16 %v4872, %v4865
    %v5601 = vpack.c.b16 %v4873, %v4866
    %v5602 = vpack.c.b16 %v4874, %v4867
    %v5603 = vpack.c.b16 %v4875, %v4868
    %v5604 = vpack.c.b16 %v4876, %v4869
    %v5605 = vpack.c.b16 %v4877, %v4870
    %v5606 = vpack.c.b16 %v4885, %v4878
    %v5607 = vpack.c.b16 %v4886, %v4879
    %v5608 = vpack.c.b16 %v4887, %v4880
    %v5609 = vpack.c.b16 %v4888, %v4881
    %v5610 = vpack.c.b16 %v4889, %v4882
    %v5611 = vpack.c.b16 %v4890, %v4883
    %v5612 = vpack.c.b16 %v4891, %v4884
    %v5613 = vpack.c.b16 %v4899, %v4892
    %v5614 = vpack.c.b16 %v4900, %v4893
    %v5615 = vpack.c.b16 %v4901, %v4894
    %v5616 = vpack.c.b16 %v4902, %v4895
    %v5617 = vpack.c.b16 %v4903, %v4896
    %v5618 = vpack.c.b16 %v4904, %v4897
    %v5619 = vpack.c.b16 %v4905, %v4898
    %v5620 = vpack.c.b16 %v4913, %v4906
    %v5621 = vpack.c.b16 %v4914, %v4907
    %v5622 = vpack.c.b16 %v4915, %v4908
    %v5623 = vpack.c.b16 %v4916, %v4909
    %v5624 = vpack.c.b16 %v4917, %v4910
    %v5625 = vpack.c.b16 %v4918, %v4911
    %v5626 = vpack.c.b16 %v4919, %v4912
    %v5627 = vpack.c.b16 %v4927, %v4920
    %v5628 = vpack.c.b16 %v4928, %v4921
    %v5629 = vpack.c.b16 %v4929, %v4922
    %v5630 = vpack.c.b16 %v4930, %v4923
    %v5631 = vpack.c.b16 %v4931, %v4924
    %v5632 = vpack.c.b16 %v4932, %v4925
    %v5633 = vpack.c.b16 %v4933, %v4926
    %v5634 = vpack.c.b16 %v4941, %v4934
    %v5635 = vpack.c.b16 %v4942, %v4935
    %v5636 = vpack.c.b16 %v4943, %v4936
    %v5637 = vpack.c.b16 %v4944, %v4937
    %v5638 = vpack.c.b16 %v4945, %v4938
    %v5639 = vpack.c.b16 %v4946, %v4939
    %v5640 = vpack.c.b16 %v4947, %v4940
    %v5641 = vpack.c.b16 %v4955, %v4948
    %v5642 = vpack.c.b16 %v4956, %v4949
    %v5643 = vpack.c.b16 %v4957, %v4950
    %v5644 = vpack.c.b16 %v4958, %v4951
    %v5645 = vpack.c.b16 %v4959, %v4952
    %v5646 = vpack.c.b16 %v4960, %v4953
    %v5647 = vpack.c.b16 %v4961, %v4954
    %v5648 = vpack.c.b16 %v4969, %v4962
    %v5649 = vpack.c.b16 %v4970, %v4963
    %v5650 = vpack.c.b16 %v4971, %v4964
    %v5651 = vpack.c.b16 %v4972, %v4965
    %v5652 = vpack.c.b16 %v4973, %v4966
    %v5653 = vpack.c.b16 %v4974, %v4967
    %v5654 = vpack.c.b16 %v4975, %v4968
    %v5655 = vpack.c.b16 %v4983, %v4976
    %v5656 = vpack.c.b16 %v4984, %v4977
    %v5657 = vpack.c.b16 %v4985, %v4978
    %v5658 = vpack.c.b16 %v4986, %v4979
    %v5659 = vpack.c.b16 %v4987, %v4980
    %v5660 = vpack.c.b16 %v4988, %v4981
    %v5661 = vpack.c.b16 %v4989, %v4982
    %v5662 = vpack.c.b16 %v4997, %v4990
    %v5663 = vpack.c.b16 %v4998, %v4991
    %v5664 = vpack.c.b16 %v4999, %v4992
    %v5665 = vpack.c.b16 %v5000, %v4993
    %v5666 = vpack.c.b16 %v5001, %v4994
    %v5667 = vpack.c.b16 %v5002, %v4995
    %v5668 = vpack.c.b16 %v5003, %v4996
    %v5669 = vpack.c.b16 %v5011, %v5004
    %v5670 = vpack.c.b16 %v5012, %v5005
    %v5671 = vpack.c.b16 %v5013, %v5006
    %v5672 = vpack.c.b16 %v5014, %v5007
    %v5673 = vpack.c.b16 %v5015, %v5008
    %v5674 = vpack.c.b16 %v5016, %v5009
    %v5675 = vpack.c.b16 %v5017, %v5010
    %v5676 = vpack.c.b16 %v5025, %v5018
    %v5677 = vpack.c.b16 %v5026, %v5019
    %v5678 = vpack.c.b16 %v5027, %v5020
    %v5679 = vpack.c.b16 %v5028, %v5021
    %v5680 = vpack.c.b16 %v5029, %v5022
    %v5681 = vpack.c.b16 %v5030, %v5023
    %v5682 = vpack.c.b16 %v5031, %v5024
    %v5683 = vpack.c.b16 %v5039, %v5032
    %v5684 = vpack.c.b16 %v5040, %v5033
    %v5685 = vpack.c.b16 %v5041, %v5034
    %v5686 = vpack.c.b16 %v5042, %v5035
    %v5687 = vpack.c.b16 %v5043, %v5036
    %v5688 = vpack.c.b16 %v5044, %v5037
    %v5689 = vpack.c.b16 %v5045, %v5038
    %v5690 = vpack.c.b16 %v5053, %v5046
    %v5691 = vpack.c.b16 %v5054, %v5047
    %v5692 = vpack.c.b16 %v5055, %v5048
    %v5693 = vpack.c.b16 %v5056, %v5049
    %v5694 = vpack.c.b16 %v5057, %v5050
    %v5695 = vpack.c.b16 %v5058, %v5051
    %v5696 = vpack.c.b16 %v5059, %v5052
    %v5697 = vpack.c.b16 %v5067, %v5060
    %v5698 = vpack.c.b16 %v5068, %v5061
    %v5699 = vpack.c.b16 %v5069, %v5062
    %v5700 = vpack.c.b16 %v5070, %v5063
    %v5701 = vpack.c.b16 %v5071, %v5064
    %v5702 = vpack.c.b16 %v5072, %v5065
    %v5703 = vpack.c.b16 %v5073, %v5066
    %v5704 = vpack.c.b16 %v5081, %v5074
    %v5705 = vpack.c.b16 %v5082, %v5075
    %v5706 = vpack.c.b16 %v5083, %v5076
    %v5707 = vpack.c.b16 %v5084, %v5077
    %v5708 = vpack.c.b16 %v5085, %v5078
    %v5709 = vpack.c.b16 %v5086, %v5079
    %v5710 = vpack.c.b16 %v5087, %v5080
    %v5711 = vpack.c.b16 %v5095, %v5088
    %v5712 = vpack.c.b16 %v5096, %v5089
    %v5713 = vpack.c.b16 %v5097, %v5090
    %v5714 = vpack.c.b16 %v5098, %v5091
    %v5715 = vpack.c.b16 %v5099, %v5092
    %v5716 = vpack.c.b16 %v5100, %v5093
    %v5717 = vpack.c.b16 %v5101, %v5094
    %v5718 = vpack.c.b16 %v5109, %v5102
    %v5719 = vpack.c.b16 %v5110, %v5103
    %v5720 = vpack.c.b16 %v5111, %v5104
    %v5721 = vpack.c.b16 %v5112, %v5105
    %v5722 = vpack.c.b16 %v5113, %v5106
    %v5723 = vpack.c.b16 %v5114, %v5107
    %v5724 = vpack.c.b16 %v5115, %v5108
    %v5725 = vpack.c.b16 %v5123, %v5116
    %v5726 = vpack.c.b16 %v5124, %v5117
    %v5727 = vpack.c.b16 %v5125, %v5118
    %v5728 = vpack.c.b16 %v5126, %v5119
    %v5729 = vpack.c.b16 %v5127, %v5120
    %v5730 = vpack.c.b16 %v5128, %v5121
    %v5731 = vpack.c.b16 %v5129, %v5122
    %v5732 = vpack.c.b16 %v5137, %v5130
    %v5733 = vpack.c.b16 %v5138, %v5131
    %v5734 = vpack.c.b16 %v5139, %v5132
    %v5735 = vpack.c.b16 %v5140, %v5133
    %v5736 = vpack.c.b16 %v5141, %v5134
    %v5737 = vpack.c.b16 %v5142, %v5135
    %v5738 = vpack.c.b16 %v5143, %v5136
    %v5739 = vpack.c.b16 %v5151, %v5144
    %v5740 = vpack.c.b16 %v5152, %v5145
    %v5741 = vpack.c.b16 %v5153, %v5146
    %v5742 = vpack.c.b16 %v5154, %v5147
    %v5743 = vpack.c.b16 %v5155, %v5148
    %v5744 = vpack.c.b16 %v5156, %v5149
    %v5745 = vpack.c.b16 %v5157, %v5150
    %v5746 = vpack.c.b16 %v5165, %v5158
    %v5747 = vpack.c.b16 %v5166, %v5159
    %v5748 = vpack.c.b16 %v5167, %v5160
    %v5749 = vpack.c.b16 %v5168, %v5161
    %v5750 = vpack.c.b16 %v5169, %v5162
    %v5751 = vpack.c.b16 %v5170, %v5163
    %v5752 = vpack.c.b16 %v5171, %v5164
    %v5753 = vpack.c.b16 %v5179, %v5172
    %v5754 = vpack.c.b16 %v5180, %v5173
    %v5755 = vpack.c.b16 %v5181, %v5174
    %v5756 = vpack.c.b16 %v5182, %v5175
    %v5757 = vpack.c.b16 %v5183, %v5176
    %v5758 = vpack.c.b16 %v5184, %v5177
    %v5759 = vpack.c.b16 %v5185, %v5178
    %v5760 = vpack.c.b16 %v5193, %v5186
    %v5761 = vpack.c.b16 %v5194, %v5187
    %v5762 = vpack.c.b16 %v5195, %v5188
    %v5763 = vpack.c.b16 %v5196, %v5189
    %v5764 = vpack.c.b16 %v5197, %v5190
    %v5765 = vpack.c.b16 %v5198, %v5191
    %v5766 = vpack.c.b16 %v5199, %v5192
    %v5767 = vpack.c.b16 %v5207, %v5200
    %v5768 = vpack.c.b16 %v5208, %v5201
    %v5769 = vpack.c.b16 %v5209, %v5202
    %v5770 = vpack.c.b16 %v5210, %v5203
    %v5771 = vpack.c.b16 %v5211, %v5204
    %v5772 = vpack.c.b16 %v5212, %v5205
    %v5773 = vpack.c.b16 %v5213, %v5206
    %v5774 = vpack.c.b16 %v5221, %v5214
    %v5775 = vpack.c.b16 %v5222, %v5215
    %v5776 = vpack.c.b16 %v5223, %v5216
    %v5777 = vpack.c.b16 %v5224, %v5217
    %v5778 = vpack.c.b16 %v5225, %v5218
    %v5779 = vpack.c.b16 %v5226, %v5219
    %v5780 = vpack.c.b16 %v5227, %v5220
    %v5781 = vpack.c.b16 %v5235, %v5228
    %v5782 = vpack.c.b16 %v5236, %v5229
    %v5783 = vpack.c.b16 %v5237, %v5230
    %v5784 = vpack.c.b16 %v5238, %v5231
    %v5785 = vpack.c.b16 %v5239, %v5232
    %v5786 = vpack.c.b16 %v5240, %v5233
    %v5787 = vpack.c.b16 %v5241, %v5234
    %v5788 = vpack.c.b16 %v5249, %v5242
    %v5789 = vpack.c.b16 %v5250, %v5243
    %v5790 = vpack.c.b16 %v5251, %v5244
    %v5791 = vpack.c.b16 %v5252, %v5245
    %v5792 = vpack.c.b16 %v5253, %v5246
    %v5793 = vpack.c.b16 %v5254, %v5247
    %v5794 = vpack.c.b16 %v5255, %v5248
    %v5795 = vpack.c.b16 %v5263, %v5256
    %v5796 = vpack.c.b16 %v5264, %v5257
    %v5797 = vpack.c.b16 %v5265, %v5258
    %v5798 = vpack.c.b16 %v5266, %v5259
    %v5799 = vpack.c.b16 %v5267, %v5260
    %v5800 = vpack.c.b16 %v5268, %v5261
    %v5801 = vpack.c.b16 %v5269, %v5262
    %v5802 = vpack.c.b16 %v5277, %v5270
    %v5803 = vpack.c.b16 %v5278, %v5271
    %v5804 = vpack.c.b16 %v5279, %v5272
    %v5805 = vpack.c.b16 %v5280, %v5273
    %v5806 = vpack.c.b16 %v5281, %v5274
    %v5807 = vpack.c.b16 %v5282, %v5275
    %v5808 = vpack.c.b16 %v5283, %v5276
    %v5809 = vpack.c.b16 %v5291, %v5284
    %v5810 = vpack.c.b16 %v5292, %v5285
    %v5811 = vpack.c.b16 %v5293, %v5286
    %v5812 = vpack.c.b16 %v5294, %v5287
    %v5813 = vpack.c.b16 %v5295, %v5288
    %v5814 = vpack.c.b16 %v5296, %v5289
    %v5815 = vpack.c.b16 %v5297, %v5290
    %v5816 = vpack.c.b16 %v5305, %v5298
    %v5817 = vpack.c.b16 %v5306, %v5299
    %v5818 = vpack.c.b16 %v5307, %v5300
    %v5819 = vpack.c.b16 %v5308, %v5301
    %v5820 = vpack.c.b16 %v5309, %v5302
    %v5821 = vpack.c.b16 %v5310, %v5303
    %v5822 = vpack.c.b16 %v5311, %v5304
    %v5823 = vpack.c.b16 %v5319, %v5312
    %v5824 = vpack.c.b16 %v5320, %v5313
    %v5825 = vpack.c.b16 %v5321, %v5314
    %v5826 = vpack.c.b16 %v5322, %v5315
    %v5827 = vpack.c.b16 %v5323, %v5316
    %v5828 = vpack.c.b16 %v5324, %v5317
    %v5829 = vpack.c.b16 %v5325, %v5318
    %v5830 = vpack.c.b16 %v5333, %v5326
    %v5831 = vpack.c.b16 %v5334, %v5327
    %v5832 = vpack.c.b16 %v5335, %v5328
    %v5833 = vpack.c.b16 %v5336, %v5329
    %v5834 = vpack.c.b16 %v5337, %v5330
    %v5835 = vpack.c.b16 %v5338, %v5331
    %v5836 = vpack.c.b16 %v5339, %v5332
    %v5837 = vpack.c.b16 %v5347, %v5340
    %v5838 = vpack.c.b16 %v5348, %v5341
    %v5839 = vpack.c.b16 %v5349, %v5342
    %v5840 = vpack.c.b16 %v5350, %v5343
    %v5841 = vpack.c.b16 %v5351, %v5344
    %v5842 = vpack.c.b16 %v5352, %v5345
    %v5843 = vpack.c.b16 %v5353, %v5346
    %v5844 = vpack.c.b16 %v5361, %v5354
    %v5845 = vpack.c.b16 %v5362, %v5355
    %v5846 = vpack.c.b16 %v5363, %v5356
    %v5847 = vpack.c.b16 %v5364, %v5357
    %v5848 = vpack.c.b16 %v5365, %v5358
    %v5849 = vpack.c.b16 %v5366, %v5359
    %v5850 = vpack.c.b16 %v5367, %v5360
    %v5851 = vpack.c.b16 %v5375, %v5368
    %v5852 = vpack.c.b16 %v5376, %v5369
    %v5853 = vpack.c.b16 %v5377, %v5370
    %v5854 = vpack.c.b16 %v5378, %v5371
    %v5855 = vpack.c.b16 %v5379, %v5372
    %v5856 = vpack.c.b16 %v5380, %v5373
    %v5857 = vpack.c.b16 %v5381, %v5374
    %v5858 = vpack.c.b16 %v5389, %v5382
    %v5859 = vpack.c.b16 %v5390, %v5383
    %v5860 = vpack.c.b16 %v5391, %v5384
    %v5861 = vpack.c.b16 %v5392, %v5385
    %v5862 = vpack.c.b16 %v5393, %v5386
    %v5863 = vpack.c.b16 %v5394, %v5387
    %v5864 = vpack.c.b16 %v5395, %v5388
    %v5865 = vpack.c.b16 %v5403, %v5396
    %v5866 = vpack.c.b16 %v5404, %v5397
    %v5867 = vpack.c.b16 %v5405, %v5398
    %v5868 = vpack.c.b16 %v5406, %v5399
    %v5869 = vpack.c.b16 %v5407, %v5400
    %v5870 = vpack.c.b16 %v5408, %v5401
    %v5871 = vpack.c.b16 %v5409, %v5402
    %v5872 = vpack.c.b16 %v5417, %v5410
    %v5873 = vpack.c.b16 %v5418, %v5411
    %v5874 = vpack.c.b16 %v5419, %v5412
    %v5875 = vpack.c.b16 %v5420, %v5413
    %v5876 = vpack.c.b16 %v5421, %v5414
    %v5877 = vpack.c.b16 %v5422, %v5415
    %v5878 = vpack.c.b16 %v5423, %v5416
    %v5879 = vpack.c.b16 %v5431, %v5424
    %v5880 = vpack.c.b16 %v5432, %v5425
    %v5881 = vpack.c.b16 %v5433, %v5426
    %v5882 = vpack.c.b16 %v5434, %v5427
    %v5883 = vpack.c.b16 %v5435, %v5428
    %v5884 = vpack.c.b16 %v5436, %v5429
    %v5885 = vpack.c.b16 %v5437, %v5430
    %6334 = vmatprep.subr.bf16.mxu0 %v5488
    %6335 = vmatpush1.bf16.msra.mxu0 %v5487
    %6336 = vmatprep.subr.bf16.mxu0 %v5481
    %6337 = vmatpush1.bf16.msra.mxu0 %v5480
    %6338 = vmatprep.subr.bf16.mxu0 %v5474
    %6339 = vmatpush1.bf16.msra.mxu0 %v5473
    %6340 = vmatprep.subr.bf16.mxu0 %v5467
    %6341 = vmatpush1.bf16.msra.mxu0 %v5466
    %6342 = vmatprep.subr.bf16.mxu0 %v5460
    %6343 = vmatpush1.bf16.msra.mxu0 %v5459
    %6344 = vmatprep.subr.bf16.mxu0 %v5453
    %6345 = vmatpush1.bf16.msra.mxu0 %v5452
    %6346 = vmatprep.subr.bf16.mxu0 %v5446
    %6347 = vmatpush1.bf16.msra.mxu0 %v5445
    %6348 = vmatprep.subr.bf16.mxu0 %v5439
    %6349 = vmatpush1.bf16.msra.mxu0 %v5438
    %6350 = vmatprep.subr.bf16.mxu0 %v5544
    %6351 = vmatpush2.bf16.msra.mxu0 %v5543
    %6352 = vmatprep.subr.bf16.mxu0 %v5537
    %6353 = vmatpush2.bf16.msra.mxu0 %v5536
    %6354 = vmatprep.subr.bf16.mxu0 %v5530
    %6355 = vmatpush2.bf16.msra.mxu0 %v5529
    %6356 = vmatprep.subr.bf16.mxu0 %v5523
    %6357 = vmatpush2.bf16.msra.mxu0 %v5522
    %6358 = vmatprep.subr.bf16.mxu0 %v5516
    %6359 = vmatpush2.bf16.msra.mxu0 %v5515
    %6360 = vmatprep.subr.bf16.mxu0 %v5509
    %6361 = vmatpush2.bf16.msra.mxu0 %v5508
    %6362 = vmatprep.subr.bf16.mxu0 %v5502
    %6363 = vmatpush2.bf16.msra.mxu0 %v5501
    %6364 = vmatprep.subr.bf16.mxu0 %v5495
    %6365 = vmatpush2.bf16.msra.mxu0 %v5494
    %6366 = vmatprep.mubr.bf16.mxu0 %v3471
    %6367 = vmatmul.mubr.bf16.gmra.mxu0 %v3470
    %v6368 = vpop.f32.mrf.mxu0
    %v6369 = vadd.f32 %v3998, %v6368
    %v6370 = vpop.f32.mrf.mxu0
    %v6371 = vadd.f32 %v4002, %v6370
    %v6372 = vpop.f32.mrf.mxu0
    %v6373 = vpop.f32.mrf.mxu0
    %6374 = vdwg.mxu0
    %6375 = vmatprep.subr.bf16.mxu0 %v5600
    %6376 = vmatpush1.bf16.msra.mxu0 %v5599
    %6377 = vmatprep.subr.bf16.mxu0 %v5593
    %6378 = vmatpush1.bf16.msra.mxu0 %v5592
    %6379 = vmatprep.subr.bf16.mxu0 %v5586
    %6380 = vmatpush1.bf16.msra.mxu0 %v5585
    %6381 = vmatprep.subr.bf16.mxu0 %v5579
    %6382 = vmatpush1.bf16.msra.mxu0 %v5578
    %6383 = vmatprep.subr.bf16.mxu0 %v5572
    %6384 = vmatpush1.bf16.msra.mxu0 %v5571
    %6385 = vmatprep.subr.bf16.mxu0 %v5565
    %6386 = vmatpush1.bf16.msra.mxu0 %v5564
    %6387 = vmatprep.subr.bf16.mxu0 %v5558
    %6388 = vmatpush1.bf16.msra.mxu0 %v5557
    %6389 = vmatprep.subr.bf16.mxu0 %v5551
    %6390 = vmatpush1.bf16.msra.mxu0 %v5550
    %6391 = vmatprep.subr.bf16.mxu0 %v5656
    %6392 = vmatpush2.bf16.msra.mxu0 %v5655
    %6393 = vmatprep.subr.bf16.mxu0 %v5649
    %6394 = vmatpush2.bf16.msra.mxu0 %v5648
    %6395 = vmatprep.subr.bf16.mxu0 %v5642
    %6396 = vmatpush2.bf16.msra.mxu0 %v5641
    %6397 = vmatprep.subr.bf16.mxu0 %v5635
    %6398 = vmatpush2.bf16.msra.mxu0 %v5634
    %6399 = vmatprep.subr.bf16.mxu0 %v5628
    %6400 = vmatpush2.bf16.msra.mxu0 %v5627
    %6401 = vmatprep.subr.bf16.mxu0 %v5621
    %6402 = vmatpush2.bf16.msra.mxu0 %v5620
    %6403 = vmatprep.subr.bf16.mxu0 %v5614
    %6404 = vmatpush2.bf16.msra.mxu0 %v5613
    %6405 = vmatprep.subr.bf16.mxu0 %v5607
    %6406 = vmatpush2.bf16.msra.mxu0 %v5606
    %6407 = vmatprep.mubr.bf16.mxu0 %v3473
    %6408 = vmatmul.mubr.bf16.gmra.mxu0 %v3472
    %v6409 = vpop.f32.mrf.mxu0
    %v6410 = vadd.f32 %v6369, %v6409
    %v6411 = vpop.f32.mrf.mxu0
    %v6412 = vadd.f32 %v6371, %v6411
    %v6413 = vpop.f32.mrf.mxu0
    %v6414 = vpop.f32.mrf.mxu0
    %6415 = vdwg.mxu0
    %6416 = vmatprep.subr.bf16.mxu0 %v5712
    %6417 = vmatpush1.bf16.msra.mxu0 %v5711
    %6418 = vmatprep.subr.bf16.mxu0 %v5705
    %6419 = vmatpush1.bf16.msra.mxu0 %v5704
    %6420 = vmatprep.subr.bf16.mxu0 %v5698
    %6421 = vmatpush1.bf16.msra.mxu0 %v5697
    %6422 = vmatprep.subr.bf16.mxu0 %v5691
    %6423 = vmatpush1.bf16.msra.mxu0 %v5690
    %6424 = vmatprep.subr.bf16.mxu0 %v5684
    %6425 = vmatpush1.bf16.msra.mxu0 %v5683
    %6426 = vmatprep.subr.bf16.mxu0 %v5677
    %6427 = vmatpush1.bf16.msra.mxu0 %v5676
    %6428 = vmatprep.subr.bf16.mxu0 %v5670
    %6429 = vmatpush1.bf16.msra.mxu0 %v5669
    %6430 = vmatprep.subr.bf16.mxu0 %v5663
    %6431 = vmatpush1.bf16.msra.mxu0 %v5662
    %6432 = vmatprep.subr.bf16.mxu0 %v5768
    %6433 = vmatpush2.bf16.msra.mxu0 %v5767
    %6434 = vmatprep.subr.bf16.mxu0 %v5761
    %6435 = vmatpush2.bf16.msra.mxu0 %v5760
    %6436 = vmatprep.subr.bf16.mxu0 %v5754
    %6437 = vmatpush2.bf16.msra.mxu0 %v5753
    %6438 = vmatprep.subr.bf16.mxu0 %v5747
    %6439 = vmatpush2.bf16.msra.mxu0 %v5746
    %6440 = vmatprep.subr.bf16.mxu0 %v5740
    %6441 = vmatpush2.bf16.msra.mxu0 %v5739
    %6442 = vmatprep.subr.bf16.mxu0 %v5733
    %6443 = vmatpush2.bf16.msra.mxu0 %v5732
    %6444 = vmatprep.subr.bf16.mxu0 %v5726
    %6445 = vmatpush2.bf16.msra.mxu0 %v5725
    %6446 = vmatprep.subr.bf16.mxu0 %v5719
    %6447 = vmatpush2.bf16.msra.mxu0 %v5718
    %6448 = vmatprep.mubr.bf16.mxu0 %v3475
    %6449 = vmatmul.mubr.bf16.gmra.mxu0 %v3474
    %v6450 = vpop.f32.mrf.mxu0
    %v6451 = vadd.f32 %v6410, %v6450
    %v6452 = vpop.f32.mrf.mxu0
    %v6453 = vadd.f32 %v6412, %v6452
    %v6454 = vpop.f32.mrf.mxu0
    %v6455 = vpop.f32.mrf.mxu0
    %6456 = vdwg.mxu0
    %6457 = vmatprep.subr.bf16.mxu0 %v5824
    %6458 = vmatpush1.bf16.msra.mxu0 %v5823
    %6459 = vmatprep.subr.bf16.mxu0 %v5817
    %6460 = vmatpush1.bf16.msra.mxu0 %v5816
    %6461 = vmatprep.subr.bf16.mxu0 %v5810
    %6462 = vmatpush1.bf16.msra.mxu0 %v5809
    %6463 = vmatprep.subr.bf16.mxu0 %v5803
    %6464 = vmatpush1.bf16.msra.mxu0 %v5802
    %6465 = vmatprep.subr.bf16.mxu0 %v5796
    %6466 = vmatpush1.bf16.msra.mxu0 %v5795
    %6467 = vmatprep.subr.bf16.mxu0 %v5789
    %6468 = vmatpush1.bf16.msra.mxu0 %v5788
    %6469 = vmatprep.subr.bf16.mxu0 %v5782
    %6470 = vmatpush1.bf16.msra.mxu0 %v5781
    %6471 = vmatprep.subr.bf16.mxu0 %v5775
    %6472 = vmatpush1.bf16.msra.mxu0 %v5774
    %6473 = vmatprep.subr.bf16.mxu0 %v5880
    %6474 = vmatpush2.bf16.msra.mxu0 %v5879
    %6475 = vmatprep.subr.bf16.mxu0 %v5873
    %6476 = vmatpush2.bf16.msra.mxu0 %v5872
    %6477 = vmatprep.subr.bf16.mxu0 %v5866
    %6478 = vmatpush2.bf16.msra.mxu0 %v5865
    %6479 = vmatprep.subr.bf16.mxu0 %v5859
    %6480 = vmatpush2.bf16.msra.mxu0 %v5858
    %6481 = vmatprep.subr.bf16.mxu0 %v5852
    %6482 = vmatpush2.bf16.msra.mxu0 %v5851
    %6483 = vmatprep.subr.bf16.mxu0 %v5845
    %6484 = vmatpush2.bf16.msra.mxu0 %v5844
    %6485 = vmatprep.subr.bf16.mxu0 %v5838
    %6486 = vmatpush2.bf16.msra.mxu0 %v5837
    %6487 = vmatprep.subr.bf16.mxu0 %v5831
    %6488 = vmatpush2.bf16.msra.mxu0 %v5830
    %6489 = vmatprep.mubr.bf16.mxu0 %v3477
    %6490 = vmatmul.mubr.bf16.gmra.mxu0 %v3476
    %v6491 = vpop.f32.mrf.mxu0
    %v6492 = vadd.f32 %v6451, %v6491
    %v6493 = vpop.f32.mrf.mxu0
    %v6494 = vadd.f32 %v6453, %v6493
    %v6495 = vpop.f32.mrf.mxu0
    %v6496 = vpop.f32.mrf.mxu0
    %6497 = vdwg.mxu0
    %6498 = vmatprep.subr.bf16.mxu0 %v5490
    %6499 = vmatpush1.bf16.msra.mxu0 %v5489
    %6500 = vmatprep.subr.bf16.mxu0 %v5483
    %6501 = vmatpush1.bf16.msra.mxu0 %v5482
    %6502 = vmatprep.subr.bf16.mxu0 %v5476
    %6503 = vmatpush1.bf16.msra.mxu0 %v5475
    %6504 = vmatprep.subr.bf16.mxu0 %v5469
    %6505 = vmatpush1.bf16.msra.mxu0 %v5468
    %6506 = vmatprep.subr.bf16.mxu0 %v5462
    %6507 = vmatpush1.bf16.msra.mxu0 %v5461
    %6508 = vmatprep.subr.bf16.mxu0 %v5455
    %6509 = vmatpush1.bf16.msra.mxu0 %v5454
    %6510 = vmatprep.subr.bf16.mxu0 %v5448
    %6511 = vmatpush1.bf16.msra.mxu0 %v5447
    %6512 = vmatprep.subr.bf16.mxu0 %v5441
    %6513 = vmatpush1.bf16.msra.mxu0 %v5440
    %6514 = vmatprep.subr.bf16.mxu0 %v5546
    %6515 = vmatpush2.bf16.msra.mxu0 %v5545
    %6516 = vmatprep.subr.bf16.mxu0 %v5539
    %6517 = vmatpush2.bf16.msra.mxu0 %v5538
    %6518 = vmatprep.subr.bf16.mxu0 %v5532
    %6519 = vmatpush2.bf16.msra.mxu0 %v5531
    %6520 = vmatprep.subr.bf16.mxu0 %v5525
    %6521 = vmatpush2.bf16.msra.mxu0 %v5524
    %6522 = vmatprep.subr.bf16.mxu0 %v5518
    %6523 = vmatpush2.bf16.msra.mxu0 %v5517
    %6524 = vmatprep.subr.bf16.mxu0 %v5511
    %6525 = vmatpush2.bf16.msra.mxu0 %v5510
    %6526 = vmatprep.subr.bf16.mxu0 %v5504
    %6527 = vmatpush2.bf16.msra.mxu0 %v5503
    %6528 = vmatprep.subr.bf16.mxu0 %v5497
    %6529 = vmatpush2.bf16.msra.mxu0 %v5496
    %6530 = vmatprep.mubr.bf16.mxu0 %v3471
    %6531 = vmatmul.mubr.bf16.gmra.mxu0 %v3470
    %v6532 = vpop.f32.mrf.mxu0
    %v6533 = vadd.f32 %v4006, %v6532
    %v6534 = vpop.f32.mrf.mxu0
    %v6535 = vadd.f32 %v4010, %v6534
    %v6536 = vpop.f32.mrf.mxu0
    %v6537 = vpop.f32.mrf.mxu0
    %6538 = vdwg.mxu0
    %6539 = vmatprep.subr.bf16.mxu0 %v5602
    %6540 = vmatpush1.bf16.msra.mxu0 %v5601
    %6541 = vmatprep.subr.bf16.mxu0 %v5595
    %6542 = vmatpush1.bf16.msra.mxu0 %v5594
    %6543 = vmatprep.subr.bf16.mxu0 %v5588
    %6544 = vmatpush1.bf16.msra.mxu0 %v5587
    %6545 = vmatprep.subr.bf16.mxu0 %v5581
    %6546 = vmatpush1.bf16.msra.mxu0 %v5580
    %6547 = vmatprep.subr.bf16.mxu0 %v5574
    %6548 = vmatpush1.bf16.msra.mxu0 %v5573
    %6549 = vmatprep.subr.bf16.mxu0 %v5567
    %6550 = vmatpush1.bf16.msra.mxu0 %v5566
    %6551 = vmatprep.subr.bf16.mxu0 %v5560
    %6552 = vmatpush1.bf16.msra.mxu0 %v5559
    %6553 = vmatprep.subr.bf16.mxu0 %v5553
    %6554 = vmatpush1.bf16.msra.mxu0 %v5552
    %6555 = vmatprep.subr.bf16.mxu0 %v5658
    %6556 = vmatpush2.bf16.msra.mxu0 %v5657
    %6557 = vmatprep.subr.bf16.mxu0 %v5651
    %6558 = vmatpush2.bf16.msra.mxu0 %v5650
    %6559 = vmatprep.subr.bf16.mxu0 %v5644
    %6560 = vmatpush2.bf16.msra.mxu0 %v5643
    %6561 = vmatprep.subr.bf16.mxu0 %v5637
    %6562 = vmatpush2.bf16.msra.mxu0 %v5636
    %6563 = vmatprep.subr.bf16.mxu0 %v5630
    %6564 = vmatpush2.bf16.msra.mxu0 %v5629
    %6565 = vmatprep.subr.bf16.mxu0 %v5623
    %6566 = vmatpush2.bf16.msra.mxu0 %v5622
    %6567 = vmatprep.subr.bf16.mxu0 %v5616
    %6568 = vmatpush2.bf16.msra.mxu0 %v5615
    %6569 = vmatprep.subr.bf16.mxu0 %v5609
    %6570 = vmatpush2.bf16.msra.mxu0 %v5608
    %6571 = vmatprep.mubr.bf16.mxu0 %v3473
    %6572 = vmatmul.mubr.bf16.gmra.mxu0 %v3472
    %v6573 = vpop.f32.mrf.mxu0
    %v6574 = vadd.f32 %v6533, %v6573
    %v6575 = vpop.f32.mrf.mxu0
    %v6576 = vadd.f32 %v6535, %v6575
    %v6577 = vpop.f32.mrf.mxu0
    %v6578 = vpop.f32.mrf.mxu0
    %6579 = vdwg.mxu0
    %6580 = vmatprep.subr.bf16.mxu0 %v5714
    %6581 = vmatpush1.bf16.msra.mxu0 %v5713
    %6582 = vmatprep.subr.bf16.mxu0 %v5707
    %6583 = vmatpush1.bf16.msra.mxu0 %v5706
    %6584 = vmatprep.subr.bf16.mxu0 %v5700
    %6585 = vmatpush1.bf16.msra.mxu0 %v5699
    %6586 = vmatprep.subr.bf16.mxu0 %v5693
    %6587 = vmatpush1.bf16.msra.mxu0 %v5692
    %6588 = vmatprep.subr.bf16.mxu0 %v5686
    %6589 = vmatpush1.bf16.msra.mxu0 %v5685
    %6590 = vmatprep.subr.bf16.mxu0 %v5679
    %6591 = vmatpush1.bf16.msra.mxu0 %v5678
    %6592 = vmatprep.subr.bf16.mxu0 %v5672
    %6593 = vmatpush1.bf16.msra.mxu0 %v5671
    %6594 = vmatprep.subr.bf16.mxu0 %v5665
    %6595 = vmatpush1.bf16.msra.mxu0 %v5664
    %6596 = vmatprep.subr.bf16.mxu0 %v5770
    %6597 = vmatpush2.bf16.msra.mxu0 %v5769
    %6598 = vmatprep.subr.bf16.mxu0 %v5763
    %6599 = vmatpush2.bf16.msra.mxu0 %v5762
    %6600 = vmatprep.subr.bf16.mxu0 %v5756
    %6601 = vmatpush2.bf16.msra.mxu0 %v5755
    %6602 = vmatprep.subr.bf16.mxu0 %v5749
    %6603 = vmatpush2.bf16.msra.mxu0 %v5748
    %6604 = vmatprep.subr.bf16.mxu0 %v5742
    %6605 = vmatpush2.bf16.msra.mxu0 %v5741
    %6606 = vmatprep.subr.bf16.mxu0 %v5735
    %6607 = vmatpush2.bf16.msra.mxu0 %v5734
    %6608 = vmatprep.subr.bf16.mxu0 %v5728
    %6609 = vmatpush2.bf16.msra.mxu0 %v5727
    %6610 = vmatprep.subr.bf16.mxu0 %v5721
    %6611 = vmatpush2.bf16.msra.mxu0 %v5720
    %6612 = vmatprep.mubr.bf16.mxu0 %v3475
    %6613 = vmatmul.mubr.bf16.gmra.mxu0 %v3474
    %v6614 = vpop.f32.mrf.mxu0
    %v6615 = vadd.f32 %v6574, %v6614
    %v6616 = vpop.f32.mrf.mxu0
    %v6617 = vadd.f32 %v6576, %v6616
    %v6618 = vpop.f32.mrf.mxu0
    %v6619 = vpop.f32.mrf.mxu0
    %6620 = vdwg.mxu0
    %6621 = vmatprep.subr.bf16.mxu0 %v5826
    %6622 = vmatpush1.bf16.msra.mxu0 %v5825
    %6623 = vmatprep.subr.bf16.mxu0 %v5819
    %6624 = vmatpush1.bf16.msra.mxu0 %v5818
    %6625 = vmatprep.subr.bf16.mxu0 %v5812
    %6626 = vmatpush1.bf16.msra.mxu0 %v5811
    %6627 = vmatprep.subr.bf16.mxu0 %v5805
    %6628 = vmatpush1.bf16.msra.mxu0 %v5804
    %6629 = vmatprep.subr.bf16.mxu0 %v5798
    %6630 = vmatpush1.bf16.msra.mxu0 %v5797
    %6631 = vmatprep.subr.bf16.mxu0 %v5791
    %6632 = vmatpush1.bf16.msra.mxu0 %v5790
    %6633 = vmatprep.subr.bf16.mxu0 %v5784
    %6634 = vmatpush1.bf16.msra.mxu0 %v5783
    %6635 = vmatprep.subr.bf16.mxu0 %v5777
    %6636 = vmatpush1.bf16.msra.mxu0 %v5776
    %6637 = vmatprep.subr.bf16.mxu0 %v5882
    %6638 = vmatpush2.bf16.msra.mxu0 %v5881
    %6639 = vmatprep.subr.bf16.mxu0 %v5875
    %6640 = vmatpush2.bf16.msra.mxu0 %v5874
    %6641 = vmatprep.subr.bf16.mxu0 %v5868
    %6642 = vmatpush2.bf16.msra.mxu0 %v5867
    %6643 = vmatprep.subr.bf16.mxu0 %v5861
    %6644 = vmatpush2.bf16.msra.mxu0 %v5860
    %6645 = vmatprep.subr.bf16.mxu0 %v5854
    %6646 = vmatpush2.bf16.msra.mxu0 %v5853
    %6647 = vmatprep.subr.bf16.mxu0 %v5847
    %6648 = vmatpush2.bf16.msra.mxu0 %v5846
    %6649 = vmatprep.subr.bf16.mxu0 %v5840
    %6650 = vmatpush2.bf16.msra.mxu0 %v5839
    %6651 = vmatprep.subr.bf16.mxu0 %v5833
    %6652 = vmatpush2.bf16.msra.mxu0 %v5832
    %6653 = vmatprep.mubr.bf16.mxu0 %v3477
    %6654 = vmatmul.mubr.bf16.gmra.mxu0 %v3476
    %v6655 = vpop.f32.mrf.mxu0
    %v6656 = vadd.f32 %v6615, %v6655
    %v6657 = vpop.f32.mrf.mxu0
    %v6658 = vadd.f32 %v6617, %v6657
    %v6659 = vpop.f32.mrf.mxu0
    %v6660 = vpop.f32.mrf.mxu0
    %6661 = vdwg.mxu0
    %6662 = vmatprep.subr.bf16.mxu0 %v5492
    %6663 = vmatpush1.bf16.msra.mxu0 %v5491
    %6664 = vmatprep.subr.bf16.mxu0 %v5485
    %6665 = vmatpush1.bf16.msra.mxu0 %v5484
    %6666 = vmatprep.subr.bf16.mxu0 %v5478
    %6667 = vmatpush1.bf16.msra.mxu0 %v5477
    %6668 = vmatprep.subr.bf16.mxu0 %v5471
    %6669 = vmatpush1.bf16.msra.mxu0 %v5470
    %6670 = vmatprep.subr.bf16.mxu0 %v5464
    %6671 = vmatpush1.bf16.msra.mxu0 %v5463
    %6672 = vmatprep.subr.bf16.mxu0 %v5457
    %6673 = vmatpush1.bf16.msra.mxu0 %v5456
    %6674 = vmatprep.subr.bf16.mxu0 %v5450
    %6675 = vmatpush1.bf16.msra.mxu0 %v5449
    %6676 = vmatprep.subr.bf16.mxu0 %v5443
    %6677 = vmatpush1.bf16.msra.mxu0 %v5442
    %6678 = vmatprep.subr.bf16.mxu0 %v5548
    %6679 = vmatpush2.bf16.msra.mxu0 %v5547
    %6680 = vmatprep.subr.bf16.mxu0 %v5541
    %6681 = vmatpush2.bf16.msra.mxu0 %v5540
    %6682 = vmatprep.subr.bf16.mxu0 %v5534
    %6683 = vmatpush2.bf16.msra.mxu0 %v5533
    %6684 = vmatprep.subr.bf16.mxu0 %v5527
    %6685 = vmatpush2.bf16.msra.mxu0 %v5526
    %6686 = vmatprep.subr.bf16.mxu0 %v5520
    %6687 = vmatpush2.bf16.msra.mxu0 %v5519
    %6688 = vmatprep.subr.bf16.mxu0 %v5513
    %6689 = vmatpush2.bf16.msra.mxu0 %v5512
    %6690 = vmatprep.subr.bf16.mxu0 %v5506
    %6691 = vmatpush2.bf16.msra.mxu0 %v5505
    %6692 = vmatprep.subr.bf16.mxu0 %v5499
    %6693 = vmatpush2.bf16.msra.mxu0 %v5498
    %6694 = vmatprep.mubr.bf16.mxu0 %v3471
    %6695 = vmatmul.mubr.bf16.gmra.mxu0 %v3470
    %v6696 = vpop.f32.mrf.mxu0
    %v6697 = vadd.f32 %v4014, %v6696
    %v6698 = vpop.f32.mrf.mxu0
    %v6699 = vadd.f32 %v4018, %v6698
    %v6700 = vpop.f32.mrf.mxu0
    %v6701 = vpop.f32.mrf.mxu0
    %6702 = vdwg.mxu0
    %6703 = vmatprep.subr.bf16.mxu0 %v5604
    %6704 = vmatpush1.bf16.msra.mxu0 %v5603
    %6705 = vmatprep.subr.bf16.mxu0 %v5597
    %6706 = vmatpush1.bf16.msra.mxu0 %v5596
    %6707 = vmatprep.subr.bf16.mxu0 %v5590
    %6708 = vmatpush1.bf16.msra.mxu0 %v5589
    %6709 = vmatprep.subr.bf16.mxu0 %v5583
    %6710 = vmatpush1.bf16.msra.mxu0 %v5582
    %6711 = vmatprep.subr.bf16.mxu0 %v5576
    %6712 = vmatpush1.bf16.msra.mxu0 %v5575
    %6713 = vmatprep.subr.bf16.mxu0 %v5569
    %6714 = vmatpush1.bf16.msra.mxu0 %v5568
    %6715 = vmatprep.subr.bf16.mxu0 %v5562
    %6716 = vmatpush1.bf16.msra.mxu0 %v5561
    %6717 = vmatprep.subr.bf16.mxu0 %v5555
    %6718 = vmatpush1.bf16.msra.mxu0 %v5554
    %6719 = vmatprep.subr.bf16.mxu0 %v5660
    %6720 = vmatpush2.bf16.msra.mxu0 %v5659
    %6721 = vmatprep.subr.bf16.mxu0 %v5653
    %6722 = vmatpush2.bf16.msra.mxu0 %v5652
    %6723 = vmatprep.subr.bf16.mxu0 %v5646
    %6724 = vmatpush2.bf16.msra.mxu0 %v5645
    %6725 = vmatprep.subr.bf16.mxu0 %v5639
    %6726 = vmatpush2.bf16.msra.mxu0 %v5638
    %6727 = vmatprep.subr.bf16.mxu0 %v5632
    %6728 = vmatpush2.bf16.msra.mxu0 %v5631
    %6729 = vmatprep.subr.bf16.mxu0 %v5625
    %6730 = vmatpush2.bf16.msra.mxu0 %v5624
    %6731 = vmatprep.subr.bf16.mxu0 %v5618
    %6732 = vmatpush2.bf16.msra.mxu0 %v5617
    %6733 = vmatprep.subr.bf16.mxu0 %v5611
    %6734 = vmatpush2.bf16.msra.mxu0 %v5610
    %6735 = vmatprep.mubr.bf16.mxu0 %v3473
    %6736 = vmatmul.mubr.bf16.gmra.mxu0 %v3472
    %v6737 = vpop.f32.mrf.mxu0
    %v6738 = vadd.f32 %v6697, %v6737
    %v6739 = vpop.f32.mrf.mxu0
    %v6740 = vadd.f32 %v6699, %v6739
    %v6741 = vpop.f32.mrf.mxu0
    %v6742 = vpop.f32.mrf.mxu0
    %6743 = vdwg.mxu0
    %6744 = vmatprep.subr.bf16.mxu0 %v5716
    %6745 = vmatpush1.bf16.msra.mxu0 %v5715
    %6746 = vmatprep.subr.bf16.mxu0 %v5709
    %6747 = vmatpush1.bf16.msra.mxu0 %v5708
    %6748 = vmatprep.subr.bf16.mxu0 %v5702
    %6749 = vmatpush1.bf16.msra.mxu0 %v5701
    %6750 = vmatprep.subr.bf16.mxu0 %v5695
    %6751 = vmatpush1.bf16.msra.mxu0 %v5694
    %6752 = vmatprep.subr.bf16.mxu0 %v5688
    %6753 = vmatpush1.bf16.msra.mxu0 %v5687
    %6754 = vmatprep.subr.bf16.mxu0 %v5681
    %6755 = vmatpush1.bf16.msra.mxu0 %v5680
    %6756 = vmatprep.subr.bf16.mxu0 %v5674
    %6757 = vmatpush1.bf16.msra.mxu0 %v5673
    %6758 = vmatprep.subr.bf16.mxu0 %v5667
    %6759 = vmatpush1.bf16.msra.mxu0 %v5666
    %6760 = vmatprep.subr.bf16.mxu0 %v5772
    %6761 = vmatpush2.bf16.msra.mxu0 %v5771
    %6762 = vmatprep.subr.bf16.mxu0 %v5765
    %6763 = vmatpush2.bf16.msra.mxu0 %v5764
    %6764 = vmatprep.subr.bf16.mxu0 %v5758
    %6765 = vmatpush2.bf16.msra.mxu0 %v5757
    %6766 = vmatprep.subr.bf16.mxu0 %v5751
    %6767 = vmatpush2.bf16.msra.mxu0 %v5750
    %6768 = vmatprep.subr.bf16.mxu0 %v5744
    %6769 = vmatpush2.bf16.msra.mxu0 %v5743
    %6770 = vmatprep.subr.bf16.mxu0 %v5737
    %6771 = vmatpush2.bf16.msra.mxu0 %v5736
    %6772 = vmatprep.subr.bf16.mxu0 %v5730
    %6773 = vmatpush2.bf16.msra.mxu0 %v5729
    %6774 = vmatprep.subr.bf16.mxu0 %v5723
    %6775 = vmatpush2.bf16.msra.mxu0 %v5722
    %6776 = vmatprep.mubr.bf16.mxu0 %v3475
    %6777 = vmatmul.mubr.bf16.gmra.mxu0 %v3474
    %v6778 = vpop.f32.mrf.mxu0
    %v6779 = vadd.f32 %v6738, %v6778
    %v6780 = vpop.f32.mrf.mxu0
    %v6781 = vadd.f32 %v6740, %v6780
    %v6782 = vpop.f32.mrf.mxu0
    %v6783 = vpop.f32.mrf.mxu0
    %6784 = vdwg.mxu0
    %6785 = vmatprep.subr.bf16.mxu0 %v5828
    %6786 = vmatpush1.bf16.msra.mxu0 %v5827
    %6787 = vmatprep.subr.bf16.mxu0 %v5821
    %6788 = vmatpush1.bf16.msra.mxu0 %v5820
    %6789 = vmatprep.subr.bf16.mxu0 %v5814
    %6790 = vmatpush1.bf16.msra.mxu0 %v5813
    %6791 = vmatprep.subr.bf16.mxu0 %v5807
    %6792 = vmatpush1.bf16.msra.mxu0 %v5806
    %6793 = vmatprep.subr.bf16.mxu0 %v5800
    %6794 = vmatpush1.bf16.msra.mxu0 %v5799
    %6795 = vmatprep.subr.bf16.mxu0 %v5793
    %6796 = vmatpush1.bf16.msra.mxu0 %v5792
    %6797 = vmatprep.subr.bf16.mxu0 %v5786
    %6798 = vmatpush1.bf16.msra.mxu0 %v5785
    %6799 = vmatprep.subr.bf16.mxu0 %v5779
    %6800 = vmatpush1.bf16.msra.mxu0 %v5778
    %6801 = vmatprep.subr.bf16.mxu0 %v5884
    %6802 = vmatpush2.bf16.msra.mxu0 %v5883
    %6803 = vmatprep.subr.bf16.mxu0 %v5877
    %6804 = vmatpush2.bf16.msra.mxu0 %v5876
    %6805 = vmatprep.subr.bf16.mxu0 %v5870
    %6806 = vmatpush2.bf16.msra.mxu0 %v5869
    %6807 = vmatprep.subr.bf16.mxu0 %v5863
    %6808 = vmatpush2.bf16.msra.mxu0 %v5862
    %6809 = vmatprep.subr.bf16.mxu0 %v5856
    %6810 = vmatpush2.bf16.msra.mxu0 %v5855
    %6811 = vmatprep.subr.bf16.mxu0 %v5849
    %6812 = vmatpush2.bf16.msra.mxu0 %v5848
    %6813 = vmatprep.subr.bf16.mxu0 %v5842
    %6814 = vmatpush2.bf16.msra.mxu0 %v5841
    %6815 = vmatprep.subr.bf16.mxu0 %v5835
    %6816 = vmatpush2.bf16.msra.mxu0 %v5834
    %6817 = vmatprep.mubr.bf16.mxu0 %v3477
    %6818 = vmatmul.mubr.bf16.gmra.mxu0 %v3476
    %v6819 = vpop.f32.mrf.mxu0
    %v6820 = vadd.f32 %v6779, %v6819
    %v6821 = vpop.f32.mrf.mxu0
    %v6822 = vadd.f32 %v6781, %v6821
    %v6823 = vpop.f32.mrf.mxu0
    %v6824 = vpop.f32.mrf.mxu0
    %6825 = vdwg.mxu0
    %6826 = vmatprep.subr.bf16.mxu0 0
    %6827 = vmatpush1.bf16.msra.mxu0 %v5493
    %6828 = vmatprep.subr.bf16.mxu0 0
    %6829 = vmatpush1.bf16.msra.mxu0 %v5486
    %6830 = vmatprep.subr.bf16.mxu0 0
    %6831 = vmatpush1.bf16.msra.mxu0 %v5479
    %6832 = vmatprep.subr.bf16.mxu0 0
    %6833 = vmatpush1.bf16.msra.mxu0 %v5472
    %6834 = vmatprep.subr.bf16.mxu0 0
    %6835 = vmatpush1.bf16.msra.mxu0 %v5465
    %6836 = vmatprep.subr.bf16.mxu0 0
    %6837 = vmatpush1.bf16.msra.mxu0 %v5458
    %6838 = vmatprep.subr.bf16.mxu0 0
    %6839 = vmatpush1.bf16.msra.mxu0 %v5451
    %6840 = vmatprep.subr.bf16.mxu0 0
    %6841 = vmatpush1.bf16.msra.mxu0 %v5444
    %6842 = vmatprep.subr.bf16.mxu0 0
    %6843 = vmatpush2.bf16.msra.mxu0 %v5549
    %6844 = vmatprep.subr.bf16.mxu0 0
    %6845 = vmatpush2.bf16.msra.mxu0 %v5542
    %6846 = vmatprep.subr.bf16.mxu0 0
    %6847 = vmatpush2.bf16.msra.mxu0 %v5535
    %6848 = vmatprep.subr.bf16.mxu0 0
    %6849 = vmatpush2.bf16.msra.mxu0 %v5528
    %6850 = vmatprep.subr.bf16.mxu0 0
    %6851 = vmatpush2.bf16.msra.mxu0 %v5521
    %6852 = vmatprep.subr.bf16.mxu0 0
    %6853 = vmatpush2.bf16.msra.mxu0 %v5514
    %6854 = vmatprep.subr.bf16.mxu0 0
    %6855 = vmatpush2.bf16.msra.mxu0 %v5507
    %6856 = vmatprep.subr.bf16.mxu0 0
    %6857 = vmatpush2.bf16.msra.mxu0 %v5500
    %6858 = vmatprep.mubr.bf16.mxu0 %v3471
    %6859 = vmatmul.mubr.bf16.gmra.mxu0 %v3470
    %v6860 = vpop.f32.mrf.mxu0
    %v6861 = vadd.f32 %v4022, %v6860
    %v6862 = vpop.f32.mrf.mxu0
    %v6863 = vpop.f32.mrf.mxu0
    %v6864 = vpop.f32.mrf.mxu0
    %6865 = vdwg.mxu0
    %6866 = vmatprep.subr.bf16.mxu0 0
    %6867 = vmatpush1.bf16.msra.mxu0 %v5605
    %6868 = vmatprep.subr.bf16.mxu0 0
    %6869 = vmatpush1.bf16.msra.mxu0 %v5598
    %6870 = vmatprep.subr.bf16.mxu0 0
    %6871 = vmatpush1.bf16.msra.mxu0 %v5591
    %6872 = vmatprep.subr.bf16.mxu0 0
    %6873 = vmatpush1.bf16.msra.mxu0 %v5584
    %6874 = vmatprep.subr.bf16.mxu0 0
    %6875 = vmatpush1.bf16.msra.mxu0 %v5577
    %6876 = vmatprep.subr.bf16.mxu0 0
    %6877 = vmatpush1.bf16.msra.mxu0 %v5570
    %6878 = vmatprep.subr.bf16.mxu0 0
    %6879 = vmatpush1.bf16.msra.mxu0 %v5563
    %6880 = vmatprep.subr.bf16.mxu0 0
    %6881 = vmatpush1.bf16.msra.mxu0 %v5556
    %6882 = vmatprep.subr.bf16.mxu0 0
    %6883 = vmatpush2.bf16.msra.mxu0 %v5661
    %6884 = vmatprep.subr.bf16.mxu0 0
    %6885 = vmatpush2.bf16.msra.mxu0 %v5654
    %6886 = vmatprep.subr.bf16.mxu0 0
    %6887 = vmatpush2.bf16.msra.mxu0 %v5647
    %6888 = vmatprep.subr.bf16.mxu0 0
    %6889 = vmatpush2.bf16.msra.mxu0 %v5640
    %6890 = vmatprep.subr.bf16.mxu0 0
    %6891 = vmatpush2.bf16.msra.mxu0 %v5633
    %6892 = vmatprep.subr.bf16.mxu0 0
    %6893 = vmatpush2.bf16.msra.mxu0 %v5626
    %6894 = vmatprep.subr.bf16.mxu0 0
    %6895 = vmatpush2.bf16.msra.mxu0 %v5619
    %6896 = vmatprep.subr.bf16.mxu0 0
    %6897 = vmatpush2.bf16.msra.mxu0 %v5612
    %6898 = vmatprep.mubr.bf16.mxu0 %v3473
    %6899 = vmatmul.mubr.bf16.gmra.mxu0 %v3472
    %v6900 = vpop.f32.mrf.mxu0
    %v6901 = vadd.f32 %v6861, %v6900
    %v6902 = vpop.f32.mrf.mxu0
    %v6903 = vpop.f32.mrf.mxu0
    %v6904 = vpop.f32.mrf.mxu0
    %6905 = vdwg.mxu0
    %6906 = vmatprep.subr.bf16.mxu0 0
    %6907 = vmatpush1.bf16.msra.mxu0 %v5717
    %6908 = vmatprep.subr.bf16.mxu0 0
    %6909 = vmatpush1.bf16.msra.mxu0 %v5710
    %6910 = vmatprep.subr.bf16.mxu0 0
    %6911 = vmatpush1.bf16.msra.mxu0 %v5703
    %6912 = vmatprep.subr.bf16.mxu0 0
    %6913 = vmatpush1.bf16.msra.mxu0 %v5696
    %6914 = vmatprep.subr.bf16.mxu0 0
    %6915 = vmatpush1.bf16.msra.mxu0 %v5689
    %6916 = vmatprep.subr.bf16.mxu0 0
    %6917 = vmatpush1.bf16.msra.mxu0 %v5682
    %6918 = vmatprep.subr.bf16.mxu0 0
    %6919 = vmatpush1.bf16.msra.mxu0 %v5675
    %6920 = vmatprep.subr.bf16.mxu0 0
    %6921 = vmatpush1.bf16.msra.mxu0 %v5668
    %6922 = vmatprep.subr.bf16.mxu0 0
    %6923 = vmatpush2.bf16.msra.mxu0 %v5773
    %6924 = vmatprep.subr.bf16.mxu0 0
    %6925 = vmatpush2.bf16.msra.mxu0 %v5766
    %6926 = vmatprep.subr.bf16.mxu0 0
    %6927 = vmatpush2.bf16.msra.mxu0 %v5759
    %6928 = vmatprep.subr.bf16.mxu0 0
    %6929 = vmatpush2.bf16.msra.mxu0 %v5752
    %6930 = vmatprep.subr.bf16.mxu0 0
    %6931 = vmatpush2.bf16.msra.mxu0 %v5745
    %6932 = vmatprep.subr.bf16.mxu0 0
    %6933 = vmatpush2.bf16.msra.mxu0 %v5738
    %6934 = vmatprep.subr.bf16.mxu0 0
    %6935 = vmatpush2.bf16.msra.mxu0 %v5731
    %6936 = vmatprep.subr.bf16.mxu0 0
    %6937 = vmatpush2.bf16.msra.mxu0 %v5724
    %6938 = vmatprep.mubr.bf16.mxu0 %v3475
    %6939 = vmatmul.mubr.bf16.gmra.mxu0 %v3474
    %v6940 = vpop.f32.mrf.mxu0
    %v6941 = vadd.f32 %v6901, %v6940
    %v6942 = vpop.f32.mrf.mxu0
    %v6943 = vpop.f32.mrf.mxu0
    %v6944 = vpop.f32.mrf.mxu0
    %6945 = vdwg.mxu0
    %6946 = vmatprep.subr.bf16.mxu0 0
    %6947 = vmatpush1.bf16.msra.mxu0 %v5829
    %6948 = vmatprep.subr.bf16.mxu0 0
    %6949 = vmatpush1.bf16.msra.mxu0 %v5822
    %6950 = vmatprep.subr.bf16.mxu0 0
    %6951 = vmatpush1.bf16.msra.mxu0 %v5815
    %6952 = vmatprep.subr.bf16.mxu0 0
    %6953 = vmatpush1.bf16.msra.mxu0 %v5808
    %6954 = vmatprep.subr.bf16.mxu0 0
    %6955 = vmatpush1.bf16.msra.mxu0 %v5801
    %6956 = vmatprep.subr.bf16.mxu0 0
    %6957 = vmatpush1.bf16.msra.mxu0 %v5794
    %6958 = vmatprep.subr.bf16.mxu0 0
    %6959 = vmatpush1.bf16.msra.mxu0 %v5787
    %6960 = vmatprep.subr.bf16.mxu0 0
    %6961 = vmatpush1.bf16.msra.mxu0 %v5780
    %6962 = vmatprep.subr.bf16.mxu0 0
    %6963 = vmatpush2.bf16.msra.mxu0 %v5885
    %6964 = vmatprep.subr.bf16.mxu0 0
    %6965 = vmatpush2.bf16.msra.mxu0 %v5878
    %6966 = vmatprep.subr.bf16.mxu0 0
    %6967 = vmatpush2.bf16.msra.mxu0 %v5871
    %6968 = vmatprep.subr.bf16.mxu0 0
    %6969 = vmatpush2.bf16.msra.mxu0 %v5864
    %6970 = vmatprep.subr.bf16.mxu0 0
    %6971 = vmatpush2.bf16.msra.mxu0 %v5857
    %6972 = vmatprep.subr.bf16.mxu0 0
    %6973 = vmatpush2.bf16.msra.mxu0 %v5850
    %6974 = vmatprep.subr.bf16.mxu0 0
    %6975 = vmatpush2.bf16.msra.mxu0 %v5843
    %6976 = vmatprep.subr.bf16.mxu0 0
    %6977 = vmatpush2.bf16.msra.mxu0 %v5836
    %6978 = vmatprep.mubr.bf16.mxu0 %v3477
    %6979 = vmatmul.mubr.bf16.gmra.mxu0 %v3476
    %v6980 = vpop.f32.mrf.mxu0
    %v6981 = vadd.f32 %v6941, %v6980
    %v6982 = vpop.f32.mrf.mxu0
    %v6983 = vpop.f32.mrf.mxu0
    %v6984 = vpop.f32.mrf.mxu0
    %6985 = vdwg.mxu0
    %v6986 = vtanh.pop %v6492
    %v6987 = vtanh.pop %v6494
    %v6988 = vtanh.pop %v6656
    %v6989 = vtanh.pop %v6658
    %v6990 = vtanh.pop %v6820
    %v6991 = vtanh.pop %v6822
    %v6992 = vtanh.pop %v6981
    %6993 = vst [vmem:[%s7] sm:$0xff] %v6986
    %6994 = vst [vmem:[%s7 + $0x8] sm:$0xff] %v6987
    %6995 = vst [vmem:[%s7 + $0x10] sm:$0xff] %v6988
    %6996 = vst [vmem:[%s7 + $0x18] sm:$0xff] %v6989
    %6997 = vst [vmem:[%s7 + $0x20] sm:$0xff] %v6990
    %6998 = vst [vmem:[%s7 + $0x28] sm:$0xff] %v6991
    %6999 = vst [vmem:[%s7 + $0x30] sm:$0xff] %v6992
    // Predicated region
    $region58: #{generator_forward.1} parent=1 // pred_check
      _
    $region59: #{generator_forward.1} parent=1 // pred_check_branch
      %7001 = sbr.rel (0) target = $region61
    $region60: #{generator_forward.1} parent=1 // pred_region
      _
    $region61: #{generator_forward.1} parent=1 // pred_fallthru
      _
    // Predicated region
    $region62: #{generator_forward.1} parent=1 // pred_check
      _
    $region63: #{generator_forward.1} parent=1 // pred_check_branch
      %7003 = sbr.rel (0) target = $region65
    $region64: #{generator_forward.1} parent=1 // pred_region
      _
    $region65: #{generator_forward.1} parent=1 // pred_fallthru
      _
    %7004 = vsyncpa [#allocation3], 1
    %7005 = vsyncpa [#allocation5], 1
    %7006 = vsyncpa [#allocation8], 1
    %7007 = vsyncpa [#allocation11], 1

</llo_original>
